<compile_context>
chip_gen: v7x
topology: tpu7x:2x2x1
jax: 0.10.0
libtpu: 0.0.40
codegen_flags: <defaults>
</compile_context>

<pallas_src>
import jax
import jax.numpy as jnp
from jax.experimental import pallas as pl
from jax.experimental.pallas import tpu as pltpu


def _lstm_cell(gates, c_prev, H):
    # PyTorch gate order: i, f, g, o  (4H lanes per row)
    i_g = jax.nn.sigmoid(gates[:, 0 * H:1 * H])
    f_g = jax.nn.sigmoid(gates[:, 1 * H:2 * H])
    g_g = jnp.tanh(gates[:, 2 * H:3 * H])
    o_g = jax.nn.sigmoid(gates[:, 3 * H:4 * H])
    c_new = f_g * c_prev + i_g * g_g
    h_new = o_g * jnp.tanh(c_new)
    return h_new, c_new


def _pointer_network_kernel(x_ref, wih_both_ref, b_both_ref,
                            enc_whh_ref, dec_whh_ref,
                            w_enc_ref, b_att_ref, w_dec_ref, v_ref, start_ref,
                            tour_ref, logp_ref):
    B, S, Din = x_ref.shape
    H = enc_whh_ref.shape[0]
    G = 4 * H

    x = x_ref[...]                       # [B, S, Din]
    wih_both = wih_both_ref[...]         # [Din, 8H]  = concat(enc_w_ih, dec_w_ih)
    b_both = b_both_ref[...]             # [1, 8H]    = concat(enc_b, dec_b)
    enc_whh = enc_whh_ref[...]           # [H, 4H]
    dec_whh = dec_whh_ref[...]           # [H, 4H]
    w_enc = w_enc_ref[...]               # [H, H]
    b_att = b_att_ref[...]               # [1, H]     = b_enc + b_dec (attention biases folded)
    w_dec = w_dec_ref[...]               # [H, H]
    v_row = v_ref[...]                   # [1, H]     (V.bias dropped: shift-invariant)

    # ---- hoisted input projection for encoder AND decoder: one matmul ----
    xg = jnp.dot(x.reshape(B * S, Din), wih_both,
                 preferred_element_type=jnp.float32) + b_both          # [B*S, 8H]
    xg = xg.reshape(B, S, 2 * G)
    xg_enc = xg[:, :, :G]                # [B, S, 4H]   x_t @ enc_w_ih + enc_b
    xg_dec = xg[:, :, G:]                # [B, S, 4H]   x_s @ dec_w_ih + dec_b

    # ---- encoder LSTM recurrence + fused attention encoder projection ----
    pos_bsh = jax.lax.broadcasted_iota(jnp.int32, (B, S, H), 1)
    h = jnp.zeros((B, H), jnp.float32)
    c = jnp.zeros((B, H), jnp.float32)
    encp = jnp.zeros((B, S, H), jnp.float32)                            # W_enc(enc) + b_att
    for t in range(S):                   # fully unrolled, static indices
        gates = xg_enc[:, t, :] + jnp.dot(h, enc_whh,
                                          preferred_element_type=jnp.float32)
        h, c = _lstm_cell(gates, c, H)
        proj = jnp.dot(h, w_enc, preferred_element_type=jnp.float32) + b_att
        encp = jnp.where(pos_bsh == t, proj[:, None, :], encp)

    # ---- decoder recurrence + pointer attention (fully unrolled) ----
    col = jax.lax.broadcasted_iota(jnp.int32, (B, S), 1)
    colf = col.astype(jnp.float32)
    neg_big = jnp.float32(-1e30)

    # gate contribution of the learned start token (dec bias already in b_both)
    start_g = (jnp.dot(start_ref[...], wih_both,
                       preferred_element_type=jnp.float32) + b_both)[:, G:]   # [1, 4H]
    xg_t = jnp.broadcast_to(start_g, (B, G))

    mask_add = jnp.zeros((B, S), jnp.float32)
    tour = jnp.zeros((B, S), jnp.int32)
    lp_sum = jnp.zeros((B, 1), jnp.float32)

    for t in range(S):
        # decoder LSTM cell (input matmul already hoisted / gathered)
        gates = xg_t + jnp.dot(h, dec_whh, preferred_element_type=jnp.float32)
        h, c = _lstm_cell(gates, c, H)

        # pointer attention: V . tanh(W_enc(enc) + W_dec(h))  (biases folded into encp)
        dq = jnp.dot(h, w_dec, preferred_element_type=jnp.float32)       # [B, H]
        tt = jnp.tanh(encp + dq[:, None, :])                             # [B, S, H]
        scores = jnp.sum(tt * v_row[None, :, :], axis=-1) + mask_add     # [B, S]

        m = jnp.max(scores, axis=1, keepdims=True)                       # [B, 1]
        # first-index argmax (torch.max tie-break), straight from scores
        sel_f = jnp.min(jnp.where(scores == m, colf, jnp.float32(S)),
                        axis=1, keepdims=True)
        sel = sel_f.astype(jnp.int32)                                    # [B, 1]
        # selected log-prob: scores_sel == m  =>  logp_sel = -log(sum exp(scores - m))
        lp_sum = lp_sum - jnp.log(jnp.sum(jnp.exp(scores - m),
                                          axis=1, keepdims=True))

        tour = jnp.where(col == t, sel, tour)

        hit = col == sel                                                 # [B, S]
        mask_add = jnp.where(hit, neg_big, mask_add)
        # next decoder input's gate contribution, gathered from the hoisted slab
        xg_t = jnp.sum(hit.astype(jnp.float32)[:, :, None] * xg_dec, axis=1)   # [B, 4H]

    tour_ref[...] = tour                                                 # [B, S] int32
    logp_ref[...] = lp_sum                                               # [B, 1] f32


# ----------------------------- params & wrapper -------------------------------


def init_params(key, input_dim, hidden_dim):
    scale = 1.0 / jnp.sqrt(jnp.float32(hidden_dim))
    ks = jax.random.split(key, 16)

    def u(k, shape):
        return jax.random.uniform(k, shape, jnp.float32, -scale, scale)

    H = hidden_dim
    return {
        # encoder LSTM
        "enc_w_ih": u(ks[0], (input_dim, 4 * H)),
        "enc_w_hh": u(ks[1], (H, 4 * H)),
        "enc_b":    u(ks[2], (1, 4 * H)) + u(ks[3], (1, 4 * H)),   # b_ih + b_hh
        # decoder LSTM
        "dec_w_ih": u(ks[4], (input_dim, 4 * H)),
        "dec_w_hh": u(ks[5], (H, 4 * H)),
        "dec_b":    u(ks[6], (1, 4 * H)) + u(ks[7], (1, 4 * H)),
        # attention
        "w_enc": u(ks[8], (H, H)),
        "b_enc": u(ks[9], (1, H)),
        "w_dec": u(ks[10], (H, H)),
        "b_dec": u(ks[11], (1, H)),
        "v_row": u(ks[12], (1, H)),    # V.weight (row)
        "b_v":   u(ks[13], (1, 1)),    # V.bias (unused: shift-invariant under log_softmax/argmax)
        # decoder start input
        "dec_start": jax.random.normal(ks[14], (1, 1, input_dim), jnp.float32),
    }


def prepare_params(params):
    """One-time host-side weight fusion so the forward is a single pallas_call."""
    return {
        "wih_both": jnp.concatenate([params["enc_w_ih"], params["dec_w_ih"]], axis=1),
        "b_both":   jnp.concatenate([params["enc_b"], params["dec_b"]], axis=1),
        "enc_w_hh": params["enc_w_hh"],
        "dec_w_hh": params["dec_w_hh"],
        "w_enc":    params["w_enc"],
        "b_att":    params["b_enc"] + params["b_dec"],      # attention biases folded
        "w_dec":    params["w_dec"],
        "v_row":    params["v_row"],
        "start":    params["dec_start"].reshape(1, -1),
    }


@jax.jit
def pointer_network_forward(prep, x):
    B, S, _ = x.shape
    vmem = pl.BlockSpec(memory_space=pltpu.MemorySpace.VMEM)
    tour, lp = pl.pallas_call(
        _pointer_network_kernel,
        out_shape=(jax.ShapeDtypeStruct((B, S), jnp.int32),
                   jax.ShapeDtypeStruct((B, 1), jnp.float32)),
        in_specs=[vmem] * 10,
        out_specs=(vmem, vmem),
    )(x, prep["wih_both"], prep["b_both"], prep["enc_w_hh"], prep["dec_w_hh"],
      prep["w_enc"], prep["b_att"], prep["w_dec"], prep["v_row"], prep["start"])
    return tour, lp[:, 0]


# --------------------------------- main ----------------------------------------

if __name__ == "__main__":
    B, S, Din, H = 2, 8, 4, 32

    key = jax.random.PRNGKey(0)
    k_param, k_x = jax.random.split(key)
    params = init_params(k_param, Din, H)
    prep = prepare_params(params)
    x = jax.random.normal(k_x, (B, S, Din), jnp.float32)

    tour, log_prob = pointer_network_forward(prep, x)
    jax.block_until_ready((tour, log_prob))

    assert tour.shape == (B, S) and tour.dtype == jnp.int32
    assert log_prob.shape == (B,) and log_prob.dtype == jnp.float32
    # Pointer masking guarantees each row of the tour is a permutation of 0..S-1.
    import numpy as np
    t_np = np.asarray(tour)
    for b in range(B):
        assert sorted(t_np[b].tolist()) == list(range(S)), t_np[b]
    assert np.all(np.isfinite(np.asarray(log_prob)))
    print("KERNEL_OK")
</pallas_src>

<mosaic_0001>
module attributes {stable_mosaic.version = 11 : i64} {
  func.func @_pointer_network_kernel(%arg0: memref<2x8x4xf32, #tpu.memory_space<vmem>>, %arg1: memref<4x256xf32, #tpu.memory_space<vmem>>, %arg2: memref<1x256xf32, #tpu.memory_space<vmem>>, %arg3: memref<32x128xf32, #tpu.memory_space<vmem>>, %arg4: memref<32x128xf32, #tpu.memory_space<vmem>>, %arg5: memref<32x32xf32, #tpu.memory_space<vmem>>, %arg6: memref<1x32xf32, #tpu.memory_space<vmem>>, %arg7: memref<32x32xf32, #tpu.memory_space<vmem>>, %arg8: memref<1x32xf32, #tpu.memory_space<vmem>>, %arg9: memref<1x4xf32, #tpu.memory_space<vmem>>, %arg10: memref<2x8xi32, #tpu.memory_space<vmem>>, %arg11: memref<2x1xf32, #tpu.memory_space<vmem>>) attributes {dimension_semantics = [], scalar_prefetch = 0 : i64, scratch_operands = 0 : i64, tpu.core_type = #tpu.core_type<tc>} {
    %c0 = arith.constant 0 : index
    %c0_0 = arith.constant 0 : index
    %c0_1 = arith.constant 0 : index
    %0 = vector.load %arg0[%c0, %c0_0, %c0_1] : memref<2x8x4xf32, #tpu.memory_space<vmem>>, vector<2x8x4xf32>
    %c0_2 = arith.constant 0 : index
    %c0_3 = arith.constant 0 : index
    %1 = vector.load %arg1[%c0_2, %c0_3] : memref<4x256xf32, #tpu.memory_space<vmem>>, vector<4x256xf32>
    %c0_4 = arith.constant 0 : index
    %c0_5 = arith.constant 0 : index
    %2 = vector.load %arg2[%c0_4, %c0_5] : memref<1x256xf32, #tpu.memory_space<vmem>>, vector<1x256xf32>
    %c0_6 = arith.constant 0 : index
    %c0_7 = arith.constant 0 : index
    %3 = vector.load %arg3[%c0_6, %c0_7] : memref<32x128xf32, #tpu.memory_space<vmem>>, vector<32x128xf32>
    %c0_8 = arith.constant 0 : index
    %c0_9 = arith.constant 0 : index
    %4 = vector.load %arg4[%c0_8, %c0_9] : memref<32x128xf32, #tpu.memory_space<vmem>>, vector<32x128xf32>
    %c0_10 = arith.constant 0 : index
    %c0_11 = arith.constant 0 : index
    %5 = vector.load %arg5[%c0_10, %c0_11] : memref<32x32xf32, #tpu.memory_space<vmem>>, vector<32x32xf32>
    %c0_12 = arith.constant 0 : index
    %c0_13 = arith.constant 0 : index
    %6 = vector.load %arg6[%c0_12, %c0_13] : memref<1x32xf32, #tpu.memory_space<vmem>>, vector<1x32xf32>
    %c0_14 = arith.constant 0 : index
    %c0_15 = arith.constant 0 : index
    %7 = vector.load %arg7[%c0_14, %c0_15] : memref<32x32xf32, #tpu.memory_space<vmem>>, vector<32x32xf32>
    %c0_16 = arith.constant 0 : index
    %c0_17 = arith.constant 0 : index
    %8 = vector.load %arg8[%c0_16, %c0_17] : memref<1x32xf32, #tpu.memory_space<vmem>>, vector<1x32xf32>
    %9 = vector.shape_cast %0 : vector<2x8x4xf32> to vector<16x4xf32>
    %cst = arith.constant dense<0.000000e+00> : vector<16x256xf32>
    %10 = tpu.matmul %9, %1, %cst {dimension_numbers = #tpu.dot_dimension_numbers<[1], [0], [0], [1], [0, 0, 1, 1], [], []>} : vector<16x4xf32>, vector<4x256xf32>, vector<16x256xf32> -> vector<16x256xf32>
    %11 = vector.broadcast %2 : vector<1x256xf32> to vector<16x256xf32>
    %12 = arith.addf %10, %11 : vector<16x256xf32>
    %13 = vector.shape_cast %12 : vector<16x256xf32> to vector<2x8x256xf32>
    %14 = vector.extract_strided_slice %13 {offsets = [0, 0, 0], sizes = [2, 8, 128], strides = [1, 1, 1]} : vector<2x8x256xf32> to vector<2x8x128xf32>
    %15 = vector.extract_strided_slice %13 {offsets = [0, 0, 128], sizes = [2, 8, 128], strides = [1, 1, 1]} : vector<2x8x256xf32> to vector<2x8x128xf32>
    %16 = tpu.iota {dimensions = array<i32: 1>} : vector<2x8x32xi32>
    %cst_18 = arith.constant 0.000000e+00 : f32
    %17 = vector.broadcast %cst_18 : f32 to vector<2x32xf32>
    %cst_19 = arith.constant 0.000000e+00 : f32
    %18 = vector.broadcast %cst_19 : f32 to vector<2x32xf32>
    %cst_20 = arith.constant 0.000000e+00 : f32
    %19 = vector.broadcast %cst_20 : f32 to vector<2x8x32xf32>
    %20 = vector.extract_strided_slice %14 {offsets = [0, 0, 0], sizes = [2, 1, 128], strides = [1, 1, 1]} : vector<2x8x128xf32> to vector<2x1x128xf32>
    %21 = vector.shape_cast %20 : vector<2x1x128xf32> to vector<2x128xf32>
    %cst_21 = arith.constant dense<0.000000e+00> : vector<2x128xf32>
    %22 = tpu.matmul %17, %3, %cst_21 {dimension_numbers = #tpu.dot_dimension_numbers<[1], [0], [0], [1], [0, 0, 1, 1], [], []>} : vector<2x32xf32>, vector<32x128xf32>, vector<2x128xf32> -> vector<2x128xf32>
    %23 = arith.addf %21, %22 : vector<2x128xf32>
    %24 = vector.extract_strided_slice %23 {offsets = [0, 0], sizes = [2, 32], strides = [1, 1]} : vector<2x128xf32> to vector<2x32xf32>
    %25 = arith.negf %24 : vector<2x32xf32>
    %26 = math.exp %25 : vector<2x32xf32>
    %cst_22 = arith.constant 1.000000e+00 : f32
    %27 = vector.broadcast %cst_22 : f32 to vector<2x32xf32>
    %28 = arith.addf %27, %26 : vector<2x32xf32>
    %29 = arith.divf %27, %28 : vector<2x32xf32>
    %30 = vector.extract_strided_slice %23 {offsets = [0, 32], sizes = [2, 32], strides = [1, 1]} : vector<2x128xf32> to vector<2x32xf32>
    %31 = arith.negf %30 : vector<2x32xf32>
    %32 = math.exp %31 : vector<2x32xf32>
    %cst_23 = arith.constant 1.000000e+00 : f32
    %33 = vector.broadcast %cst_23 : f32 to vector<2x32xf32>
    %34 = arith.addf %33, %32 : vector<2x32xf32>
    %35 = arith.divf %33, %34 : vector<2x32xf32>
    %36 = vector.extract_strided_slice %23 {offsets = [0, 64], sizes = [2, 32], strides = [1, 1]} : vector<2x128xf32> to vector<2x32xf32>
    %37 = math.tanh %36 : vector<2x32xf32>
    %38 = vector.extract_strided_slice %23 {offsets = [0, 96], sizes = [2, 32], strides = [1, 1]} : vector<2x128xf32> to vector<2x32xf32>
    %39 = arith.negf %38 : vector<2x32xf32>
    %40 = math.exp %39 : vector<2x32xf32>
    %cst_24 = arith.constant 1.000000e+00 : f32
    %41 = vector.broadcast %cst_24 : f32 to vector<2x32xf32>
    %42 = arith.addf %41, %40 : vector<2x32xf32>
    %43 = arith.divf %41, %42 : vector<2x32xf32>
    %44 = arith.mulf %35, %18 : vector<2x32xf32>
    %45 = arith.mulf %29, %37 : vector<2x32xf32>
    %46 = arith.addf %44, %45 : vector<2x32xf32>
    %47 = math.tanh %46 : vector<2x32xf32>
    %48 = arith.mulf %43, %47 : vector<2x32xf32>
    %cst_25 = arith.constant dense<0.000000e+00> : vector<2x32xf32>
    %49 = tpu.matmul %48, %5, %cst_25 {dimension_numbers = #tpu.dot_dimension_numbers<[1], [0], [0], [1], [0, 0, 1, 1], [], []>} : vector<2x32xf32>, vector<32x32xf32>, vector<2x32xf32> -> vector<2x32xf32>
    %50 = vector.broadcast %6 : vector<1x32xf32> to vector<2x32xf32>
    %51 = arith.addf %49, %50 : vector<2x32xf32>
    %c0_i32 = arith.constant 0 : i32
    %52 = vector.broadcast %c0_i32 : i32 to vector<2x8x32xi32>
    %53 = arith.cmpi eq, %16, %52 : vector<2x8x32xi32>
    %54 = vector.shape_cast %51 : vector<2x32xf32> to vector<2x1x32xf32>
    %55 = vector.shape_cast %54 : vector<2x1x32xf32> to vector<2x1x32xf32>
    %56 = vector.broadcast %55 : vector<2x1x32xf32> to vector<2x8x32xf32>
    %57 = arith.select %53, %56, %19 : vector<2x8x32xi1>, vector<2x8x32xf32>
    %58 = vector.extract_strided_slice %14 {offsets = [0, 1, 0], sizes = [2, 1, 128], strides = [1, 1, 1]} : vector<2x8x128xf32> to vector<2x1x128xf32>
    %59 = vector.shape_cast %58 : vector<2x1x128xf32> to vector<2x128xf32>
    %cst_26 = arith.constant dense<0.000000e+00> : vector<2x128xf32>
    %60 = tpu.matmul %48, %3, %cst_26 {dimension_numbers = #tpu.dot_dimension_numbers<[1], [0], [0], [1], [0, 0, 1, 1], [], []>} : vector<2x32xf32>, vector<32x128xf32>, vector<2x128xf32> -> vector<2x128xf32>
    %61 = arith.addf %59, %60 : vector<2x128xf32>
    %62 = vector.extract_strided_slice %61 {offsets = [0, 0], sizes = [2, 32], strides = [1, 1]} : vector<2x128xf32> to vector<2x32xf32>
    %63 = arith.negf %62 : vector<2x32xf32>
    %64 = math.exp %63 : vector<2x32xf32>
    %cst_27 = arith.constant 1.000000e+00 : f32
    %65 = vector.broadcast %cst_27 : f32 to vector<2x32xf32>
    %66 = arith.addf %65, %64 : vector<2x32xf32>
    %67 = arith.divf %65, %66 : vector<2x32xf32>
    %68 = vector.extract_strided_slice %61 {offsets = [0, 32], sizes = [2, 32], strides = [1, 1]} : vector<2x128xf32> to vector<2x32xf32>
    %69 = arith.negf %68 : vector<2x32xf32>
    %70 = math.exp %69 : vector<2x32xf32>
    %cst_28 = arith.constant 1.000000e+00 : f32
    %71 = vector.broadcast %cst_28 : f32 to vector<2x32xf32>
    %72 = arith.addf %71, %70 : vector<2x32xf32>
    %73 = arith.divf %71, %72 : vector<2x32xf32>
    %74 = vector.extract_strided_slice %61 {offsets = [0, 64], sizes = [2, 32], strides = [1, 1]} : vector<2x128xf32> to vector<2x32xf32>
    %75 = math.tanh %74 : vector<2x32xf32>
    %76 = vector.extract_strided_slice %61 {offsets = [0, 96], sizes = [2, 32], strides = [1, 1]} : vector<2x128xf32> to vector<2x32xf32>
    %77 = arith.negf %76 : vector<2x32xf32>
    %78 = math.exp %77 : vector<2x32xf32>
    %cst_29 = arith.constant 1.000000e+00 : f32
    %79 = vector.broadcast %cst_29 : f32 to vector<2x32xf32>
    %80 = arith.addf %79, %78 : vector<2x32xf32>
    %81 = arith.divf %79, %80 : vector<2x32xf32>
    %82 = arith.mulf %73, %46 : vector<2x32xf32>
    %83 = arith.mulf %67, %75 : vector<2x32xf32>
    %84 = arith.addf %82, %83 : vector<2x32xf32>
    %85 = math.tanh %84 : vector<2x32xf32>
    %86 = arith.mulf %81, %85 : vector<2x32xf32>
    %cst_30 = arith.constant dense<0.000000e+00> : vector<2x32xf32>
    %87 = tpu.matmul %86, %5, %cst_30 {dimension_numbers = #tpu.dot_dimension_numbers<[1], [0], [0], [1], [0, 0, 1, 1], [], []>} : vector<2x32xf32>, vector<32x32xf32>, vector<2x32xf32> -> vector<2x32xf32>
    %88 = vector.broadcast %6 : vector<1x32xf32> to vector<2x32xf32>
    %89 = arith.addf %87, %88 : vector<2x32xf32>
    %c1_i32 = arith.constant 1 : i32
    %90 = vector.broadcast %c1_i32 : i32 to vector<2x8x32xi32>
    %91 = arith.cmpi eq, %16, %90 : vector<2x8x32xi32>
    %92 = vector.shape_cast %89 : vector<2x32xf32> to vector<2x1x32xf32>
    %93 = vector.shape_cast %92 : vector<2x1x32xf32> to vector<2x1x32xf32>
    %94 = vector.broadcast %93 : vector<2x1x32xf32> to vector<2x8x32xf32>
    %95 = arith.select %91, %94, %57 : vector<2x8x32xi1>, vector<2x8x32xf32>
    %96 = vector.extract_strided_slice %14 {offsets = [0, 2, 0], sizes = [2, 1, 128], strides = [1, 1, 1]} : vector<2x8x128xf32> to vector<2x1x128xf32>
    %97 = vector.shape_cast %96 : vector<2x1x128xf32> to vector<2x128xf32>
    %cst_31 = arith.constant dense<0.000000e+00> : vector<2x128xf32>
    %98 = tpu.matmul %86, %3, %cst_31 {dimension_numbers = #tpu.dot_dimension_numbers<[1], [0], [0], [1], [0, 0, 1, 1], [], []>} : vector<2x32xf32>, vector<32x128xf32>, vector<2x128xf32> -> vector<2x128xf32>
    %99 = arith.addf %97, %98 : vector<2x128xf32>
    %100 = vector.extract_strided_slice %99 {offsets = [0, 0], sizes = [2, 32], strides = [1, 1]} : vector<2x128xf32> to vector<2x32xf32>
    %101 = arith.negf %100 : vector<2x32xf32>
    %102 = math.exp %101 : vector<2x32xf32>
    %cst_32 = arith.constant 1.000000e+00 : f32
    %103 = vector.broadcast %cst_32 : f32 to vector<2x32xf32>
    %104 = arith.addf %103, %102 : vector<2x32xf32>
    %105 = arith.divf %103, %104 : vector<2x32xf32>
    %106 = vector.extract_strided_slice %99 {offsets = [0, 32], sizes = [2, 32], strides = [1, 1]} : vector<2x128xf32> to vector<2x32xf32>
    %107 = arith.negf %106 : vector<2x32xf32>
    %108 = math.exp %107 : vector<2x32xf32>
    %cst_33 = arith.constant 1.000000e+00 : f32
    %109 = vector.broadcast %cst_33 : f32 to vector<2x32xf32>
    %110 = arith.addf %109, %108 : vector<2x32xf32>
    %111 = arith.divf %109, %110 : vector<2x32xf32>
    %112 = vector.extract_strided_slice %99 {offsets = [0, 64], sizes = [2, 32], strides = [1, 1]} : vector<2x128xf32> to vector<2x32xf32>
    %113 = math.tanh %112 : vector<2x32xf32>
    %114 = vector.extract_strided_slice %99 {offsets = [0, 96], sizes = [2, 32], strides = [1, 1]} : vector<2x128xf32> to vector<2x32xf32>
    %115 = arith.negf %114 : vector<2x32xf32>
    %116 = math.exp %115 : vector<2x32xf32>
    %cst_34 = arith.constant 1.000000e+00 : f32
    %117 = vector.broadcast %cst_34 : f32 to vector<2x32xf32>
    %118 = arith.addf %117, %116 : vector<2x32xf32>
    %119 = arith.divf %117, %118 : vector<2x32xf32>
    %120 = arith.mulf %111, %84 : vector<2x32xf32>
    %121 = arith.mulf %105, %113 : vector<2x32xf32>
    %122 = arith.addf %120, %121 : vector<2x32xf32>
    %123 = math.tanh %122 : vector<2x32xf32>
    %124 = arith.mulf %119, %123 : vector<2x32xf32>
    %cst_35 = arith.constant dense<0.000000e+00> : vector<2x32xf32>
    %125 = tpu.matmul %124, %5, %cst_35 {dimension_numbers = #tpu.dot_dimension_numbers<[1], [0], [0], [1], [0, 0, 1, 1], [], []>} : vector<2x32xf32>, vector<32x32xf32>, vector<2x32xf32> -> vector<2x32xf32>
    %126 = vector.broadcast %6 : vector<1x32xf32> to vector<2x32xf32>
    %127 = arith.addf %125, %126 : vector<2x32xf32>
    %c2_i32 = arith.constant 2 : i32
    %128 = vector.broadcast %c2_i32 : i32 to vector<2x8x32xi32>
    %129 = arith.cmpi eq, %16, %128 : vector<2x8x32xi32>
    %130 = vector.shape_cast %127 : vector<2x32xf32> to vector<2x1x32xf32>
    %131 = vector.shape_cast %130 : vector<2x1x32xf32> to vector<2x1x32xf32>
    %132 = vector.broadcast %131 : vector<2x1x32xf32> to vector<2x8x32xf32>
    %133 = arith.select %129, %132, %95 : vector<2x8x32xi1>, vector<2x8x32xf32>
    %134 = vector.extract_strided_slice %14 {offsets = [0, 3, 0], sizes = [2, 1, 128], strides = [1, 1, 1]} : vector<2x8x128xf32> to vector<2x1x128xf32>
    %135 = vector.shape_cast %134 : vector<2x1x128xf32> to vector<2x128xf32>
    %cst_36 = arith.constant dense<0.000000e+00> : vector<2x128xf32>
    %136 = tpu.matmul %124, %3, %cst_36 {dimension_numbers = #tpu.dot_dimension_numbers<[1], [0], [0], [1], [0, 0, 1, 1], [], []>} : vector<2x32xf32>, vector<32x128xf32>, vector<2x128xf32> -> vector<2x128xf32>
    %137 = arith.addf %135, %136 : vector<2x128xf32>
    %138 = vector.extract_strided_slice %137 {offsets = [0, 0], sizes = [2, 32], strides = [1, 1]} : vector<2x128xf32> to vector<2x32xf32>
    %139 = arith.negf %138 : vector<2x32xf32>
    %140 = math.exp %139 : vector<2x32xf32>
    %cst_37 = arith.constant 1.000000e+00 : f32
    %141 = vector.broadcast %cst_37 : f32 to vector<2x32xf32>
    %142 = arith.addf %141, %140 : vector<2x32xf32>
    %143 = arith.divf %141, %142 : vector<2x32xf32>
    %144 = vector.extract_strided_slice %137 {offsets = [0, 32], sizes = [2, 32], strides = [1, 1]} : vector<2x128xf32> to vector<2x32xf32>
    %145 = arith.negf %144 : vector<2x32xf32>
    %146 = math.exp %145 : vector<2x32xf32>
    %cst_38 = arith.constant 1.000000e+00 : f32
    %147 = vector.broadcast %cst_38 : f32 to vector<2x32xf32>
    %148 = arith.addf %147, %146 : vector<2x32xf32>
    %149 = arith.divf %147, %148 : vector<2x32xf32>
    %150 = vector.extract_strided_slice %137 {offsets = [0, 64], sizes = [2, 32], strides = [1, 1]} : vector<2x128xf32> to vector<2x32xf32>
    %151 = math.tanh %150 : vector<2x32xf32>
    %152 = vector.extract_strided_slice %137 {offsets = [0, 96], sizes = [2, 32], strides = [1, 1]} : vector<2x128xf32> to vector<2x32xf32>
    %153 = arith.negf %152 : vector<2x32xf32>
    %154 = math.exp %153 : vector<2x32xf32>
    %cst_39 = arith.constant 1.000000e+00 : f32
    %155 = vector.broadcast %cst_39 : f32 to vector<2x32xf32>
    %156 = arith.addf %155, %154 : vector<2x32xf32>
    %157 = arith.divf %155, %156 : vector<2x32xf32>
    %158 = arith.mulf %149, %122 : vector<2x32xf32>
    %159 = arith.mulf %143, %151 : vector<2x32xf32>
    %160 = arith.addf %158, %159 : vector<2x32xf32>
    %161 = math.tanh %160 : vector<2x32xf32>
    %162 = arith.mulf %157, %161 : vector<2x32xf32>
    %cst_40 = arith.constant dense<0.000000e+00> : vector<2x32xf32>
    %163 = tpu.matmul %162, %5, %cst_40 {dimension_numbers = #tpu.dot_dimension_numbers<[1], [0], [0], [1], [0, 0, 1, 1], [], []>} : vector<2x32xf32>, vector<32x32xf32>, vector<2x32xf32> -> vector<2x32xf32>
    %164 = vector.broadcast %6 : vector<1x32xf32> to vector<2x32xf32>
    %165 = arith.addf %163, %164 : vector<2x32xf32>
    %c3_i32 = arith.constant 3 : i32
    %166 = vector.broadcast %c3_i32 : i32 to vector<2x8x32xi32>
    %167 = arith.cmpi eq, %16, %166 : vector<2x8x32xi32>
    %168 = vector.shape_cast %165 : vector<2x32xf32> to vector<2x1x32xf32>
    %169 = vector.shape_cast %168 : vector<2x1x32xf32> to vector<2x1x32xf32>
    %170 = vector.broadcast %169 : vector<2x1x32xf32> to vector<2x8x32xf32>
    %171 = arith.select %167, %170, %133 : vector<2x8x32xi1>, vector<2x8x32xf32>
    %172 = vector.extract_strided_slice %14 {offsets = [0, 4, 0], sizes = [2, 1, 128], strides = [1, 1, 1]} : vector<2x8x128xf32> to vector<2x1x128xf32>
    %173 = vector.shape_cast %172 : vector<2x1x128xf32> to vector<2x128xf32>
    %cst_41 = arith.constant dense<0.000000e+00> : vector<2x128xf32>
    %174 = tpu.matmul %162, %3, %cst_41 {dimension_numbers = #tpu.dot_dimension_numbers<[1], [0], [0], [1], [0, 0, 1, 1], [], []>} : vector<2x32xf32>, vector<32x128xf32>, vector<2x128xf32> -> vector<2x128xf32>
    %175 = arith.addf %173, %174 : vector<2x128xf32>
    %176 = vector.extract_strided_slice %175 {offsets = [0, 0], sizes = [2, 32], strides = [1, 1]} : vector<2x128xf32> to vector<2x32xf32>
    %177 = arith.negf %176 : vector<2x32xf32>
    %178 = math.exp %177 : vector<2x32xf32>
    %cst_42 = arith.constant 1.000000e+00 : f32
    %179 = vector.broadcast %cst_42 : f32 to vector<2x32xf32>
    %180 = arith.addf %179, %178 : vector<2x32xf32>
    %181 = arith.divf %179, %180 : vector<2x32xf32>
    %182 = vector.extract_strided_slice %175 {offsets = [0, 32], sizes = [2, 32], strides = [1, 1]} : vector<2x128xf32> to vector<2x32xf32>
    %183 = arith.negf %182 : vector<2x32xf32>
    %184 = math.exp %183 : vector<2x32xf32>
    %cst_43 = arith.constant 1.000000e+00 : f32
    %185 = vector.broadcast %cst_43 : f32 to vector<2x32xf32>
    %186 = arith.addf %185, %184 : vector<2x32xf32>
    %187 = arith.divf %185, %186 : vector<2x32xf32>
    %188 = vector.extract_strided_slice %175 {offsets = [0, 64], sizes = [2, 32], strides = [1, 1]} : vector<2x128xf32> to vector<2x32xf32>
    %189 = math.tanh %188 : vector<2x32xf32>
    %190 = vector.extract_strided_slice %175 {offsets = [0, 96], sizes = [2, 32], strides = [1, 1]} : vector<2x128xf32> to vector<2x32xf32>
    %191 = arith.negf %190 : vector<2x32xf32>
    %192 = math.exp %191 : vector<2x32xf32>
    %cst_44 = arith.constant 1.000000e+00 : f32
    %193 = vector.broadcast %cst_44 : f32 to vector<2x32xf32>
    %194 = arith.addf %193, %192 : vector<2x32xf32>
    %195 = arith.divf %193, %194 : vector<2x32xf32>
    %196 = arith.mulf %187, %160 : vector<2x32xf32>
    %197 = arith.mulf %181, %189 : vector<2x32xf32>
    %198 = arith.addf %196, %197 : vector<2x32xf32>
    %199 = math.tanh %198 : vector<2x32xf32>
    %200 = arith.mulf %195, %199 : vector<2x32xf32>
    %cst_45 = arith.constant dense<0.000000e+00> : vector<2x32xf32>
    %201 = tpu.matmul %200, %5, %cst_45 {dimension_numbers = #tpu.dot_dimension_numbers<[1], [0], [0], [1], [0, 0, 1, 1], [], []>} : vector<2x32xf32>, vector<32x32xf32>, vector<2x32xf32> -> vector<2x32xf32>
    %202 = vector.broadcast %6 : vector<1x32xf32> to vector<2x32xf32>
    %203 = arith.addf %201, %202 : vector<2x32xf32>
    %c4_i32 = arith.constant 4 : i32
    %204 = vector.broadcast %c4_i32 : i32 to vector<2x8x32xi32>
    %205 = arith.cmpi eq, %16, %204 : vector<2x8x32xi32>
    %206 = vector.shape_cast %203 : vector<2x32xf32> to vector<2x1x32xf32>
    %207 = vector.shape_cast %206 : vector<2x1x32xf32> to vector<2x1x32xf32>
    %208 = vector.broadcast %207 : vector<2x1x32xf32> to vector<2x8x32xf32>
    %209 = arith.select %205, %208, %171 : vector<2x8x32xi1>, vector<2x8x32xf32>
    %210 = vector.extract_strided_slice %14 {offsets = [0, 5, 0], sizes = [2, 1, 128], strides = [1, 1, 1]} : vector<2x8x128xf32> to vector<2x1x128xf32>
    %211 = vector.shape_cast %210 : vector<2x1x128xf32> to vector<2x128xf32>
    %cst_46 = arith.constant dense<0.000000e+00> : vector<2x128xf32>
    %212 = tpu.matmul %200, %3, %cst_46 {dimension_numbers = #tpu.dot_dimension_numbers<[1], [0], [0], [1], [0, 0, 1, 1], [], []>} : vector<2x32xf32>, vector<32x128xf32>, vector<2x128xf32> -> vector<2x128xf32>
    %213 = arith.addf %211, %212 : vector<2x128xf32>
    %214 = vector.extract_strided_slice %213 {offsets = [0, 0], sizes = [2, 32], strides = [1, 1]} : vector<2x128xf32> to vector<2x32xf32>
    %215 = arith.negf %214 : vector<2x32xf32>
    %216 = math.exp %215 : vector<2x32xf32>
    %cst_47 = arith.constant 1.000000e+00 : f32
    %217 = vector.broadcast %cst_47 : f32 to vector<2x32xf32>
    %218 = arith.addf %217, %216 : vector<2x32xf32>
    %219 = arith.divf %217, %218 : vector<2x32xf32>
    %220 = vector.extract_strided_slice %213 {offsets = [0, 32], sizes = [2, 32], strides = [1, 1]} : vector<2x128xf32> to vector<2x32xf32>
    %221 = arith.negf %220 : vector<2x32xf32>
    %222 = math.exp %221 : vector<2x32xf32>
    %cst_48 = arith.constant 1.000000e+00 : f32
    %223 = vector.broadcast %cst_48 : f32 to vector<2x32xf32>
    %224 = arith.addf %223, %222 : vector<2x32xf32>
    %225 = arith.divf %223, %224 : vector<2x32xf32>
    %226 = vector.extract_strided_slice %213 {offsets = [0, 64], sizes = [2, 32], strides = [1, 1]} : vector<2x128xf32> to vector<2x32xf32>
    %227 = math.tanh %226 : vector<2x32xf32>
    %228 = vector.extract_strided_slice %213 {offsets = [0, 96], sizes = [2, 32], strides = [1, 1]} : vector<2x128xf32> to vector<2x32xf32>
    %229 = arith.negf %228 : vector<2x32xf32>
    %230 = math.exp %229 : vector<2x32xf32>
    %cst_49 = arith.constant 1.000000e+00 : f32
    %231 = vector.broadcast %cst_49 : f32 to vector<2x32xf32>
    %232 = arith.addf %231, %230 : vector<2x32xf32>
    %233 = arith.divf %231, %232 : vector<2x32xf32>
    %234 = arith.mulf %225, %198 : vector<2x32xf32>
    %235 = arith.mulf %219, %227 : vector<2x32xf32>
    %236 = arith.addf %234, %235 : vector<2x32xf32>
    %237 = math.tanh %236 : vector<2x32xf32>
    %238 = arith.mulf %233, %237 : vector<2x32xf32>
    %cst_50 = arith.constant dense<0.000000e+00> : vector<2x32xf32>
    %239 = tpu.matmul %238, %5, %cst_50 {dimension_numbers = #tpu.dot_dimension_numbers<[1], [0], [0], [1], [0, 0, 1, 1], [], []>} : vector<2x32xf32>, vector<32x32xf32>, vector<2x32xf32> -> vector<2x32xf32>
    %240 = vector.broadcast %6 : vector<1x32xf32> to vector<2x32xf32>
    %241 = arith.addf %239, %240 : vector<2x32xf32>
    %c5_i32 = arith.constant 5 : i32
    %242 = vector.broadcast %c5_i32 : i32 to vector<2x8x32xi32>
    %243 = arith.cmpi eq, %16, %242 : vector<2x8x32xi32>
    %244 = vector.shape_cast %241 : vector<2x32xf32> to vector<2x1x32xf32>
    %245 = vector.shape_cast %244 : vector<2x1x32xf32> to vector<2x1x32xf32>
    %246 = vector.broadcast %245 : vector<2x1x32xf32> to vector<2x8x32xf32>
    %247 = arith.select %243, %246, %209 : vector<2x8x32xi1>, vector<2x8x32xf32>
    %248 = vector.extract_strided_slice %14 {offsets = [0, 6, 0], sizes = [2, 1, 128], strides = [1, 1, 1]} : vector<2x8x128xf32> to vector<2x1x128xf32>
    %249 = vector.shape_cast %248 : vector<2x1x128xf32> to vector<2x128xf32>
    %cst_51 = arith.constant dense<0.000000e+00> : vector<2x128xf32>
    %250 = tpu.matmul %238, %3, %cst_51 {dimension_numbers = #tpu.dot_dimension_numbers<[1], [0], [0], [1], [0, 0, 1, 1], [], []>} : vector<2x32xf32>, vector<32x128xf32>, vector<2x128xf32> -> vector<2x128xf32>
    %251 = arith.addf %249, %250 : vector<2x128xf32>
    %252 = vector.extract_strided_slice %251 {offsets = [0, 0], sizes = [2, 32], strides = [1, 1]} : vector<2x128xf32> to vector<2x32xf32>
    %253 = arith.negf %252 : vector<2x32xf32>
    %254 = math.exp %253 : vector<2x32xf32>
    %cst_52 = arith.constant 1.000000e+00 : f32
    %255 = vector.broadcast %cst_52 : f32 to vector<2x32xf32>
    %256 = arith.addf %255, %254 : vector<2x32xf32>
    %257 = arith.divf %255, %256 : vector<2x32xf32>
    %258 = vector.extract_strided_slice %251 {offsets = [0, 32], sizes = [2, 32], strides = [1, 1]} : vector<2x128xf32> to vector<2x32xf32>
    %259 = arith.negf %258 : vector<2x32xf32>
    %260 = math.exp %259 : vector<2x32xf32>
    %cst_53 = arith.constant 1.000000e+00 : f32
    %261 = vector.broadcast %cst_53 : f32 to vector<2x32xf32>
    %262 = arith.addf %261, %260 : vector<2x32xf32>
    %263 = arith.divf %261, %262 : vector<2x32xf32>
    %264 = vector.extract_strided_slice %251 {offsets = [0, 64], sizes = [2, 32], strides = [1, 1]} : vector<2x128xf32> to vector<2x32xf32>
    %265 = math.tanh %264 : vector<2x32xf32>
    %266 = vector.extract_strided_slice %251 {offsets = [0, 96], sizes = [2, 32], strides = [1, 1]} : vector<2x128xf32> to vector<2x32xf32>
    %267 = arith.negf %266 : vector<2x32xf32>
    %268 = math.exp %267 : vector<2x32xf32>
    %cst_54 = arith.constant 1.000000e+00 : f32
    %269 = vector.broadcast %cst_54 : f32 to vector<2x32xf32>
    %270 = arith.addf %269, %268 : vector<2x32xf32>
    %271 = arith.divf %269, %270 : vector<2x32xf32>
    %272 = arith.mulf %263, %236 : vector<2x32xf32>
    %273 = arith.mulf %257, %265 : vector<2x32xf32>
    %274 = arith.addf %272, %273 : vector<2x32xf32>
    %275 = math.tanh %274 : vector<2x32xf32>
    %276 = arith.mulf %271, %275 : vector<2x32xf32>
    %cst_55 = arith.constant dense<0.000000e+00> : vector<2x32xf32>
    %277 = tpu.matmul %276, %5, %cst_55 {dimension_numbers = #tpu.dot_dimension_numbers<[1], [0], [0], [1], [0, 0, 1, 1], [], []>} : vector<2x32xf32>, vector<32x32xf32>, vector<2x32xf32> -> vector<2x32xf32>
    %278 = vector.broadcast %6 : vector<1x32xf32> to vector<2x32xf32>
    %279 = arith.addf %277, %278 : vector<2x32xf32>
    %c6_i32 = arith.constant 6 : i32
    %280 = vector.broadcast %c6_i32 : i32 to vector<2x8x32xi32>
    %281 = arith.cmpi eq, %16, %280 : vector<2x8x32xi32>
    %282 = vector.shape_cast %279 : vector<2x32xf32> to vector<2x1x32xf32>
    %283 = vector.shape_cast %282 : vector<2x1x32xf32> to vector<2x1x32xf32>
    %284 = vector.broadcast %283 : vector<2x1x32xf32> to vector<2x8x32xf32>
    %285 = arith.select %281, %284, %247 : vector<2x8x32xi1>, vector<2x8x32xf32>
    %286 = vector.extract_strided_slice %14 {offsets = [0, 7, 0], sizes = [2, 1, 128], strides = [1, 1, 1]} : vector<2x8x128xf32> to vector<2x1x128xf32>
    %287 = vector.shape_cast %286 : vector<2x1x128xf32> to vector<2x128xf32>
    %cst_56 = arith.constant dense<0.000000e+00> : vector<2x128xf32>
    %288 = tpu.matmul %276, %3, %cst_56 {dimension_numbers = #tpu.dot_dimension_numbers<[1], [0], [0], [1], [0, 0, 1, 1], [], []>} : vector<2x32xf32>, vector<32x128xf32>, vector<2x128xf32> -> vector<2x128xf32>
    %289 = arith.addf %287, %288 : vector<2x128xf32>
    %290 = vector.extract_strided_slice %289 {offsets = [0, 0], sizes = [2, 32], strides = [1, 1]} : vector<2x128xf32> to vector<2x32xf32>
    %291 = arith.negf %290 : vector<2x32xf32>
    %292 = math.exp %291 : vector<2x32xf32>
    %cst_57 = arith.constant 1.000000e+00 : f32
    %293 = vector.broadcast %cst_57 : f32 to vector<2x32xf32>
    %294 = arith.addf %293, %292 : vector<2x32xf32>
    %295 = arith.divf %293, %294 : vector<2x32xf32>
    %296 = vector.extract_strided_slice %289 {offsets = [0, 32], sizes = [2, 32], strides = [1, 1]} : vector<2x128xf32> to vector<2x32xf32>
    %297 = arith.negf %296 : vector<2x32xf32>
    %298 = math.exp %297 : vector<2x32xf32>
    %cst_58 = arith.constant 1.000000e+00 : f32
    %299 = vector.broadcast %cst_58 : f32 to vector<2x32xf32>
    %300 = arith.addf %299, %298 : vector<2x32xf32>
    %301 = arith.divf %299, %300 : vector<2x32xf32>
    %302 = vector.extract_strided_slice %289 {offsets = [0, 64], sizes = [2, 32], strides = [1, 1]} : vector<2x128xf32> to vector<2x32xf32>
    %303 = math.tanh %302 : vector<2x32xf32>
    %304 = vector.extract_strided_slice %289 {offsets = [0, 96], sizes = [2, 32], strides = [1, 1]} : vector<2x128xf32> to vector<2x32xf32>
    %305 = arith.negf %304 : vector<2x32xf32>
    %306 = math.exp %305 : vector<2x32xf32>
    %cst_59 = arith.constant 1.000000e+00 : f32
    %307 = vector.broadcast %cst_59 : f32 to vector<2x32xf32>
    %308 = arith.addf %307, %306 : vector<2x32xf32>
    %309 = arith.divf %307, %308 : vector<2x32xf32>
    %310 = arith.mulf %301, %274 : vector<2x32xf32>
    %311 = arith.mulf %295, %303 : vector<2x32xf32>
    %312 = arith.addf %310, %311 : vector<2x32xf32>
    %313 = math.tanh %312 : vector<2x32xf32>
    %314 = arith.mulf %309, %313 : vector<2x32xf32>
    %cst_60 = arith.constant dense<0.000000e+00> : vector<2x32xf32>
    %315 = tpu.matmul %314, %5, %cst_60 {dimension_numbers = #tpu.dot_dimension_numbers<[1], [0], [0], [1], [0, 0, 1, 1], [], []>} : vector<2x32xf32>, vector<32x32xf32>, vector<2x32xf32> -> vector<2x32xf32>
    %316 = vector.broadcast %6 : vector<1x32xf32> to vector<2x32xf32>
    %317 = arith.addf %315, %316 : vector<2x32xf32>
    %c7_i32 = arith.constant 7 : i32
    %318 = vector.broadcast %c7_i32 : i32 to vector<2x8x32xi32>
    %319 = arith.cmpi eq, %16, %318 : vector<2x8x32xi32>
    %320 = vector.shape_cast %317 : vector<2x32xf32> to vector<2x1x32xf32>
    %321 = vector.shape_cast %320 : vector<2x1x32xf32> to vector<2x1x32xf32>
    %322 = vector.broadcast %321 : vector<2x1x32xf32> to vector<2x8x32xf32>
    %323 = arith.select %319, %322, %285 : vector<2x8x32xi1>, vector<2x8x32xf32>
    %324 = tpu.iota {dimensions = array<i32: 1>} : vector<2x8xi32>
    %325 = arith.sitofp %324 : vector<2x8xi32> to vector<2x8xf32>
    %c0_61 = arith.constant 0 : index
    %c0_62 = arith.constant 0 : index
    %326 = vector.load %arg9[%c0_61, %c0_62] : memref<1x4xf32, #tpu.memory_space<vmem>>, vector<1x4xf32>
    %cst_63 = arith.constant dense<0.000000e+00> : vector<1x256xf32>
    %327 = tpu.matmul %326, %1, %cst_63 {dimension_numbers = #tpu.dot_dimension_numbers<[1], [0], [0], [1], [0, 0, 1, 1], [], []>} : vector<1x4xf32>, vector<4x256xf32>, vector<1x256xf32> -> vector<1x256xf32>
    %328 = arith.addf %327, %2 : vector<1x256xf32>
    %329 = vector.extract_strided_slice %328 {offsets = [0, 128], sizes = [1, 128], strides = [1, 1]} : vector<1x256xf32> to vector<1x128xf32>
    %330 = vector.shape_cast %329 : vector<1x128xf32> to vector<1x128xf32>
    %331 = vector.broadcast %330 : vector<1x128xf32> to vector<2x128xf32>
    %cst_64 = arith.constant 0.000000e+00 : f32
    %332 = vector.broadcast %cst_64 : f32 to vector<2x8xf32>
    %c0_i32_65 = arith.constant 0 : i32
    %333 = vector.broadcast %c0_i32_65 : i32 to vector<2x8xi32>
    %cst_66 = arith.constant 0.000000e+00 : f32
    %334 = vector.broadcast %cst_66 : f32 to vector<2x1xf32>
    %cst_67 = arith.constant dense<0.000000e+00> : vector<2x128xf32>
    %335 = tpu.matmul %314, %4, %cst_67 {dimension_numbers = #tpu.dot_dimension_numbers<[1], [0], [0], [1], [0, 0, 1, 1], [], []>} : vector<2x32xf32>, vector<32x128xf32>, vector<2x128xf32> -> vector<2x128xf32>
    %336 = arith.addf %331, %335 : vector<2x128xf32>
    %337 = vector.extract_strided_slice %336 {offsets = [0, 0], sizes = [2, 32], strides = [1, 1]} : vector<2x128xf32> to vector<2x32xf32>
    %338 = arith.negf %337 : vector<2x32xf32>
    %339 = math.exp %338 : vector<2x32xf32>
    %cst_68 = arith.constant 1.000000e+00 : f32
    %340 = vector.broadcast %cst_68 : f32 to vector<2x32xf32>
    %341 = arith.addf %340, %339 : vector<2x32xf32>
    %342 = arith.divf %340, %341 : vector<2x32xf32>
    %343 = vector.extract_strided_slice %336 {offsets = [0, 32], sizes = [2, 32], strides = [1, 1]} : vector<2x128xf32> to vector<2x32xf32>
    %344 = arith.negf %343 : vector<2x32xf32>
    %345 = math.exp %344 : vector<2x32xf32>
    %cst_69 = arith.constant 1.000000e+00 : f32
    %346 = vector.broadcast %cst_69 : f32 to vector<2x32xf32>
    %347 = arith.addf %346, %345 : vector<2x32xf32>
    %348 = arith.divf %346, %347 : vector<2x32xf32>
    %349 = vector.extract_strided_slice %336 {offsets = [0, 64], sizes = [2, 32], strides = [1, 1]} : vector<2x128xf32> to vector<2x32xf32>
    %350 = math.tanh %349 : vector<2x32xf32>
    %351 = vector.extract_strided_slice %336 {offsets = [0, 96], sizes = [2, 32], strides = [1, 1]} : vector<2x128xf32> to vector<2x32xf32>
    %352 = arith.negf %351 : vector<2x32xf32>
    %353 = math.exp %352 : vector<2x32xf32>
    %cst_70 = arith.constant 1.000000e+00 : f32
    %354 = vector.broadcast %cst_70 : f32 to vector<2x32xf32>
    %355 = arith.addf %354, %353 : vector<2x32xf32>
    %356 = arith.divf %354, %355 : vector<2x32xf32>
    %357 = arith.mulf %348, %312 : vector<2x32xf32>
    %358 = arith.mulf %342, %350 : vector<2x32xf32>
    %359 = arith.addf %357, %358 : vector<2x32xf32>
    %360 = math.tanh %359 : vector<2x32xf32>
    %361 = arith.mulf %356, %360 : vector<2x32xf32>
    %cst_71 = arith.constant dense<0.000000e+00> : vector<2x32xf32>
    %362 = tpu.matmul %361, %7, %cst_71 {dimension_numbers = #tpu.dot_dimension_numbers<[1], [0], [0], [1], [0, 0, 1, 1], [], []>} : vector<2x32xf32>, vector<32x32xf32>, vector<2x32xf32> -> vector<2x32xf32>
    %363 = vector.shape_cast %362 : vector<2x32xf32> to vector<2x1x32xf32>
    %364 = vector.broadcast %363 : vector<2x1x32xf32> to vector<2x8x32xf32>
    %365 = arith.addf %323, %364 : vector<2x8x32xf32>
    %366 = math.tanh %365 : vector<2x8x32xf32>
    %367 = vector.shape_cast %8 : vector<1x32xf32> to vector<1x1x32xf32>
    %368 = vector.broadcast %367 : vector<1x1x32xf32> to vector<2x8x32xf32>
    %369 = arith.mulf %366, %368 : vector<2x8x32xf32>
    %cst_72 = arith.constant dense<0.000000e+00> : vector<2x8xf32>
    %370 = vector.multi_reduction <add>, %369, %cst_72 [2] : vector<2x8x32xf32> to vector<2x8xf32>
    %371 = arith.addf %370, %332 : vector<2x8xf32>
    %cst_73 = arith.constant dense<0xFF800000> : vector<2xf32>
    %372 = vector.multi_reduction <maximumf>, %371, %cst_73 [1] : vector<2x8xf32> to vector<2xf32>
    %373 = vector.shape_cast %372 : vector<2xf32> to vector<2x1xf32>
    %374 = vector.broadcast %373 : vector<2x1xf32> to vector<2x8xf32>
    %375 = arith.cmpf oeq, %371, %374 : vector<2x8xf32>
    %cst_74 = arith.constant 8.000000e+00 : f32
    %376 = vector.broadcast %cst_74 : f32 to vector<2x8xf32>
    %377 = arith.select %375, %325, %376 : vector<2x8xi1>, vector<2x8xf32>
    %cst_75 = arith.constant dense<0x7F800000> : vector<2xf32>
    %378 = vector.multi_reduction <minimumf>, %377, %cst_75 [1] : vector<2x8xf32> to vector<2xf32>
    %379 = vector.shape_cast %378 : vector<2xf32> to vector<2x1xf32>
    %380 = arith.fptosi %379 : vector<2x1xf32> to vector<2x1xi32>
    %381 = vector.broadcast %373 : vector<2x1xf32> to vector<2x8xf32>
    %382 = arith.subf %371, %381 : vector<2x8xf32>
    %383 = math.exp %382 : vector<2x8xf32>
    %cst_76 = arith.constant dense<0.000000e+00> : vector<2xf32>
    %384 = vector.multi_reduction <add>, %383, %cst_76 [1] : vector<2x8xf32> to vector<2xf32>
    %385 = vector.shape_cast %384 : vector<2xf32> to vector<2x1xf32>
    %386 = math.log %385 : vector<2x1xf32>
    %387 = arith.subf %334, %386 : vector<2x1xf32>
    %c0_i32_77 = arith.constant 0 : i32
    %388 = vector.broadcast %c0_i32_77 : i32 to vector<2x8xi32>
    %389 = arith.cmpi eq, %324, %388 : vector<2x8xi32>
    %390 = vector.shape_cast %380 : vector<2x1xi32> to vector<2x1xi32>
    %391 = vector.broadcast %390 : vector<2x1xi32> to vector<2x8xi32>
    %392 = arith.select %389, %391, %333 : vector<2x8xi1>, vector<2x8xi32>
    %393 = vector.broadcast %380 : vector<2x1xi32> to vector<2x8xi32>
    %394 = arith.cmpi eq, %324, %393 : vector<2x8xi32>
    %cst_78 = arith.constant -1.000000e+30 : f32
    %395 = vector.broadcast %cst_78 : f32 to vector<2x8xf32>
    %396 = arith.select %394, %395, %332 : vector<2x8xi1>, vector<2x8xf32>
    %397 = arith.extui %394 : vector<2x8xi1> to vector<2x8xi32>
    %398 = arith.sitofp %397 : vector<2x8xi32> to vector<2x8xf32>
    %399 = vector.shape_cast %398 : vector<2x8xf32> to vector<2x8x1xf32>
    %400 = vector.broadcast %399 : vector<2x8x1xf32> to vector<2x8x128xf32>
    %401 = arith.mulf %400, %15 : vector<2x8x128xf32>
    %cst_79 = arith.constant dense<0.000000e+00> : vector<2x128xf32>
    %402 = vector.multi_reduction <add>, %401, %cst_79 [1] : vector<2x8x128xf32> to vector<2x128xf32>
    %cst_80 = arith.constant dense<0.000000e+00> : vector<2x128xf32>
    %403 = tpu.matmul %361, %4, %cst_80 {dimension_numbers = #tpu.dot_dimension_numbers<[1], [0], [0], [1], [0, 0, 1, 1], [], []>} : vector<2x32xf32>, vector<32x128xf32>, vector<2x128xf32> -> vector<2x128xf32>
    %404 = arith.addf %402, %403 : vector<2x128xf32>
    %405 = vector.extract_strided_slice %404 {offsets = [0, 0], sizes = [2, 32], strides = [1, 1]} : vector<2x128xf32> to vector<2x32xf32>
    %406 = arith.negf %405 : vector<2x32xf32>
    %407 = math.exp %406 : vector<2x32xf32>
    %cst_81 = arith.constant 1.000000e+00 : f32
    %408 = vector.broadcast %cst_81 : f32 to vector<2x32xf32>
    %409 = arith.addf %408, %407 : vector<2x32xf32>
    %410 = arith.divf %408, %409 : vector<2x32xf32>
    %411 = vector.extract_strided_slice %404 {offsets = [0, 32], sizes = [2, 32], strides = [1, 1]} : vector<2x128xf32> to vector<2x32xf32>
    %412 = arith.negf %411 : vector<2x32xf32>
    %413 = math.exp %412 : vector<2x32xf32>
    %cst_82 = arith.constant 1.000000e+00 : f32
    %414 = vector.broadcast %cst_82 : f32 to vector<2x32xf32>
    %415 = arith.addf %414, %413 : vector<2x32xf32>
    %416 = arith.divf %414, %415 : vector<2x32xf32>
    %417 = vector.extract_strided_slice %404 {offsets = [0, 64], sizes = [2, 32], strides = [1, 1]} : vector<2x128xf32> to vector<2x32xf32>
    %418 = math.tanh %417 : vector<2x32xf32>
    %419 = vector.extract_strided_slice %404 {offsets = [0, 96], sizes = [2, 32], strides = [1, 1]} : vector<2x128xf32> to vector<2x32xf32>
    %420 = arith.negf %419 : vector<2x32xf32>
    %421 = math.exp %420 : vector<2x32xf32>
    %cst_83 = arith.constant 1.000000e+00 : f32
    %422 = vector.broadcast %cst_83 : f32 to vector<2x32xf32>
    %423 = arith.addf %422, %421 : vector<2x32xf32>
    %424 = arith.divf %422, %423 : vector<2x32xf32>
    %425 = arith.mulf %416, %359 : vector<2x32xf32>
    %426 = arith.mulf %410, %418 : vector<2x32xf32>
    %427 = arith.addf %425, %426 : vector<2x32xf32>
    %428 = math.tanh %427 : vector<2x32xf32>
    %429 = arith.mulf %424, %428 : vector<2x32xf32>
    %cst_84 = arith.constant dense<0.000000e+00> : vector<2x32xf32>
    %430 = tpu.matmul %429, %7, %cst_84 {dimension_numbers = #tpu.dot_dimension_numbers<[1], [0], [0], [1], [0, 0, 1, 1], [], []>} : vector<2x32xf32>, vector<32x32xf32>, vector<2x32xf32> -> vector<2x32xf32>
    %431 = vector.shape_cast %430 : vector<2x32xf32> to vector<2x1x32xf32>
    %432 = vector.broadcast %431 : vector<2x1x32xf32> to vector<2x8x32xf32>
    %433 = arith.addf %323, %432 : vector<2x8x32xf32>
    %434 = math.tanh %433 : vector<2x8x32xf32>
    %435 = vector.shape_cast %8 : vector<1x32xf32> to vector<1x1x32xf32>
    %436 = vector.broadcast %435 : vector<1x1x32xf32> to vector<2x8x32xf32>
    %437 = arith.mulf %434, %436 : vector<2x8x32xf32>
    %cst_85 = arith.constant dense<0.000000e+00> : vector<2x8xf32>
    %438 = vector.multi_reduction <add>, %437, %cst_85 [2] : vector<2x8x32xf32> to vector<2x8xf32>
    %439 = arith.addf %438, %396 : vector<2x8xf32>
    %cst_86 = arith.constant dense<0xFF800000> : vector<2xf32>
    %440 = vector.multi_reduction <maximumf>, %439, %cst_86 [1] : vector<2x8xf32> to vector<2xf32>
    %441 = vector.shape_cast %440 : vector<2xf32> to vector<2x1xf32>
    %442 = vector.broadcast %441 : vector<2x1xf32> to vector<2x8xf32>
    %443 = arith.cmpf oeq, %439, %442 : vector<2x8xf32>
    %cst_87 = arith.constant 8.000000e+00 : f32
    %444 = vector.broadcast %cst_87 : f32 to vector<2x8xf32>
    %445 = arith.select %443, %325, %444 : vector<2x8xi1>, vector<2x8xf32>
    %cst_88 = arith.constant dense<0x7F800000> : vector<2xf32>
    %446 = vector.multi_reduction <minimumf>, %445, %cst_88 [1] : vector<2x8xf32> to vector<2xf32>
    %447 = vector.shape_cast %446 : vector<2xf32> to vector<2x1xf32>
    %448 = arith.fptosi %447 : vector<2x1xf32> to vector<2x1xi32>
    %449 = vector.broadcast %441 : vector<2x1xf32> to vector<2x8xf32>
    %450 = arith.subf %439, %449 : vector<2x8xf32>
    %451 = math.exp %450 : vector<2x8xf32>
    %cst_89 = arith.constant dense<0.000000e+00> : vector<2xf32>
    %452 = vector.multi_reduction <add>, %451, %cst_89 [1] : vector<2x8xf32> to vector<2xf32>
    %453 = vector.shape_cast %452 : vector<2xf32> to vector<2x1xf32>
    %454 = math.log %453 : vector<2x1xf32>
    %455 = arith.subf %387, %454 : vector<2x1xf32>
    %c1_i32_90 = arith.constant 1 : i32
    %456 = vector.broadcast %c1_i32_90 : i32 to vector<2x8xi32>
    %457 = arith.cmpi eq, %324, %456 : vector<2x8xi32>
    %458 = vector.shape_cast %448 : vector<2x1xi32> to vector<2x1xi32>
    %459 = vector.broadcast %458 : vector<2x1xi32> to vector<2x8xi32>
    %460 = arith.select %457, %459, %392 : vector<2x8xi1>, vector<2x8xi32>
    %461 = vector.broadcast %448 : vector<2x1xi32> to vector<2x8xi32>
    %462 = arith.cmpi eq, %324, %461 : vector<2x8xi32>
    %cst_91 = arith.constant -1.000000e+30 : f32
    %463 = vector.broadcast %cst_91 : f32 to vector<2x8xf32>
    %464 = arith.select %462, %463, %396 : vector<2x8xi1>, vector<2x8xf32>
    %465 = arith.extui %462 : vector<2x8xi1> to vector<2x8xi32>
    %466 = arith.sitofp %465 : vector<2x8xi32> to vector<2x8xf32>
    %467 = vector.shape_cast %466 : vector<2x8xf32> to vector<2x8x1xf32>
    %468 = vector.broadcast %467 : vector<2x8x1xf32> to vector<2x8x128xf32>
    %469 = arith.mulf %468, %15 : vector<2x8x128xf32>
    %cst_92 = arith.constant dense<0.000000e+00> : vector<2x128xf32>
    %470 = vector.multi_reduction <add>, %469, %cst_92 [1] : vector<2x8x128xf32> to vector<2x128xf32>
    %cst_93 = arith.constant dense<0.000000e+00> : vector<2x128xf32>
    %471 = tpu.matmul %429, %4, %cst_93 {dimension_numbers = #tpu.dot_dimension_numbers<[1], [0], [0], [1], [0, 0, 1, 1], [], []>} : vector<2x32xf32>, vector<32x128xf32>, vector<2x128xf32> -> vector<2x128xf32>
    %472 = arith.addf %470, %471 : vector<2x128xf32>
    %473 = vector.extract_strided_slice %472 {offsets = [0, 0], sizes = [2, 32], strides = [1, 1]} : vector<2x128xf32> to vector<2x32xf32>
    %474 = arith.negf %473 : vector<2x32xf32>
    %475 = math.exp %474 : vector<2x32xf32>
    %cst_94 = arith.constant 1.000000e+00 : f32
    %476 = vector.broadcast %cst_94 : f32 to vector<2x32xf32>
    %477 = arith.addf %476, %475 : vector<2x32xf32>
    %478 = arith.divf %476, %477 : vector<2x32xf32>
    %479 = vector.extract_strided_slice %472 {offsets = [0, 32], sizes = [2, 32], strides = [1, 1]} : vector<2x128xf32> to vector<2x32xf32>
    %480 = arith.negf %479 : vector<2x32xf32>
    %481 = math.exp %480 : vector<2x32xf32>
    %cst_95 = arith.constant 1.000000e+00 : f32
    %482 = vector.broadcast %cst_95 : f32 to vector<2x32xf32>
    %483 = arith.addf %482, %481 : vector<2x32xf32>
    %484 = arith.divf %482, %483 : vector<2x32xf32>
    %485 = vector.extract_strided_slice %472 {offsets = [0, 64], sizes = [2, 32], strides = [1, 1]} : vector<2x128xf32> to vector<2x32xf32>
    %486 = math.tanh %485 : vector<2x32xf32>
    %487 = vector.extract_strided_slice %472 {offsets = [0, 96], sizes = [2, 32], strides = [1, 1]} : vector<2x128xf32> to vector<2x32xf32>
    %488 = arith.negf %487 : vector<2x32xf32>
    %489 = math.exp %488 : vector<2x32xf32>
    %cst_96 = arith.constant 1.000000e+00 : f32
    %490 = vector.broadcast %cst_96 : f32 to vector<2x32xf32>
    %491 = arith.addf %490, %489 : vector<2x32xf32>
    %492 = arith.divf %490, %491 : vector<2x32xf32>
    %493 = arith.mulf %484, %427 : vector<2x32xf32>
    %494 = arith.mulf %478, %486 : vector<2x32xf32>
    %495 = arith.addf %493, %494 : vector<2x32xf32>
    %496 = math.tanh %495 : vector<2x32xf32>
    %497 = arith.mulf %492, %496 : vector<2x32xf32>
    %cst_97 = arith.constant dense<0.000000e+00> : vector<2x32xf32>
    %498 = tpu.matmul %497, %7, %cst_97 {dimension_numbers = #tpu.dot_dimension_numbers<[1], [0], [0], [1], [0, 0, 1, 1], [], []>} : vector<2x32xf32>, vector<32x32xf32>, vector<2x32xf32> -> vector<2x32xf32>
    %499 = vector.shape_cast %498 : vector<2x32xf32> to vector<2x1x32xf32>
    %500 = vector.broadcast %499 : vector<2x1x32xf32> to vector<2x8x32xf32>
    %501 = arith.addf %323, %500 : vector<2x8x32xf32>
    %502 = math.tanh %501 : vector<2x8x32xf32>
    %503 = vector.shape_cast %8 : vector<1x32xf32> to vector<1x1x32xf32>
    %504 = vector.broadcast %503 : vector<1x1x32xf32> to vector<2x8x32xf32>
    %505 = arith.mulf %502, %504 : vector<2x8x32xf32>
    %cst_98 = arith.constant dense<0.000000e+00> : vector<2x8xf32>
    %506 = vector.multi_reduction <add>, %505, %cst_98 [2] : vector<2x8x32xf32> to vector<2x8xf32>
    %507 = arith.addf %506, %464 : vector<2x8xf32>
    %cst_99 = arith.constant dense<0xFF800000> : vector<2xf32>
    %508 = vector.multi_reduction <maximumf>, %507, %cst_99 [1] : vector<2x8xf32> to vector<2xf32>
    %509 = vector.shape_cast %508 : vector<2xf32> to vector<2x1xf32>
    %510 = vector.broadcast %509 : vector<2x1xf32> to vector<2x8xf32>
    %511 = arith.cmpf oeq, %507, %510 : vector<2x8xf32>
    %cst_100 = arith.constant 8.000000e+00 : f32
    %512 = vector.broadcast %cst_100 : f32 to vector<2x8xf32>
    %513 = arith.select %511, %325, %512 : vector<2x8xi1>, vector<2x8xf32>
    %cst_101 = arith.constant dense<0x7F800000> : vector<2xf32>
    %514 = vector.multi_reduction <minimumf>, %513, %cst_101 [1] : vector<2x8xf32> to vector<2xf32>
    %515 = vector.shape_cast %514 : vector<2xf32> to vector<2x1xf32>
    %516 = arith.fptosi %515 : vector<2x1xf32> to vector<2x1xi32>
    %517 = vector.broadcast %509 : vector<2x1xf32> to vector<2x8xf32>
    %518 = arith.subf %507, %517 : vector<2x8xf32>
    %519 = math.exp %518 : vector<2x8xf32>
    %cst_102 = arith.constant dense<0.000000e+00> : vector<2xf32>
    %520 = vector.multi_reduction <add>, %519, %cst_102 [1] : vector<2x8xf32> to vector<2xf32>
    %521 = vector.shape_cast %520 : vector<2xf32> to vector<2x1xf32>
    %522 = math.log %521 : vector<2x1xf32>
    %523 = arith.subf %455, %522 : vector<2x1xf32>
    %c2_i32_103 = arith.constant 2 : i32
    %524 = vector.broadcast %c2_i32_103 : i32 to vector<2x8xi32>
    %525 = arith.cmpi eq, %324, %524 : vector<2x8xi32>
    %526 = vector.shape_cast %516 : vector<2x1xi32> to vector<2x1xi32>
    %527 = vector.broadcast %526 : vector<2x1xi32> to vector<2x8xi32>
    %528 = arith.select %525, %527, %460 : vector<2x8xi1>, vector<2x8xi32>
    %529 = vector.broadcast %516 : vector<2x1xi32> to vector<2x8xi32>
    %530 = arith.cmpi eq, %324, %529 : vector<2x8xi32>
    %cst_104 = arith.constant -1.000000e+30 : f32
    %531 = vector.broadcast %cst_104 : f32 to vector<2x8xf32>
    %532 = arith.select %530, %531, %464 : vector<2x8xi1>, vector<2x8xf32>
    %533 = arith.extui %530 : vector<2x8xi1> to vector<2x8xi32>
    %534 = arith.sitofp %533 : vector<2x8xi32> to vector<2x8xf32>
    %535 = vector.shape_cast %534 : vector<2x8xf32> to vector<2x8x1xf32>
    %536 = vector.broadcast %535 : vector<2x8x1xf32> to vector<2x8x128xf32>
    %537 = arith.mulf %536, %15 : vector<2x8x128xf32>
    %cst_105 = arith.constant dense<0.000000e+00> : vector<2x128xf32>
    %538 = vector.multi_reduction <add>, %537, %cst_105 [1] : vector<2x8x128xf32> to vector<2x128xf32>
    %cst_106 = arith.constant dense<0.000000e+00> : vector<2x128xf32>
    %539 = tpu.matmul %497, %4, %cst_106 {dimension_numbers = #tpu.dot_dimension_numbers<[1], [0], [0], [1], [0, 0, 1, 1], [], []>} : vector<2x32xf32>, vector<32x128xf32>, vector<2x128xf32> -> vector<2x128xf32>
    %540 = arith.addf %538, %539 : vector<2x128xf32>
    %541 = vector.extract_strided_slice %540 {offsets = [0, 0], sizes = [2, 32], strides = [1, 1]} : vector<2x128xf32> to vector<2x32xf32>
    %542 = arith.negf %541 : vector<2x32xf32>
    %543 = math.exp %542 : vector<2x32xf32>
    %cst_107 = arith.constant 1.000000e+00 : f32
    %544 = vector.broadcast %cst_107 : f32 to vector<2x32xf32>
    %545 = arith.addf %544, %543 : vector<2x32xf32>
    %546 = arith.divf %544, %545 : vector<2x32xf32>
    %547 = vector.extract_strided_slice %540 {offsets = [0, 32], sizes = [2, 32], strides = [1, 1]} : vector<2x128xf32> to vector<2x32xf32>
    %548 = arith.negf %547 : vector<2x32xf32>
    %549 = math.exp %548 : vector<2x32xf32>
    %cst_108 = arith.constant 1.000000e+00 : f32
    %550 = vector.broadcast %cst_108 : f32 to vector<2x32xf32>
    %551 = arith.addf %550, %549 : vector<2x32xf32>
    %552 = arith.divf %550, %551 : vector<2x32xf32>
    %553 = vector.extract_strided_slice %540 {offsets = [0, 64], sizes = [2, 32], strides = [1, 1]} : vector<2x128xf32> to vector<2x32xf32>
    %554 = math.tanh %553 : vector<2x32xf32>
    %555 = vector.extract_strided_slice %540 {offsets = [0, 96], sizes = [2, 32], strides = [1, 1]} : vector<2x128xf32> to vector<2x32xf32>
    %556 = arith.negf %555 : vector<2x32xf32>
    %557 = math.exp %556 : vector<2x32xf32>
    %cst_109 = arith.constant 1.000000e+00 : f32
    %558 = vector.broadcast %cst_109 : f32 to vector<2x32xf32>
    %559 = arith.addf %558, %557 : vector<2x32xf32>
    %560 = arith.divf %558, %559 : vector<2x32xf32>
    %561 = arith.mulf %552, %495 : vector<2x32xf32>
    %562 = arith.mulf %546, %554 : vector<2x32xf32>
    %563 = arith.addf %561, %562 : vector<2x32xf32>
    %564 = math.tanh %563 : vector<2x32xf32>
    %565 = arith.mulf %560, %564 : vector<2x32xf32>
    %cst_110 = arith.constant dense<0.000000e+00> : vector<2x32xf32>
    %566 = tpu.matmul %565, %7, %cst_110 {dimension_numbers = #tpu.dot_dimension_numbers<[1], [0], [0], [1], [0, 0, 1, 1], [], []>} : vector<2x32xf32>, vector<32x32xf32>, vector<2x32xf32> -> vector<2x32xf32>
    %567 = vector.shape_cast %566 : vector<2x32xf32> to vector<2x1x32xf32>
    %568 = vector.broadcast %567 : vector<2x1x32xf32> to vector<2x8x32xf32>
    %569 = arith.addf %323, %568 : vector<2x8x32xf32>
    %570 = math.tanh %569 : vector<2x8x32xf32>
    %571 = vector.shape_cast %8 : vector<1x32xf32> to vector<1x1x32xf32>
    %572 = vector.broadcast %571 : vector<1x1x32xf32> to vector<2x8x32xf32>
    %573 = arith.mulf %570, %572 : vector<2x8x32xf32>
    %cst_111 = arith.constant dense<0.000000e+00> : vector<2x8xf32>
    %574 = vector.multi_reduction <add>, %573, %cst_111 [2] : vector<2x8x32xf32> to vector<2x8xf32>
    %575 = arith.addf %574, %532 : vector<2x8xf32>
    %cst_112 = arith.constant dense<0xFF800000> : vector<2xf32>
    %576 = vector.multi_reduction <maximumf>, %575, %cst_112 [1] : vector<2x8xf32> to vector<2xf32>
    %577 = vector.shape_cast %576 : vector<2xf32> to vector<2x1xf32>
    %578 = vector.broadcast %577 : vector<2x1xf32> to vector<2x8xf32>
    %579 = arith.cmpf oeq, %575, %578 : vector<2x8xf32>
    %cst_113 = arith.constant 8.000000e+00 : f32
    %580 = vector.broadcast %cst_113 : f32 to vector<2x8xf32>
    %581 = arith.select %579, %325, %580 : vector<2x8xi1>, vector<2x8xf32>
    %cst_114 = arith.constant dense<0x7F800000> : vector<2xf32>
    %582 = vector.multi_reduction <minimumf>, %581, %cst_114 [1] : vector<2x8xf32> to vector<2xf32>
    %583 = vector.shape_cast %582 : vector<2xf32> to vector<2x1xf32>
    %584 = arith.fptosi %583 : vector<2x1xf32> to vector<2x1xi32>
    %585 = vector.broadcast %577 : vector<2x1xf32> to vector<2x8xf32>
    %586 = arith.subf %575, %585 : vector<2x8xf32>
    %587 = math.exp %586 : vector<2x8xf32>
    %cst_115 = arith.constant dense<0.000000e+00> : vector<2xf32>
    %588 = vector.multi_reduction <add>, %587, %cst_115 [1] : vector<2x8xf32> to vector<2xf32>
    %589 = vector.shape_cast %588 : vector<2xf32> to vector<2x1xf32>
    %590 = math.log %589 : vector<2x1xf32>
    %591 = arith.subf %523, %590 : vector<2x1xf32>
    %c3_i32_116 = arith.constant 3 : i32
    %592 = vector.broadcast %c3_i32_116 : i32 to vector<2x8xi32>
    %593 = arith.cmpi eq, %324, %592 : vector<2x8xi32>
    %594 = vector.shape_cast %584 : vector<2x1xi32> to vector<2x1xi32>
    %595 = vector.broadcast %594 : vector<2x1xi32> to vector<2x8xi32>
    %596 = arith.select %593, %595, %528 : vector<2x8xi1>, vector<2x8xi32>
    %597 = vector.broadcast %584 : vector<2x1xi32> to vector<2x8xi32>
    %598 = arith.cmpi eq, %324, %597 : vector<2x8xi32>
    %cst_117 = arith.constant -1.000000e+30 : f32
    %599 = vector.broadcast %cst_117 : f32 to vector<2x8xf32>
    %600 = arith.select %598, %599, %532 : vector<2x8xi1>, vector<2x8xf32>
    %601 = arith.extui %598 : vector<2x8xi1> to vector<2x8xi32>
    %602 = arith.sitofp %601 : vector<2x8xi32> to vector<2x8xf32>
    %603 = vector.shape_cast %602 : vector<2x8xf32> to vector<2x8x1xf32>
    %604 = vector.broadcast %603 : vector<2x8x1xf32> to vector<2x8x128xf32>
    %605 = arith.mulf %604, %15 : vector<2x8x128xf32>
    %cst_118 = arith.constant dense<0.000000e+00> : vector<2x128xf32>
    %606 = vector.multi_reduction <add>, %605, %cst_118 [1] : vector<2x8x128xf32> to vector<2x128xf32>
    %cst_119 = arith.constant dense<0.000000e+00> : vector<2x128xf32>
    %607 = tpu.matmul %565, %4, %cst_119 {dimension_numbers = #tpu.dot_dimension_numbers<[1], [0], [0], [1], [0, 0, 1, 1], [], []>} : vector<2x32xf32>, vector<32x128xf32>, vector<2x128xf32> -> vector<2x128xf32>
    %608 = arith.addf %606, %607 : vector<2x128xf32>
    %609 = vector.extract_strided_slice %608 {offsets = [0, 0], sizes = [2, 32], strides = [1, 1]} : vector<2x128xf32> to vector<2x32xf32>
    %610 = arith.negf %609 : vector<2x32xf32>
    %611 = math.exp %610 : vector<2x32xf32>
    %cst_120 = arith.constant 1.000000e+00 : f32
    %612 = vector.broadcast %cst_120 : f32 to vector<2x32xf32>
    %613 = arith.addf %612, %611 : vector<2x32xf32>
    %614 = arith.divf %612, %613 : vector<2x32xf32>
    %615 = vector.extract_strided_slice %608 {offsets = [0, 32], sizes = [2, 32], strides = [1, 1]} : vector<2x128xf32> to vector<2x32xf32>
    %616 = arith.negf %615 : vector<2x32xf32>
    %617 = math.exp %616 : vector<2x32xf32>
    %cst_121 = arith.constant 1.000000e+00 : f32
    %618 = vector.broadcast %cst_121 : f32 to vector<2x32xf32>
    %619 = arith.addf %618, %617 : vector<2x32xf32>
    %620 = arith.divf %618, %619 : vector<2x32xf32>
    %621 = vector.extract_strided_slice %608 {offsets = [0, 64], sizes = [2, 32], strides = [1, 1]} : vector<2x128xf32> to vector<2x32xf32>
    %622 = math.tanh %621 : vector<2x32xf32>
    %623 = vector.extract_strided_slice %608 {offsets = [0, 96], sizes = [2, 32], strides = [1, 1]} : vector<2x128xf32> to vector<2x32xf32>
    %624 = arith.negf %623 : vector<2x32xf32>
    %625 = math.exp %624 : vector<2x32xf32>
    %cst_122 = arith.constant 1.000000e+00 : f32
    %626 = vector.broadcast %cst_122 : f32 to vector<2x32xf32>
    %627 = arith.addf %626, %625 : vector<2x32xf32>
    %628 = arith.divf %626, %627 : vector<2x32xf32>
    %629 = arith.mulf %620, %563 : vector<2x32xf32>
    %630 = arith.mulf %614, %622 : vector<2x32xf32>
    %631 = arith.addf %629, %630 : vector<2x32xf32>
    %632 = math.tanh %631 : vector<2x32xf32>
    %633 = arith.mulf %628, %632 : vector<2x32xf32>
    %cst_123 = arith.constant dense<0.000000e+00> : vector<2x32xf32>
    %634 = tpu.matmul %633, %7, %cst_123 {dimension_numbers = #tpu.dot_dimension_numbers<[1], [0], [0], [1], [0, 0, 1, 1], [], []>} : vector<2x32xf32>, vector<32x32xf32>, vector<2x32xf32> -> vector<2x32xf32>
    %635 = vector.shape_cast %634 : vector<2x32xf32> to vector<2x1x32xf32>
    %636 = vector.broadcast %635 : vector<2x1x32xf32> to vector<2x8x32xf32>
    %637 = arith.addf %323, %636 : vector<2x8x32xf32>
    %638 = math.tanh %637 : vector<2x8x32xf32>
    %639 = vector.shape_cast %8 : vector<1x32xf32> to vector<1x1x32xf32>
    %640 = vector.broadcast %639 : vector<1x1x32xf32> to vector<2x8x32xf32>
    %641 = arith.mulf %638, %640 : vector<2x8x32xf32>
    %cst_124 = arith.constant dense<0.000000e+00> : vector<2x8xf32>
    %642 = vector.multi_reduction <add>, %641, %cst_124 [2] : vector<2x8x32xf32> to vector<2x8xf32>
    %643 = arith.addf %642, %600 : vector<2x8xf32>
    %cst_125 = arith.constant dense<0xFF800000> : vector<2xf32>
    %644 = vector.multi_reduction <maximumf>, %643, %cst_125 [1] : vector<2x8xf32> to vector<2xf32>
    %645 = vector.shape_cast %644 : vector<2xf32> to vector<2x1xf32>
    %646 = vector.broadcast %645 : vector<2x1xf32> to vector<2x8xf32>
    %647 = arith.cmpf oeq, %643, %646 : vector<2x8xf32>
    %cst_126 = arith.constant 8.000000e+00 : f32
    %648 = vector.broadcast %cst_126 : f32 to vector<2x8xf32>
    %649 = arith.select %647, %325, %648 : vector<2x8xi1>, vector<2x8xf32>
    %cst_127 = arith.constant dense<0x7F800000> : vector<2xf32>
    %650 = vector.multi_reduction <minimumf>, %649, %cst_127 [1] : vector<2x8xf32> to vector<2xf32>
    %651 = vector.shape_cast %650 : vector<2xf32> to vector<2x1xf32>
    %652 = arith.fptosi %651 : vector<2x1xf32> to vector<2x1xi32>
    %653 = vector.broadcast %645 : vector<2x1xf32> to vector<2x8xf32>
    %654 = arith.subf %643, %653 : vector<2x8xf32>
    %655 = math.exp %654 : vector<2x8xf32>
    %cst_128 = arith.constant dense<0.000000e+00> : vector<2xf32>
    %656 = vector.multi_reduction <add>, %655, %cst_128 [1] : vector<2x8xf32> to vector<2xf32>
    %657 = vector.shape_cast %656 : vector<2xf32> to vector<2x1xf32>
    %658 = math.log %657 : vector<2x1xf32>
    %659 = arith.subf %591, %658 : vector<2x1xf32>
    %c4_i32_129 = arith.constant 4 : i32
    %660 = vector.broadcast %c4_i32_129 : i32 to vector<2x8xi32>
    %661 = arith.cmpi eq, %324, %660 : vector<2x8xi32>
    %662 = vector.shape_cast %652 : vector<2x1xi32> to vector<2x1xi32>
    %663 = vector.broadcast %662 : vector<2x1xi32> to vector<2x8xi32>
    %664 = arith.select %661, %663, %596 : vector<2x8xi1>, vector<2x8xi32>
    %665 = vector.broadcast %652 : vector<2x1xi32> to vector<2x8xi32>
    %666 = arith.cmpi eq, %324, %665 : vector<2x8xi32>
    %cst_130 = arith.constant -1.000000e+30 : f32
    %667 = vector.broadcast %cst_130 : f32 to vector<2x8xf32>
    %668 = arith.select %666, %667, %600 : vector<2x8xi1>, vector<2x8xf32>
    %669 = arith.extui %666 : vector<2x8xi1> to vector<2x8xi32>
    %670 = arith.sitofp %669 : vector<2x8xi32> to vector<2x8xf32>
    %671 = vector.shape_cast %670 : vector<2x8xf32> to vector<2x8x1xf32>
    %672 = vector.broadcast %671 : vector<2x8x1xf32> to vector<2x8x128xf32>
    %673 = arith.mulf %672, %15 : vector<2x8x128xf32>
    %cst_131 = arith.constant dense<0.000000e+00> : vector<2x128xf32>
    %674 = vector.multi_reduction <add>, %673, %cst_131 [1] : vector<2x8x128xf32> to vector<2x128xf32>
    %cst_132 = arith.constant dense<0.000000e+00> : vector<2x128xf32>
    %675 = tpu.matmul %633, %4, %cst_132 {dimension_numbers = #tpu.dot_dimension_numbers<[1], [0], [0], [1], [0, 0, 1, 1], [], []>} : vector<2x32xf32>, vector<32x128xf32>, vector<2x128xf32> -> vector<2x128xf32>
    %676 = arith.addf %674, %675 : vector<2x128xf32>
    %677 = vector.extract_strided_slice %676 {offsets = [0, 0], sizes = [2, 32], strides = [1, 1]} : vector<2x128xf32> to vector<2x32xf32>
    %678 = arith.negf %677 : vector<2x32xf32>
    %679 = math.exp %678 : vector<2x32xf32>
    %cst_133 = arith.constant 1.000000e+00 : f32
    %680 = vector.broadcast %cst_133 : f32 to vector<2x32xf32>
    %681 = arith.addf %680, %679 : vector<2x32xf32>
    %682 = arith.divf %680, %681 : vector<2x32xf32>
    %683 = vector.extract_strided_slice %676 {offsets = [0, 32], sizes = [2, 32], strides = [1, 1]} : vector<2x128xf32> to vector<2x32xf32>
    %684 = arith.negf %683 : vector<2x32xf32>
    %685 = math.exp %684 : vector<2x32xf32>
    %cst_134 = arith.constant 1.000000e+00 : f32
    %686 = vector.broadcast %cst_134 : f32 to vector<2x32xf32>
    %687 = arith.addf %686, %685 : vector<2x32xf32>
    %688 = arith.divf %686, %687 : vector<2x32xf32>
    %689 = vector.extract_strided_slice %676 {offsets = [0, 64], sizes = [2, 32], strides = [1, 1]} : vector<2x128xf32> to vector<2x32xf32>
    %690 = math.tanh %689 : vector<2x32xf32>
    %691 = vector.extract_strided_slice %676 {offsets = [0, 96], sizes = [2, 32], strides = [1, 1]} : vector<2x128xf32> to vector<2x32xf32>
    %692 = arith.negf %691 : vector<2x32xf32>
    %693 = math.exp %692 : vector<2x32xf32>
    %cst_135 = arith.constant 1.000000e+00 : f32
    %694 = vector.broadcast %cst_135 : f32 to vector<2x32xf32>
    %695 = arith.addf %694, %693 : vector<2x32xf32>
    %696 = arith.divf %694, %695 : vector<2x32xf32>
    %697 = arith.mulf %688, %631 : vector<2x32xf32>
    %698 = arith.mulf %682, %690 : vector<2x32xf32>
    %699 = arith.addf %697, %698 : vector<2x32xf32>
    %700 = math.tanh %699 : vector<2x32xf32>
    %701 = arith.mulf %696, %700 : vector<2x32xf32>
    %cst_136 = arith.constant dense<0.000000e+00> : vector<2x32xf32>
    %702 = tpu.matmul %701, %7, %cst_136 {dimension_numbers = #tpu.dot_dimension_numbers<[1], [0], [0], [1], [0, 0, 1, 1], [], []>} : vector<2x32xf32>, vector<32x32xf32>, vector<2x32xf32> -> vector<2x32xf32>
    %703 = vector.shape_cast %702 : vector<2x32xf32> to vector<2x1x32xf32>
    %704 = vector.broadcast %703 : vector<2x1x32xf32> to vector<2x8x32xf32>
    %705 = arith.addf %323, %704 : vector<2x8x32xf32>
    %706 = math.tanh %705 : vector<2x8x32xf32>
    %707 = vector.shape_cast %8 : vector<1x32xf32> to vector<1x1x32xf32>
    %708 = vector.broadcast %707 : vector<1x1x32xf32> to vector<2x8x32xf32>
    %709 = arith.mulf %706, %708 : vector<2x8x32xf32>
    %cst_137 = arith.constant dense<0.000000e+00> : vector<2x8xf32>
    %710 = vector.multi_reduction <add>, %709, %cst_137 [2] : vector<2x8x32xf32> to vector<2x8xf32>
    %711 = arith.addf %710, %668 : vector<2x8xf32>
    %cst_138 = arith.constant dense<0xFF800000> : vector<2xf32>
    %712 = vector.multi_reduction <maximumf>, %711, %cst_138 [1] : vector<2x8xf32> to vector<2xf32>
    %713 = vector.shape_cast %712 : vector<2xf32> to vector<2x1xf32>
    %714 = vector.broadcast %713 : vector<2x1xf32> to vector<2x8xf32>
    %715 = arith.cmpf oeq, %711, %714 : vector<2x8xf32>
    %cst_139 = arith.constant 8.000000e+00 : f32
    %716 = vector.broadcast %cst_139 : f32 to vector<2x8xf32>
    %717 = arith.select %715, %325, %716 : vector<2x8xi1>, vector<2x8xf32>
    %cst_140 = arith.constant dense<0x7F800000> : vector<2xf32>
    %718 = vector.multi_reduction <minimumf>, %717, %cst_140 [1] : vector<2x8xf32> to vector<2xf32>
    %719 = vector.shape_cast %718 : vector<2xf32> to vector<2x1xf32>
    %720 = arith.fptosi %719 : vector<2x1xf32> to vector<2x1xi32>
    %721 = vector.broadcast %713 : vector<2x1xf32> to vector<2x8xf32>
    %722 = arith.subf %711, %721 : vector<2x8xf32>
    %723 = math.exp %722 : vector<2x8xf32>
    %cst_141 = arith.constant dense<0.000000e+00> : vector<2xf32>
    %724 = vector.multi_reduction <add>, %723, %cst_141 [1] : vector<2x8xf32> to vector<2xf32>
    %725 = vector.shape_cast %724 : vector<2xf32> to vector<2x1xf32>
    %726 = math.log %725 : vector<2x1xf32>
    %727 = arith.subf %659, %726 : vector<2x1xf32>
    %c5_i32_142 = arith.constant 5 : i32
    %728 = vector.broadcast %c5_i32_142 : i32 to vector<2x8xi32>
    %729 = arith.cmpi eq, %324, %728 : vector<2x8xi32>
    %730 = vector.shape_cast %720 : vector<2x1xi32> to vector<2x1xi32>
    %731 = vector.broadcast %730 : vector<2x1xi32> to vector<2x8xi32>
    %732 = arith.select %729, %731, %664 : vector<2x8xi1>, vector<2x8xi32>
    %733 = vector.broadcast %720 : vector<2x1xi32> to vector<2x8xi32>
    %734 = arith.cmpi eq, %324, %733 : vector<2x8xi32>
    %cst_143 = arith.constant -1.000000e+30 : f32
    %735 = vector.broadcast %cst_143 : f32 to vector<2x8xf32>
    %736 = arith.select %734, %735, %668 : vector<2x8xi1>, vector<2x8xf32>
    %737 = arith.extui %734 : vector<2x8xi1> to vector<2x8xi32>
    %738 = arith.sitofp %737 : vector<2x8xi32> to vector<2x8xf32>
    %739 = vector.shape_cast %738 : vector<2x8xf32> to vector<2x8x1xf32>
    %740 = vector.broadcast %739 : vector<2x8x1xf32> to vector<2x8x128xf32>
    %741 = arith.mulf %740, %15 : vector<2x8x128xf32>
    %cst_144 = arith.constant dense<0.000000e+00> : vector<2x128xf32>
    %742 = vector.multi_reduction <add>, %741, %cst_144 [1] : vector<2x8x128xf32> to vector<2x128xf32>
    %cst_145 = arith.constant dense<0.000000e+00> : vector<2x128xf32>
    %743 = tpu.matmul %701, %4, %cst_145 {dimension_numbers = #tpu.dot_dimension_numbers<[1], [0], [0], [1], [0, 0, 1, 1], [], []>} : vector<2x32xf32>, vector<32x128xf32>, vector<2x128xf32> -> vector<2x128xf32>
    %744 = arith.addf %742, %743 : vector<2x128xf32>
    %745 = vector.extract_strided_slice %744 {offsets = [0, 0], sizes = [2, 32], strides = [1, 1]} : vector<2x128xf32> to vector<2x32xf32>
    %746 = arith.negf %745 : vector<2x32xf32>
    %747 = math.exp %746 : vector<2x32xf32>
    %cst_146 = arith.constant 1.000000e+00 : f32
    %748 = vector.broadcast %cst_146 : f32 to vector<2x32xf32>
    %749 = arith.addf %748, %747 : vector<2x32xf32>
    %750 = arith.divf %748, %749 : vector<2x32xf32>
    %751 = vector.extract_strided_slice %744 {offsets = [0, 32], sizes = [2, 32], strides = [1, 1]} : vector<2x128xf32> to vector<2x32xf32>
    %752 = arith.negf %751 : vector<2x32xf32>
    %753 = math.exp %752 : vector<2x32xf32>
    %cst_147 = arith.constant 1.000000e+00 : f32
    %754 = vector.broadcast %cst_147 : f32 to vector<2x32xf32>
    %755 = arith.addf %754, %753 : vector<2x32xf32>
    %756 = arith.divf %754, %755 : vector<2x32xf32>
    %757 = vector.extract_strided_slice %744 {offsets = [0, 64], sizes = [2, 32], strides = [1, 1]} : vector<2x128xf32> to vector<2x32xf32>
    %758 = math.tanh %757 : vector<2x32xf32>
    %759 = vector.extract_strided_slice %744 {offsets = [0, 96], sizes = [2, 32], strides = [1, 1]} : vector<2x128xf32> to vector<2x32xf32>
    %760 = arith.negf %759 : vector<2x32xf32>
    %761 = math.exp %760 : vector<2x32xf32>
    %cst_148 = arith.constant 1.000000e+00 : f32
    %762 = vector.broadcast %cst_148 : f32 to vector<2x32xf32>
    %763 = arith.addf %762, %761 : vector<2x32xf32>
    %764 = arith.divf %762, %763 : vector<2x32xf32>
    %765 = arith.mulf %756, %699 : vector<2x32xf32>
    %766 = arith.mulf %750, %758 : vector<2x32xf32>
    %767 = arith.addf %765, %766 : vector<2x32xf32>
    %768 = math.tanh %767 : vector<2x32xf32>
    %769 = arith.mulf %764, %768 : vector<2x32xf32>
    %cst_149 = arith.constant dense<0.000000e+00> : vector<2x32xf32>
    %770 = tpu.matmul %769, %7, %cst_149 {dimension_numbers = #tpu.dot_dimension_numbers<[1], [0], [0], [1], [0, 0, 1, 1], [], []>} : vector<2x32xf32>, vector<32x32xf32>, vector<2x32xf32> -> vector<2x32xf32>
    %771 = vector.shape_cast %770 : vector<2x32xf32> to vector<2x1x32xf32>
    %772 = vector.broadcast %771 : vector<2x1x32xf32> to vector<2x8x32xf32>
    %773 = arith.addf %323, %772 : vector<2x8x32xf32>
    %774 = math.tanh %773 : vector<2x8x32xf32>
    %775 = vector.shape_cast %8 : vector<1x32xf32> to vector<1x1x32xf32>
    %776 = vector.broadcast %775 : vector<1x1x32xf32> to vector<2x8x32xf32>
    %777 = arith.mulf %774, %776 : vector<2x8x32xf32>
    %cst_150 = arith.constant dense<0.000000e+00> : vector<2x8xf32>
    %778 = vector.multi_reduction <add>, %777, %cst_150 [2] : vector<2x8x32xf32> to vector<2x8xf32>
    %779 = arith.addf %778, %736 : vector<2x8xf32>
    %cst_151 = arith.constant dense<0xFF800000> : vector<2xf32>
    %780 = vector.multi_reduction <maximumf>, %779, %cst_151 [1] : vector<2x8xf32> to vector<2xf32>
    %781 = vector.shape_cast %780 : vector<2xf32> to vector<2x1xf32>
    %782 = vector.broadcast %781 : vector<2x1xf32> to vector<2x8xf32>
    %783 = arith.cmpf oeq, %779, %782 : vector<2x8xf32>
    %cst_152 = arith.constant 8.000000e+00 : f32
    %784 = vector.broadcast %cst_152 : f32 to vector<2x8xf32>
    %785 = arith.select %783, %325, %784 : vector<2x8xi1>, vector<2x8xf32>
    %cst_153 = arith.constant dense<0x7F800000> : vector<2xf32>
    %786 = vector.multi_reduction <minimumf>, %785, %cst_153 [1] : vector<2x8xf32> to vector<2xf32>
    %787 = vector.shape_cast %786 : vector<2xf32> to vector<2x1xf32>
    %788 = arith.fptosi %787 : vector<2x1xf32> to vector<2x1xi32>
    %789 = vector.broadcast %781 : vector<2x1xf32> to vector<2x8xf32>
    %790 = arith.subf %779, %789 : vector<2x8xf32>
    %791 = math.exp %790 : vector<2x8xf32>
    %cst_154 = arith.constant dense<0.000000e+00> : vector<2xf32>
    %792 = vector.multi_reduction <add>, %791, %cst_154 [1] : vector<2x8xf32> to vector<2xf32>
    %793 = vector.shape_cast %792 : vector<2xf32> to vector<2x1xf32>
    %794 = math.log %793 : vector<2x1xf32>
    %795 = arith.subf %727, %794 : vector<2x1xf32>
    %c6_i32_155 = arith.constant 6 : i32
    %796 = vector.broadcast %c6_i32_155 : i32 to vector<2x8xi32>
    %797 = arith.cmpi eq, %324, %796 : vector<2x8xi32>
    %798 = vector.shape_cast %788 : vector<2x1xi32> to vector<2x1xi32>
    %799 = vector.broadcast %798 : vector<2x1xi32> to vector<2x8xi32>
    %800 = arith.select %797, %799, %732 : vector<2x8xi1>, vector<2x8xi32>
    %801 = vector.broadcast %788 : vector<2x1xi32> to vector<2x8xi32>
    %802 = arith.cmpi eq, %324, %801 : vector<2x8xi32>
    %cst_156 = arith.constant -1.000000e+30 : f32
    %803 = vector.broadcast %cst_156 : f32 to vector<2x8xf32>
    %804 = arith.select %802, %803, %736 : vector<2x8xi1>, vector<2x8xf32>
    %805 = arith.extui %802 : vector<2x8xi1> to vector<2x8xi32>
    %806 = arith.sitofp %805 : vector<2x8xi32> to vector<2x8xf32>
    %807 = vector.shape_cast %806 : vector<2x8xf32> to vector<2x8x1xf32>
    %808 = vector.broadcast %807 : vector<2x8x1xf32> to vector<2x8x128xf32>
    %809 = arith.mulf %808, %15 : vector<2x8x128xf32>
    %cst_157 = arith.constant dense<0.000000e+00> : vector<2x128xf32>
    %810 = vector.multi_reduction <add>, %809, %cst_157 [1] : vector<2x8x128xf32> to vector<2x128xf32>
    %cst_158 = arith.constant dense<0.000000e+00> : vector<2x128xf32>
    %811 = tpu.matmul %769, %4, %cst_158 {dimension_numbers = #tpu.dot_dimension_numbers<[1], [0], [0], [1], [0, 0, 1, 1], [], []>} : vector<2x32xf32>, vector<32x128xf32>, vector<2x128xf32> -> vector<2x128xf32>
    %812 = arith.addf %810, %811 : vector<2x128xf32>
    %813 = vector.extract_strided_slice %812 {offsets = [0, 0], sizes = [2, 32], strides = [1, 1]} : vector<2x128xf32> to vector<2x32xf32>
    %814 = arith.negf %813 : vector<2x32xf32>
    %815 = math.exp %814 : vector<2x32xf32>
    %cst_159 = arith.constant 1.000000e+00 : f32
    %816 = vector.broadcast %cst_159 : f32 to vector<2x32xf32>
    %817 = arith.addf %816, %815 : vector<2x32xf32>
    %818 = arith.divf %816, %817 : vector<2x32xf32>
    %819 = vector.extract_strided_slice %812 {offsets = [0, 32], sizes = [2, 32], strides = [1, 1]} : vector<2x128xf32> to vector<2x32xf32>
    %820 = arith.negf %819 : vector<2x32xf32>
    %821 = math.exp %820 : vector<2x32xf32>
    %cst_160 = arith.constant 1.000000e+00 : f32
    %822 = vector.broadcast %cst_160 : f32 to vector<2x32xf32>
    %823 = arith.addf %822, %821 : vector<2x32xf32>
    %824 = arith.divf %822, %823 : vector<2x32xf32>
    %825 = vector.extract_strided_slice %812 {offsets = [0, 64], sizes = [2, 32], strides = [1, 1]} : vector<2x128xf32> to vector<2x32xf32>
    %826 = math.tanh %825 : vector<2x32xf32>
    %827 = vector.extract_strided_slice %812 {offsets = [0, 96], sizes = [2, 32], strides = [1, 1]} : vector<2x128xf32> to vector<2x32xf32>
    %828 = arith.negf %827 : vector<2x32xf32>
    %829 = math.exp %828 : vector<2x32xf32>
    %cst_161 = arith.constant 1.000000e+00 : f32
    %830 = vector.broadcast %cst_161 : f32 to vector<2x32xf32>
    %831 = arith.addf %830, %829 : vector<2x32xf32>
    %832 = arith.divf %830, %831 : vector<2x32xf32>
    %833 = arith.mulf %824, %767 : vector<2x32xf32>
    %834 = arith.mulf %818, %826 : vector<2x32xf32>
    %835 = arith.addf %833, %834 : vector<2x32xf32>
    %836 = math.tanh %835 : vector<2x32xf32>
    %837 = arith.mulf %832, %836 : vector<2x32xf32>
    %cst_162 = arith.constant dense<0.000000e+00> : vector<2x32xf32>
    %838 = tpu.matmul %837, %7, %cst_162 {dimension_numbers = #tpu.dot_dimension_numbers<[1], [0], [0], [1], [0, 0, 1, 1], [], []>} : vector<2x32xf32>, vector<32x32xf32>, vector<2x32xf32> -> vector<2x32xf32>
    %839 = vector.shape_cast %838 : vector<2x32xf32> to vector<2x1x32xf32>
    %840 = vector.broadcast %839 : vector<2x1x32xf32> to vector<2x8x32xf32>
    %841 = arith.addf %323, %840 : vector<2x8x32xf32>
    %842 = math.tanh %841 : vector<2x8x32xf32>
    %843 = vector.shape_cast %8 : vector<1x32xf32> to vector<1x1x32xf32>
    %844 = vector.broadcast %843 : vector<1x1x32xf32> to vector<2x8x32xf32>
    %845 = arith.mulf %842, %844 : vector<2x8x32xf32>
    %cst_163 = arith.constant dense<0.000000e+00> : vector<2x8xf32>
    %846 = vector.multi_reduction <add>, %845, %cst_163 [2] : vector<2x8x32xf32> to vector<2x8xf32>
    %847 = arith.addf %846, %804 : vector<2x8xf32>
    %cst_164 = arith.constant dense<0xFF800000> : vector<2xf32>
    %848 = vector.multi_reduction <maximumf>, %847, %cst_164 [1] : vector<2x8xf32> to vector<2xf32>
    %849 = vector.shape_cast %848 : vector<2xf32> to vector<2x1xf32>
    %850 = vector.broadcast %849 : vector<2x1xf32> to vector<2x8xf32>
    %851 = arith.cmpf oeq, %847, %850 : vector<2x8xf32>
    %cst_165 = arith.constant 8.000000e+00 : f32
    %852 = vector.broadcast %cst_165 : f32 to vector<2x8xf32>
    %853 = arith.select %851, %325, %852 : vector<2x8xi1>, vector<2x8xf32>
    %cst_166 = arith.constant dense<0x7F800000> : vector<2xf32>
    %854 = vector.multi_reduction <minimumf>, %853, %cst_166 [1] : vector<2x8xf32> to vector<2xf32>
    %855 = vector.shape_cast %854 : vector<2xf32> to vector<2x1xf32>
    %856 = arith.fptosi %855 : vector<2x1xf32> to vector<2x1xi32>
    %857 = vector.broadcast %849 : vector<2x1xf32> to vector<2x8xf32>
    %858 = arith.subf %847, %857 : vector<2x8xf32>
    %859 = math.exp %858 : vector<2x8xf32>
    %cst_167 = arith.constant dense<0.000000e+00> : vector<2xf32>
    %860 = vector.multi_reduction <add>, %859, %cst_167 [1] : vector<2x8xf32> to vector<2xf32>
    %861 = vector.shape_cast %860 : vector<2xf32> to vector<2x1xf32>
    %862 = math.log %861 : vector<2x1xf32>
    %863 = arith.subf %795, %862 : vector<2x1xf32>
    %c7_i32_168 = arith.constant 7 : i32
    %864 = vector.broadcast %c7_i32_168 : i32 to vector<2x8xi32>
    %865 = arith.cmpi eq, %324, %864 : vector<2x8xi32>
    %866 = vector.shape_cast %856 : vector<2x1xi32> to vector<2x1xi32>
    %867 = vector.broadcast %866 : vector<2x1xi32> to vector<2x8xi32>
    %868 = arith.select %865, %867, %800 : vector<2x8xi1>, vector<2x8xi32>
    %c0_169 = arith.constant 0 : index
    %c0_170 = arith.constant 0 : index
    %869 = vector.load %arg10[%c0_169, %c0_170] : memref<2x8xi32, #tpu.memory_space<vmem>>, vector<2x8xi32>
    tpu.vector_store %arg10[%c0_169, %c0_170], %868 {strides = array<i32>} : memref<2x8xi32, #tpu.memory_space<vmem>>, vector<2x8xi32>,
    %c0_171 = arith.constant 0 : index
    %c0_172 = arith.constant 0 : index
    %870 = vector.load %arg11[%c0_171, %c0_172] : memref<2x1xf32, #tpu.memory_space<vmem>>, vector<2x1xf32>
    tpu.vector_store %arg11[%c0_171, %c0_172], %863 {strides = array<i32>} : memref<2x1xf32, #tpu.memory_space<vmem>>, vector<2x1xf32>,
    return
  }
}

</mosaic_0001>

<llo_original>
// kernel: pointer_network_forward.1
$region0: #{pointer_network_forward.1}
  #allocation0 [shape = 'u32[]', space=smem, size = 0x4, offset = 0x4, fixed_abs, tag = 'smem constant byte address 0x4 - core index']
  #allocation1 [shape = 'u32[144,128]{1,0:T(1,128)}', space=vmem, size = 0x12000, scoped, tag = 'internal scratch']
  %s0 = inlined_call_operand.vmem [shape: f32[2,8,4], index: 0, kind: input, shape index: {}]
  %s1 = inlined_call_operand.vmem [shape: f32[4,256], index: 1, kind: input, shape index: {}]
  %s2 = inlined_call_operand.vmem [shape: f32[1,256], index: 2, kind: input, shape index: {}]
  %s3 = inlined_call_operand.vmem [shape: f32[32,128], index: 3, kind: input, shape index: {}]
  %s4 = inlined_call_operand.hbm [shape: f32[32,128], index: 4, kind: input, shape index: {}]
  %s5 = inlined_call_operand.hbm [shape: f32[32,32], index: 5, kind: input, shape index: {}]
  %s6 = inlined_call_operand.hbm [shape: f32[1,32], index: 6, kind: input, shape index: {}]
  %s7 = inlined_call_operand.hbm [shape: f32[32,32], index: 7, kind: input, shape index: {}]
  %s8 = inlined_call_operand.hbm [shape: f32[1,32], index: 8, kind: input, shape index: {}]
  %s9 = inlined_call_operand.hbm [shape: f32[1,4], index: 9, kind: input, shape index: {}]
  %s10 = inlined_call_operand.hbm [shape: s32[2,8], index: 10, kind: output, shape index: {0}]
  %s11 = inlined_call_operand.vmem [shape: f32[2,1], index: 11, kind: output, shape index: {1}]
  %12 = xla_tuple %s10, %s11
  %s13 = sld [smem:[#allocation0]]
  $region82: #{pointer_network_forward.1} parent=0
    _
  %s15 = ssub.s32 1, %s13
  %s16 = scalar_select 0, %s15, %s13
  $region1: #{pointer_network_forward.1} parent=0
    #allocation2 [shape = 'u8[16384]{0}', space=vmem, size = 0x4000, scoped, tag = 'input window, operand 4, single buffered']
    #allocation3 [shape = 's32[1]{0}', space=sflag, size = 0x4, scoped, tag = 'scoped memory for pointer_network_forward.1']
    #allocation4 [shape = 's32[1]{0}', space=sflag, size = 0x4, scoped, tag = 'scoped memory for pointer_network_forward.1']
    #allocation5 [shape = 'u8[16384]{0}', space=vmem, size = 0x4000, scoped, tag = 'input window, operand 5, single buffered']
    #allocation6 [shape = 's32[1]{0}', space=sflag, size = 0x4, scoped, tag = 'scoped memory for pointer_network_forward.1']
    #allocation7 [shape = 'u8[512]{0}', space=vmem, size = 0x400, scoped, tag = 'input window, operand 6, single buffered']
    #allocation8 [shape = 'u8[16384]{0}', space=vmem, size = 0x4000, scoped, tag = 'input window, operand 7, single buffered']
    #allocation9 [shape = 's32[1]{0}', space=sflag, size = 0x4, scoped, tag = 'scoped memory for pointer_network_forward.1']
    #allocation10 [shape = 'u8[512]{0}', space=vmem, size = 0x400, scoped, tag = 'input window, operand 8, single buffered']
    #allocation11 [shape = 'u8[512]{0}', space=vmem, size = 0x400, scoped, tag = 'input window, operand 9, single buffered']
    #allocation12 [shape = 's32[1]{0}', space=sflag, size = 0x4, scoped, tag = 'scoped memory for pointer_network_forward.1']
    #allocation13 [shape = 'u8[1024]{0}', space=vmem, size = 0x400, scoped, tag = 'output window, operand 0, single buffered']
    %17 = vsyncpa [#allocation3], 0
    %18 = vsyncpa [#allocation6], 0
    %19 = vsyncpa [#allocation9], 0
    %20 = vsyncpa [#allocation12], 0
    %21 = vsyncpa [#allocation4], 0
    // Predicated region
    $region2: #{pointer_network_forward.1} parent=1 // pred_check
      _
    $region3: #{pointer_network_forward.1} parent=1 // pred_check_branch
      %23 = sbr.rel (0) target = $region5
    $region4: #{pointer_network_forward.1} parent=1 // pred_region
      _
    $region5: #{pointer_network_forward.1} parent=1 // pred_fallthru
      _
    // Predicated region
    $region6: #{pointer_network_forward.1} parent=1 // pred_check
      _
    $region7: #{pointer_network_forward.1} parent=1 // pred_check_branch
      %25 = sbr.rel (0) target = $region9
    $region8: #{pointer_network_forward.1} parent=1 // pred_region
      _
    $region9: #{pointer_network_forward.1} parent=1 // pred_fallthru
      _
    // Predicated region
    $region10: #{pointer_network_forward.1} parent=1 // pred_check
      _
    $region11: #{pointer_network_forward.1} parent=1 // pred_check_branch
      %27 = sbr.rel (0) target = $region13
    $region12: #{pointer_network_forward.1} parent=1 // pred_region
      _
    $region13: #{pointer_network_forward.1} parent=1 // pred_fallthru
      _
    // Predicated region
    $region14: #{pointer_network_forward.1} parent=1 // pred_check
      _
    $region15: #{pointer_network_forward.1} parent=1 // pred_check_branch
      %29 = sbr.rel (0) target = $region17
    $region16: #{pointer_network_forward.1} parent=1 // pred_region
      _
    $region17: #{pointer_network_forward.1} parent=1 // pred_fallthru
      _
    // Predicated region
    $region18: #{pointer_network_forward.1} parent=1 // pred_check
      _
    $region19: #{pointer_network_forward.1} parent=1 // pred_check_branch
      %31 = sbr.rel (0) target = $region21
    $region20: #{pointer_network_forward.1} parent=1 // pred_region
      %s33 = ssub.s32 512, 512
      %34 = vsyncadd [#allocation3], %s33
      %s35 = sshll.u32 [#allocation2], 4
      %s36 = int_to_ptr.vmem [resolvable:$true] %s35
      %41 = dma.hbm_to_vmem [thread:$0]  %s4, 512, %s36, [#allocation3], 128, 128, 8
    $region21: #{pointer_network_forward.1} parent=1 // pred_fallthru
      _
    // Predicated region
    $region22: #{pointer_network_forward.1} parent=1 // pred_check
      _
    $region23: #{pointer_network_forward.1} parent=1 // pred_check_branch
      %43 = sbr.rel (0) target = $region25
    $region24: #{pointer_network_forward.1} parent=1 // pred_region
      %s45 = ssub.s32 512, 512
      %46 = vsyncadd [#allocation6], %s45
      %s47 = sshll.u32 [#allocation5], 4
      %s48 = int_to_ptr.vmem [resolvable:$true] %s47
      %53 = dma.hbm_to_vmem [thread:$0]  %s5, 512, %s48, [#allocation6], 128, 128, 8
    $region25: #{pointer_network_forward.1} parent=1 // pred_fallthru
      _
    // Predicated region
    $region26: #{pointer_network_forward.1} parent=1 // pred_check
      _
    $region27: #{pointer_network_forward.1} parent=1 // pred_check_branch
      %55 = sbr.rel (0) target = $region29
    $region28: #{pointer_network_forward.1} parent=1 // pred_region
      %s57 = ssub.s32 16, 16
      %58 = vsyncadd [#allocation6], %s57
      %s60 = sshll.u32 [#allocation7], 4
      %s61 = int_to_ptr.vmem [resolvable:$true] %s60
      %63 = dma.hbm_to_vmem [thread:$0]  %s6, 16, %s61, [#allocation6]
    $region29: #{pointer_network_forward.1} parent=1 // pred_fallthru
      _
    // Predicated region
    $region30: #{pointer_network_forward.1} parent=1 // pred_check
      _
    $region31: #{pointer_network_forward.1} parent=1 // pred_check_branch
      %65 = sbr.rel (0) target = $region33
    $region32: #{pointer_network_forward.1} parent=1 // pred_region
      %s67 = ssub.s32 512, 512
      %68 = vsyncadd [#allocation9], %s67
      %s69 = sshll.u32 [#allocation8], 4
      %s70 = int_to_ptr.vmem [resolvable:$true] %s69
      %75 = dma.hbm_to_vmem [thread:$0]  %s7, 512, %s70, [#allocation9], 128, 128, 8
    $region33: #{pointer_network_forward.1} parent=1 // pred_fallthru
      _
    // Predicated region
    $region34: #{pointer_network_forward.1} parent=1 // pred_check
      _
    $region35: #{pointer_network_forward.1} parent=1 // pred_check_branch
      %77 = sbr.rel (0) target = $region37
    $region36: #{pointer_network_forward.1} parent=1 // pred_region
      %s79 = ssub.s32 16, 16
      %80 = vsyncadd [#allocation9], %s79
      %s82 = sshll.u32 [#allocation10], 4
      %s83 = int_to_ptr.vmem [resolvable:$true] %s82
      %85 = dma.hbm_to_vmem [thread:$0]  %s8, 16, %s83, [#allocation9]
    $region37: #{pointer_network_forward.1} parent=1 // pred_fallthru
      _
    // Predicated region
    $region38: #{pointer_network_forward.1} parent=1 // pred_check
      _
    $region39: #{pointer_network_forward.1} parent=1 // pred_check_branch
      %87 = sbr.rel (0) target = $region41
    $region40: #{pointer_network_forward.1} parent=1 // pred_region
      %s89 = ssub.s32 16, 16
      %90 = vsyncadd [#allocation12], %s89
      %s92 = sshll.u32 [#allocation11], 4
      %s93 = int_to_ptr.vmem [resolvable:$true] %s92
      %95 = dma.hbm_to_vmem [thread:$0]  %s9, 16, %s93, [#allocation12]
    $region41: #{pointer_network_forward.1} parent=1 // pred_fallthru
      _
    // Predicated region
    $region42: #{pointer_network_forward.1} parent=1 // pred_check
      _
    $region43: #{pointer_network_forward.1} parent=1 // pred_check_branch
      %97 = sbr.rel (0) target = $region45
    $region44: #{pointer_network_forward.1} parent=1 // pred_region
      %98 = dma.done [#allocation3], 512
    $region45: #{pointer_network_forward.1} parent=1 // pred_fallthru
      _
    // Predicated region
    $region46: #{pointer_network_forward.1} parent=1 // pred_check
      _
    $region47: #{pointer_network_forward.1} parent=1 // pred_check_branch
      %100 = sbr.rel (0) target = $region49
    $region48: #{pointer_network_forward.1} parent=1 // pred_region
      %101 = dma.done [#allocation6], 512
    $region49: #{pointer_network_forward.1} parent=1 // pred_fallthru
      _
    // Predicated region
    $region50: #{pointer_network_forward.1} parent=1 // pred_check
      _
    $region51: #{pointer_network_forward.1} parent=1 // pred_check_branch
      %103 = sbr.rel (0) target = $region53
    $region52: #{pointer_network_forward.1} parent=1 // pred_region
      %104 = dma.done [#allocation6], 16
    $region53: #{pointer_network_forward.1} parent=1 // pred_fallthru
      _
    // Predicated region
    $region54: #{pointer_network_forward.1} parent=1 // pred_check
      _
    $region55: #{pointer_network_forward.1} parent=1 // pred_check_branch
      %106 = sbr.rel (0) target = $region57
    $region56: #{pointer_network_forward.1} parent=1 // pred_region
      %107 = dma.done [#allocation9], 512
    $region57: #{pointer_network_forward.1} parent=1 // pred_fallthru
      _
    // Predicated region
    $region58: #{pointer_network_forward.1} parent=1 // pred_check
      _
    $region59: #{pointer_network_forward.1} parent=1 // pred_check_branch
      %109 = sbr.rel (0) target = $region61
    $region60: #{pointer_network_forward.1} parent=1 // pred_region
      %110 = dma.done [#allocation9], 16
    $region61: #{pointer_network_forward.1} parent=1 // pred_fallthru
      _
    // Predicated region
    $region62: #{pointer_network_forward.1} parent=1 // pred_check
      _
    $region63: #{pointer_network_forward.1} parent=1 // pred_check_branch
      %112 = sbr.rel (0) target = $region65
    $region64: #{pointer_network_forward.1} parent=1 // pred_region
      %113 = dma.done [#allocation12], 16
    $region65: #{pointer_network_forward.1} parent=1 // pred_fallthru
      _
    %v114 = vld [vmem:[%s0] sm:$0xff]
    %v115 = vld [vmem:[%s0 + $0x8] sm:$0xff]
    %v116 = vld [vmem:[%s1] sm:$0xff]
    %v117 = vld [vmem:[%s2] sm:$0x3]
    %v118 = vld [vmem:[%s3] sm:$0xff]
    %v119 = vld [vmem:[%s3 + $0x8] sm:$0xff]
    %v120 = vld [vmem:[%s3 + $0x10] sm:$0xff]
    %v121 = vld [vmem:[%s3 + $0x18] sm:$0xff]
    %v122 = vld [vmem:[#allocation2] sm:$0xff]
    %v123 = vld [vmem:[#allocation2 + $0x8] sm:$0xff]
    %v124 = vld [vmem:[#allocation2 + $0x10] sm:$0xff]
    %v125 = vld [vmem:[#allocation2 + $0x18] sm:$0xff]
    %v126 = vld [vmem:[#allocation5] sm:$0xff]
    %v127 = vld [vmem:[#allocation5 + $0x8] sm:$0xff]
    %v128 = vld [vmem:[#allocation5 + $0x10] sm:$0xff]
    %v129 = vld [vmem:[#allocation5 + $0x18] sm:$0xff]
    %v130 = vld [vmem:[#allocation7] sm:$0x1]
    %v131 = vld [vmem:[#allocation8] sm:$0xff]
    %v132 = vld [vmem:[#allocation8 + $0x8] sm:$0xff]
    %v133 = vld [vmem:[#allocation8 + $0x10] sm:$0xff]
    %v134 = vld [vmem:[#allocation8 + $0x18] sm:$0xff]
    %v135 = vld [vmem:[#allocation10] sm:$0x1]
    %v137 = vlaneseq
    %v138 = vshrl.u32 %v137, 7
    %v139 = vsub.s32 0, %v138
    %v140 = vrot.slane %v117, %v139
    %v141 = vlaneseq
    %v142 = vshrl.u32 %v141, 7
    %v143 = vsub.s32 1, %v142
    %v144 = vrot.slane %v117, %v143
    %v148 = vcombine.high %v116, %v116
    %vm149 = vcmask 31744
    %v151 = vsel %vm149, %v114, 0
    %v154 = vsel %vm149, %v115, 0
    %vm156 = vcmask 1043456
    %v157 = vsel %vm156, %v116, 0
    %v159 = vsel %vm156, %v148, 0
    %161 = vmatprep.subr.mxu0 %v159
    %162 = vmatpush1.msra.mxu0 %v157
    %163 = vmatprep.subr.mxu0 0.0
    %164 = vmatpush1.msra.mxu0 0.0
    %165 = vmatprep.subr.mxu0 0.0
    %166 = vmatpush1.msra.mxu0 0.0
    %167 = vmatprep.subr.mxu0 0.0
    %168 = vmatpush1.msra.mxu0 0.0
    %169 = vmatprep.subr.mxu0 0.0
    %170 = vmatpush1.msra.mxu0 0.0
    %171 = vmatprep.subr.mxu0 0.0
    %172 = vmatpush1.msra.mxu0 0.0
    %173 = vmatprep.subr.mxu0 0.0
    %174 = vmatpush1.msra.mxu0 0.0
    %175 = vmatprep.subr.mxu0 0.0
    %176 = vmatpush1.msra.mxu0 0.0
    %177 = vmatprep.subr.mxu0 0.0
    %178 = vmatpush1.msra.mxu0 0.0
    %179 = vmatprep.subr.mxu0 0.0
    %180 = vmatpush1.msra.mxu0 0.0
    %181 = vmatprep.subr.mxu0 0.0
    %182 = vmatpush1.msra.mxu0 0.0
    %183 = vmatprep.subr.mxu0 0.0
    %184 = vmatpush1.msra.mxu0 0.0
    %185 = vmatprep.subr.mxu0 0.0
    %186 = vmatpush1.msra.mxu0 0.0
    %187 = vmatprep.subr.mxu0 0.0
    %188 = vmatpush1.msra.mxu0 0.0
    %189 = vmatprep.subr.mxu0 0.0
    %190 = vmatpush1.msra.mxu0 0.0
    %191 = vmatprep.subr.mxu0 0.0
    %192 = vmatpush1.msra.mxu0 0.0
    %193 = vmatprep.subr.mxu0 0.0
    %194 = vmatpush1.msra.mxu0 0.0
    %195 = vmatprep.subr.mxu0 0.0
    %196 = vmatpush1.msra.mxu0 0.0
    %197 = vmatprep.subr.mxu0 0.0
    %198 = vmatpush1.msra.mxu0 0.0
    %199 = vmatprep.subr.mxu0 0.0
    %200 = vmatpush1.msra.mxu0 0.0
    %201 = vmatprep.subr.mxu0 0.0
    %202 = vmatpush1.msra.mxu0 0.0
    %203 = vmatprep.subr.mxu0 0.0
    %204 = vmatpush1.msra.mxu0 0.0
    %205 = vmatprep.subr.mxu0 0.0
    %206 = vmatpush1.msra.mxu0 0.0
    %207 = vmatprep.subr.mxu0 0.0
    %208 = vmatpush1.msra.mxu0 0.0
    %209 = vmatprep.subr.mxu0 0.0
    %210 = vmatpush1.msra.mxu0 0.0
    %211 = vmatprep.subr.mxu0 0.0
    %212 = vmatpush1.msra.mxu0 0.0
    %213 = vmatprep.subr.mxu0 0.0
    %214 = vmatpush1.msra.mxu0 0.0
    %215 = vmatprep.subr.mxu0 0.0
    %216 = vmatpush1.msra.mxu0 0.0
    %217 = vmatprep.subr.mxu0 0.0
    %218 = vmatpush1.msra.mxu0 0.0
    %219 = vmatprep.subr.mxu0 0.0
    %220 = vmatpush1.msra.mxu0 0.0
    %221 = vmatprep.subr.mxu0 0.0
    %222 = vmatpush1.msra.mxu0 0.0
    %223 = vmatprep.subr.mxu0 0.0
    %224 = vmatpush1.msra.mxu0 0.0
    %225 = vmatprep.mubr.f32.mxu0 0.0
    %226 = vmatmul.mubr.f32.gmra.mrb[0].mxu0 %v151
    %v227 = vpop.f32.mrb[0].mxu0
    %v228 = vadd.f32 %v140, %v227
    %v229 = vpop.f32.mrb[0].mxu0
    %v230 = vadd.f32 %v144, %v229
    %231 = vmatprep.mubr.f32.mxu0 0.0
    %232 = vmatmul.mubr.f32.gmra.mrb[0].mxu0 %v154
    %v233 = vpop.f32.mrb[0].mxu0
    %v234 = vadd.f32 %v140, %v233
    %v235 = vpop.f32.mrb[0].mxu0
    %v236 = vadd.f32 %v144, %v235
    %237 = vdwg.mxu0
    %v238 = vlaneseq
    %v239 = vshrl.u32 %v238, 7
    %vm240 = vcmask 261120
    %v242 = vsel %vm240, 0.0, 0
    %244 = vmatprep.subr.mxu0 0.0
    %245 = vmatpush1.msra.mxu0 %v118
    %246 = vmatprep.subr.mxu0 0.0
    %247 = vmatpush1.msra.mxu0 %v119
    %248 = vmatprep.subr.mxu0 0.0
    %249 = vmatpush1.msra.mxu0 %v120
    %250 = vmatprep.subr.mxu0 0.0
    %251 = vmatpush1.msra.mxu0 %v121
    %252 = vmatprep.subr.mxu0 0.0
    %253 = vmatpush1.msra.mxu0 0.0
    %254 = vmatprep.subr.mxu0 0.0
    %255 = vmatpush1.msra.mxu0 0.0
    %256 = vmatprep.subr.mxu0 0.0
    %257 = vmatpush1.msra.mxu0 0.0
    %258 = vmatprep.subr.mxu0 0.0
    %259 = vmatpush1.msra.mxu0 0.0
    %260 = vmatprep.subr.mxu0 0.0
    %261 = vmatpush1.msra.mxu0 0.0
    %262 = vmatprep.subr.mxu0 0.0
    %263 = vmatpush1.msra.mxu0 0.0
    %264 = vmatprep.subr.mxu0 0.0
    %265 = vmatpush1.msra.mxu0 0.0
    %266 = vmatprep.subr.mxu0 0.0
    %267 = vmatpush1.msra.mxu0 0.0
    %268 = vmatprep.subr.mxu0 0.0
    %269 = vmatpush1.msra.mxu0 0.0
    %270 = vmatprep.subr.mxu0 0.0
    %271 = vmatpush1.msra.mxu0 0.0
    %272 = vmatprep.subr.mxu0 0.0
    %273 = vmatpush1.msra.mxu0 0.0
    %274 = vmatprep.subr.mxu0 0.0
    %275 = vmatpush1.msra.mxu0 0.0
    %276 = vmatprep.subr.mxu0 0.0
    %277 = vmatpush1.msra.mxu0 0.0
    %278 = vmatprep.subr.mxu0 0.0
    %279 = vmatpush1.msra.mxu0 0.0
    %280 = vmatprep.subr.mxu0 0.0
    %281 = vmatpush1.msra.mxu0 0.0
    %282 = vmatprep.subr.mxu0 0.0
    %283 = vmatpush1.msra.mxu0 0.0
    %284 = vmatprep.subr.mxu0 0.0
    %285 = vmatpush1.msra.mxu0 0.0
    %286 = vmatprep.subr.mxu0 0.0
    %287 = vmatpush1.msra.mxu0 0.0
    %288 = vmatprep.subr.mxu0 0.0
    %289 = vmatpush1.msra.mxu0 0.0
    %290 = vmatprep.subr.mxu0 0.0
    %291 = vmatpush1.msra.mxu0 0.0
    %292 = vmatprep.subr.mxu0 0.0
    %293 = vmatpush1.msra.mxu0 0.0
    %294 = vmatprep.subr.mxu0 0.0
    %295 = vmatpush1.msra.mxu0 0.0
    %296 = vmatprep.subr.mxu0 0.0
    %297 = vmatpush1.msra.mxu0 0.0
    %298 = vmatprep.subr.mxu0 0.0
    %299 = vmatpush1.msra.mxu0 0.0
    %300 = vmatprep.subr.mxu0 0.0
    %301 = vmatpush1.msra.mxu0 0.0
    %302 = vmatprep.subr.mxu0 0.0
    %303 = vmatpush1.msra.mxu0 0.0
    %304 = vmatprep.subr.mxu0 0.0
    %305 = vmatpush1.msra.mxu0 0.0
    %306 = vmatprep.subr.mxu0 0.0
    %307 = vmatpush1.msra.mxu0 0.0
    %308 = vmatprep.mubr.f32.mxu0 0.0
    %309 = vmatmul.mubr.f32.gmra.mrb[0].mxu0 %v242
    %v310 = vpop.f32.mrb[0].mxu0
    %v311 = vadd.f32 0.0, %v310
    %v312 = vpop.f32.mrb[0].mxu0
    %313 = vdwg.mxu0
    %v315 = vrot.slane %v311, 1
    %v318 = vadd.f32 %v228, %v311
    %v319 = vadd.f32 %v234, %v315
    %v320 = vxor.u32 %v318, 2147483648
    %v321 = vxor.u32 %v319, 2147483648
    %v322 = vmul.f32 %v320, 1.442695
    %v323 = vpow.pop %v322
    %v324 = vmul.f32 %v321, 1.442695
    %v325 = vpow.pop %v324
    %v326 = vadd.f32 %v323, 1.0
    %v327 = vadd.f32 %v325, 1.0
    %v328 = vrcp.pop %v326
    %v329 = vmul.f32 1.0, %v328
    %v330 = vrcp.pop %v327
    %v331 = vmul.f32 1.0, %v330
    %v332 = vtanh.pop %v318
    %v333 = vtanh.pop %v319
    %v334 = vmul.f32 %v329, 0.0
    %v335 = vmul.f32 %v331, 0.0
    %338 = vrot.lane.b32.xlu0 %v332, 64
    %v339 = vpop.permute.xlu0 %338
    %340 = vrot.lane.b32.xlu0 %v333, 64
    %v341 = vpop.permute.xlu0 %340
    %v344 = vmul.f32 %v329, %v339
    %v345 = vmul.f32 %v331, %v341
    %348 = vrot.lane.b32.xlu0 %v344, 32
    %v349 = vpop.permute.xlu0 %348
    %350 = vrot.lane.b32.xlu0 %v345, 32
    %v351 = vpop.permute.xlu0 %350
    %v354 = vadd.f32 %v334, %v349
    %v355 = vadd.f32 %v335, %v351
    %v356 = vtanh.pop %v354
    %v357 = vtanh.pop %v355
    %360 = vrot.lane.b32.xlu0 %v356, 64
    %v361 = vpop.permute.xlu0 %360
    %362 = vrot.lane.b32.xlu0 %v357, 64
    %v363 = vpop.permute.xlu0 %362
    %v366 = vmul.f32 %v329, %v361
    %v367 = vmul.f32 %v331, %v363
    %v369 = vlaneseq
    %v370 = vshrl.u32 %v369, 7
    %v371 = vsub.s32 0, %v370
    %v372 = vrot.slane %v130, %v371
    %v376 = vrot.slane %v367, 7
    %vm377 = vcmask 1041409
    %v378 = vsel %vm377, %v376, %v366
    %379 = vrot.lane.b32.xlu0 %v378, 32
    %v380 = vpop.permute.xlu0 %379
    %v381 = vsel %vm240, %v380, 0
    %383 = vmatprep.subr.mxu0 0.0
    %384 = vmatpush1.msra.mxu0 %v126
    %385 = vmatprep.subr.mxu0 0.0
    %386 = vmatpush1.msra.mxu0 %v127
    %387 = vmatprep.subr.mxu0 0.0
    %388 = vmatpush1.msra.mxu0 %v128
    %389 = vmatprep.subr.mxu0 0.0
    %390 = vmatpush1.msra.mxu0 %v129
    %391 = vmatprep.subr.mxu0 0.0
    %392 = vmatpush1.msra.mxu0 0.0
    %393 = vmatprep.subr.mxu0 0.0
    %394 = vmatpush1.msra.mxu0 0.0
    %395 = vmatprep.subr.mxu0 0.0
    %396 = vmatpush1.msra.mxu0 0.0
    %397 = vmatprep.subr.mxu0 0.0
    %398 = vmatpush1.msra.mxu0 0.0
    %399 = vmatprep.subr.mxu0 0.0
    %400 = vmatpush1.msra.mxu0 0.0
    %401 = vmatprep.subr.mxu0 0.0
    %402 = vmatpush1.msra.mxu0 0.0
    %403 = vmatprep.subr.mxu0 0.0
    %404 = vmatpush1.msra.mxu0 0.0
    %405 = vmatprep.subr.mxu0 0.0
    %406 = vmatpush1.msra.mxu0 0.0
    %407 = vmatprep.subr.mxu0 0.0
    %408 = vmatpush1.msra.mxu0 0.0
    %409 = vmatprep.subr.mxu0 0.0
    %410 = vmatpush1.msra.mxu0 0.0
    %411 = vmatprep.subr.mxu0 0.0
    %412 = vmatpush1.msra.mxu0 0.0
    %413 = vmatprep.subr.mxu0 0.0
    %414 = vmatpush1.msra.mxu0 0.0
    %415 = vmatprep.subr.mxu0 0.0
    %416 = vmatpush1.msra.mxu0 0.0
    %417 = vmatprep.subr.mxu0 0.0
    %418 = vmatpush1.msra.mxu0 0.0
    %419 = vmatprep.subr.mxu0 0.0
    %420 = vmatpush1.msra.mxu0 0.0
    %421 = vmatprep.subr.mxu0 0.0
    %422 = vmatpush1.msra.mxu0 0.0
    %423 = vmatprep.subr.mxu0 0.0
    %424 = vmatpush1.msra.mxu0 0.0
    %425 = vmatprep.subr.mxu0 0.0
    %426 = vmatpush1.msra.mxu0 0.0
    %427 = vmatprep.subr.mxu0 0.0
    %428 = vmatpush1.msra.mxu0 0.0
    %429 = vmatprep.subr.mxu0 0.0
    %430 = vmatpush1.msra.mxu0 0.0
    %431 = vmatprep.subr.mxu0 0.0
    %432 = vmatpush1.msra.mxu0 0.0
    %433 = vmatprep.subr.mxu0 0.0
    %434 = vmatpush1.msra.mxu0 0.0
    %435 = vmatprep.subr.mxu0 0.0
    %436 = vmatpush1.msra.mxu0 0.0
    %437 = vmatprep.subr.mxu0 0.0
    %438 = vmatpush1.msra.mxu0 0.0
    %439 = vmatprep.subr.mxu0 0.0
    %440 = vmatpush1.msra.mxu0 0.0
    %441 = vmatprep.subr.mxu0 0.0
    %442 = vmatpush1.msra.mxu0 0.0
    %443 = vmatprep.subr.mxu0 0.0
    %444 = vmatpush1.msra.mxu0 0.0
    %445 = vmatprep.subr.mxu0 0.0
    %446 = vmatpush1.msra.mxu0 0.0
    %447 = vmatprep.mubr.f32.mxu0 0.0
    %448 = vmatmul.mubr.f32.gmra.mrb[0].mxu0 %v381
    %v449 = vpop.f32.mrb[0].mxu0
    %v450 = vadd.f32 %v372, %v449
    %v451 = vpop.f32.mrb[0].mxu0
    %452 = vdwg.mxu0
    %vm453 = vcmp.eq.s32.totalorder %v239, 0
    %v456 = vunpack.c.l.s4 1966171168
    %v457 = vunpack.c.0.s8 %v456
    %v458 = vlaneseq
    %v459 = vshrl.u32 %v458, 7
    %v460 = vsub.s32 %v457, %v459
    %v461 = vrot.slane %v450, %v460
    %v462 = vcombine.high %v461, %v461
    %v464 = vunpack.c.l.s4 1966171168
    %v465 = vunpack.c.0.s8 %v464
    %v466 = vlaneseq
    %v467 = vshrl.u32 %v466, 7
    %v468 = vsub.s32 %v465, %v467
    %v469 = vrot.slane %v461, %v468
    %v471 = vunpack.c.l.s4 1966171168
    %v472 = vunpack.c.0.s8 %v471
    %v473 = vlaneseq
    %v474 = vshrl.u32 %v473, 7
    %v475 = vsub.s32 %v472, %v474
    %v476 = vrot.slane %v462, %v475
    %v477 = vlaneseq
    %v478 = vshrl.u32 %v477, 7
    %v479 = vsub.s32 0, %v478
    %v480 = vrot.slane %v469, %v479
    %v481 = vlaneseq
    %v482 = vshrl.u32 %v481, 7
    %v483 = vsub.s32 0, %v482
    %v484 = vrot.slane %v476, %v483
    %v487 = vsel %vm453, %v480, 0.0
    %v488 = vsel %vm453, %v484, 0.0
    %489 = vmatprep.subr.mxu0 0.0
    %490 = vmatpush1.msra.mxu0 %v118
    %491 = vmatprep.subr.mxu0 0.0
    %492 = vmatpush1.msra.mxu0 %v119
    %493 = vmatprep.subr.mxu0 0.0
    %494 = vmatpush1.msra.mxu0 %v120
    %495 = vmatprep.subr.mxu0 0.0
    %496 = vmatpush1.msra.mxu0 %v121
    %497 = vmatprep.subr.mxu0 0.0
    %498 = vmatpush1.msra.mxu0 0.0
    %499 = vmatprep.subr.mxu0 0.0
    %500 = vmatpush1.msra.mxu0 0.0
    %501 = vmatprep.subr.mxu0 0.0
    %502 = vmatpush1.msra.mxu0 0.0
    %503 = vmatprep.subr.mxu0 0.0
    %504 = vmatpush1.msra.mxu0 0.0
    %505 = vmatprep.subr.mxu0 0.0
    %506 = vmatpush1.msra.mxu0 0.0
    %507 = vmatprep.subr.mxu0 0.0
    %508 = vmatpush1.msra.mxu0 0.0
    %509 = vmatprep.subr.mxu0 0.0
    %510 = vmatpush1.msra.mxu0 0.0
    %511 = vmatprep.subr.mxu0 0.0
    %512 = vmatpush1.msra.mxu0 0.0
    %513 = vmatprep.subr.mxu0 0.0
    %514 = vmatpush1.msra.mxu0 0.0
    %515 = vmatprep.subr.mxu0 0.0
    %516 = vmatpush1.msra.mxu0 0.0
    %517 = vmatprep.subr.mxu0 0.0
    %518 = vmatpush1.msra.mxu0 0.0
    %519 = vmatprep.subr.mxu0 0.0
    %520 = vmatpush1.msra.mxu0 0.0
    %521 = vmatprep.subr.mxu0 0.0
    %522 = vmatpush1.msra.mxu0 0.0
    %523 = vmatprep.subr.mxu0 0.0
    %524 = vmatpush1.msra.mxu0 0.0
    %525 = vmatprep.subr.mxu0 0.0
    %526 = vmatpush1.msra.mxu0 0.0
    %527 = vmatprep.subr.mxu0 0.0
    %528 = vmatpush1.msra.mxu0 0.0
    %529 = vmatprep.subr.mxu0 0.0
    %530 = vmatpush1.msra.mxu0 0.0
    %531 = vmatprep.subr.mxu0 0.0
    %532 = vmatpush1.msra.mxu0 0.0
    %533 = vmatprep.subr.mxu0 0.0
    %534 = vmatpush1.msra.mxu0 0.0
    %535 = vmatprep.subr.mxu0 0.0
    %536 = vmatpush1.msra.mxu0 0.0
    %537 = vmatprep.subr.mxu0 0.0
    %538 = vmatpush1.msra.mxu0 0.0
    %539 = vmatprep.subr.mxu0 0.0
    %540 = vmatpush1.msra.mxu0 0.0
    %541 = vmatprep.subr.mxu0 0.0
    %542 = vmatpush1.msra.mxu0 0.0
    %543 = vmatprep.subr.mxu0 0.0
    %544 = vmatpush1.msra.mxu0 0.0
    %545 = vmatprep.subr.mxu0 0.0
    %546 = vmatpush1.msra.mxu0 0.0
    %547 = vmatprep.subr.mxu0 0.0
    %548 = vmatpush1.msra.mxu0 0.0
    %549 = vmatprep.subr.mxu0 0.0
    %550 = vmatpush1.msra.mxu0 0.0
    %551 = vmatprep.subr.mxu0 0.0
    %552 = vmatpush1.msra.mxu0 0.0
    %553 = vmatprep.mubr.f32.mxu0 0.0
    %554 = vmatmul.mubr.f32.gmra.mrb[0].mxu0 %v381
    %v555 = vpop.f32.mrb[0].mxu0
    %v556 = vadd.f32 0.0, %v555
    %v557 = vpop.f32.mrb[0].mxu0
    %558 = vdwg.mxu0
    %v560 = vrot.slane %v556, 7
    %v563 = vadd.f32 %v228, %v560
    %v564 = vadd.f32 %v234, %v556
    %v565 = vxor.u32 %v563, 2147483648
    %v566 = vxor.u32 %v564, 2147483648
    %v567 = vmul.f32 %v565, 1.442695
    %v568 = vpow.pop %v567
    %v569 = vmul.f32 %v566, 1.442695
    %v570 = vpow.pop %v569
    %v571 = vadd.f32 %v568, 1.0
    %v572 = vadd.f32 %v570, 1.0
    %v573 = vrcp.pop %v571
    %v574 = vmul.f32 1.0, %v573
    %v575 = vrcp.pop %v572
    %v576 = vmul.f32 1.0, %v575
    %v577 = vtanh.pop %v563
    %v578 = vtanh.pop %v564
    %v581 = vrot.slane %v354, 7
    %v582 = vrot.slane %v355, 7
    %v585 = vmul.f32 %v574, %v581
    %v586 = vmul.f32 %v576, %v582
    %589 = vrot.lane.b32.xlu0 %v577, 64
    %v590 = vpop.permute.xlu0 %589
    %591 = vrot.lane.b32.xlu0 %v578, 64
    %v592 = vpop.permute.xlu0 %591
    %v595 = vmul.f32 %v574, %v590
    %v596 = vmul.f32 %v576, %v592
    %599 = vrot.lane.b32.xlu0 %v595, 32
    %v600 = vpop.permute.xlu0 %599
    %601 = vrot.lane.b32.xlu0 %v596, 32
    %v602 = vpop.permute.xlu0 %601
    %v605 = vadd.f32 %v585, %v600
    %v606 = vadd.f32 %v586, %v602
    %v607 = vtanh.pop %v605
    %v608 = vtanh.pop %v606
    %611 = vrot.lane.b32.xlu0 %v607, 64
    %v612 = vpop.permute.xlu0 %611
    %613 = vrot.lane.b32.xlu0 %v608, 64
    %v614 = vpop.permute.xlu0 %613
    %v617 = vmul.f32 %v574, %v612
    %v618 = vmul.f32 %v576, %v614
    %v621 = vrot.slane %v617, 1
    %v622 = vsel %vm377, %v618, %v621
    %623 = vrot.lane.b32.xlu0 %v622, 32
    %v624 = vpop.permute.xlu0 %623
    %v625 = vsel %vm240, %v624, 0
    %627 = vmatprep.subr.mxu0 0.0
    %628 = vmatpush1.msra.mxu0 %v126
    %629 = vmatprep.subr.mxu0 0.0
    %630 = vmatpush1.msra.mxu0 %v127
    %631 = vmatprep.subr.mxu0 0.0
    %632 = vmatpush1.msra.mxu0 %v128
    %633 = vmatprep.subr.mxu0 0.0
    %634 = vmatpush1.msra.mxu0 %v129
    %635 = vmatprep.subr.mxu0 0.0
    %636 = vmatpush1.msra.mxu0 0.0
    %637 = vmatprep.subr.mxu0 0.0
    %638 = vmatpush1.msra.mxu0 0.0
    %639 = vmatprep.subr.mxu0 0.0
    %640 = vmatpush1.msra.mxu0 0.0
    %641 = vmatprep.subr.mxu0 0.0
    %642 = vmatpush1.msra.mxu0 0.0
    %643 = vmatprep.subr.mxu0 0.0
    %644 = vmatpush1.msra.mxu0 0.0
    %645 = vmatprep.subr.mxu0 0.0
    %646 = vmatpush1.msra.mxu0 0.0
    %647 = vmatprep.subr.mxu0 0.0
    %648 = vmatpush1.msra.mxu0 0.0
    %649 = vmatprep.subr.mxu0 0.0
    %650 = vmatpush1.msra.mxu0 0.0
    %651 = vmatprep.subr.mxu0 0.0
    %652 = vmatpush1.msra.mxu0 0.0
    %653 = vmatprep.subr.mxu0 0.0
    %654 = vmatpush1.msra.mxu0 0.0
    %655 = vmatprep.subr.mxu0 0.0
    %656 = vmatpush1.msra.mxu0 0.0
    %657 = vmatprep.subr.mxu0 0.0
    %658 = vmatpush1.msra.mxu0 0.0
    %659 = vmatprep.subr.mxu0 0.0
    %660 = vmatpush1.msra.mxu0 0.0
    %661 = vmatprep.subr.mxu0 0.0
    %662 = vmatpush1.msra.mxu0 0.0
    %663 = vmatprep.subr.mxu0 0.0
    %664 = vmatpush1.msra.mxu0 0.0
    %665 = vmatprep.subr.mxu0 0.0
    %666 = vmatpush1.msra.mxu0 0.0
    %667 = vmatprep.subr.mxu0 0.0
    %668 = vmatpush1.msra.mxu0 0.0
    %669 = vmatprep.subr.mxu0 0.0
    %670 = vmatpush1.msra.mxu0 0.0
    %671 = vmatprep.subr.mxu0 0.0
    %672 = vmatpush1.msra.mxu0 0.0
    %673 = vmatprep.subr.mxu0 0.0
    %674 = vmatpush1.msra.mxu0 0.0
    %675 = vmatprep.subr.mxu0 0.0
    %676 = vmatpush1.msra.mxu0 0.0
    %677 = vmatprep.subr.mxu0 0.0
    %678 = vmatpush1.msra.mxu0 0.0
    %679 = vmatprep.subr.mxu0 0.0
    %680 = vmatpush1.msra.mxu0 0.0
    %681 = vmatprep.subr.mxu0 0.0
    %682 = vmatpush1.msra.mxu0 0.0
    %683 = vmatprep.subr.mxu0 0.0
    %684 = vmatpush1.msra.mxu0 0.0
    %685 = vmatprep.subr.mxu0 0.0
    %686 = vmatpush1.msra.mxu0 0.0
    %687 = vmatprep.subr.mxu0 0.0
    %688 = vmatpush1.msra.mxu0 0.0
    %689 = vmatprep.subr.mxu0 0.0
    %690 = vmatpush1.msra.mxu0 0.0
    %691 = vmatprep.mubr.f32.mxu0 0.0
    %692 = vmatmul.mubr.f32.gmra.mrb[0].mxu0 %v625
    %v693 = vpop.f32.mrb[0].mxu0
    %v694 = vadd.f32 %v372, %v693
    %v695 = vpop.f32.mrb[0].mxu0
    %696 = vdwg.mxu0
    %vm697 = vcmp.eq.s32.totalorder %v239, 1
    %v700 = vunpack.c.l.s4 1966171168
    %v701 = vunpack.c.0.s8 %v700
    %v702 = vlaneseq
    %v703 = vshrl.u32 %v702, 7
    %v704 = vsub.s32 %v701, %v703
    %v705 = vrot.slane %v694, %v704
    %v706 = vcombine.high %v705, %v705
    %v708 = vunpack.c.l.s4 1966171168
    %v709 = vunpack.c.0.s8 %v708
    %v710 = vlaneseq
    %v711 = vshrl.u32 %v710, 7
    %v712 = vsub.s32 %v709, %v711
    %v713 = vrot.slane %v705, %v712
    %v715 = vunpack.c.l.s4 1966171168
    %v716 = vunpack.c.0.s8 %v715
    %v717 = vlaneseq
    %v718 = vshrl.u32 %v717, 7
    %v719 = vsub.s32 %v716, %v718
    %v720 = vrot.slane %v706, %v719
    %v721 = vlaneseq
    %v722 = vshrl.u32 %v721, 7
    %v723 = vsub.s32 0, %v722
    %v724 = vrot.slane %v713, %v723
    %v725 = vlaneseq
    %v726 = vshrl.u32 %v725, 7
    %v727 = vsub.s32 0, %v726
    %v728 = vrot.slane %v720, %v727
    %v731 = vsel %vm697, %v724, %v487
    %v732 = vsel %vm697, %v728, %v488
    %733 = vmatprep.subr.mxu0 0.0
    %734 = vmatpush1.msra.mxu0 %v118
    %735 = vmatprep.subr.mxu0 0.0
    %736 = vmatpush1.msra.mxu0 %v119
    %737 = vmatprep.subr.mxu0 0.0
    %738 = vmatpush1.msra.mxu0 %v120
    %739 = vmatprep.subr.mxu0 0.0
    %740 = vmatpush1.msra.mxu0 %v121
    %741 = vmatprep.subr.mxu0 0.0
    %742 = vmatpush1.msra.mxu0 0.0
    %743 = vmatprep.subr.mxu0 0.0
    %744 = vmatpush1.msra.mxu0 0.0
    %745 = vmatprep.subr.mxu0 0.0
    %746 = vmatpush1.msra.mxu0 0.0
    %747 = vmatprep.subr.mxu0 0.0
    %748 = vmatpush1.msra.mxu0 0.0
    %749 = vmatprep.subr.mxu0 0.0
    %750 = vmatpush1.msra.mxu0 0.0
    %751 = vmatprep.subr.mxu0 0.0
    %752 = vmatpush1.msra.mxu0 0.0
    %753 = vmatprep.subr.mxu0 0.0
    %754 = vmatpush1.msra.mxu0 0.0
    %755 = vmatprep.subr.mxu0 0.0
    %756 = vmatpush1.msra.mxu0 0.0
    %757 = vmatprep.subr.mxu0 0.0
    %758 = vmatpush1.msra.mxu0 0.0
    %759 = vmatprep.subr.mxu0 0.0
    %760 = vmatpush1.msra.mxu0 0.0
    %761 = vmatprep.subr.mxu0 0.0
    %762 = vmatpush1.msra.mxu0 0.0
    %763 = vmatprep.subr.mxu0 0.0
    %764 = vmatpush1.msra.mxu0 0.0
    %765 = vmatprep.subr.mxu0 0.0
    %766 = vmatpush1.msra.mxu0 0.0
    %767 = vmatprep.subr.mxu0 0.0
    %768 = vmatpush1.msra.mxu0 0.0
    %769 = vmatprep.subr.mxu0 0.0
    %770 = vmatpush1.msra.mxu0 0.0
    %771 = vmatprep.subr.mxu0 0.0
    %772 = vmatpush1.msra.mxu0 0.0
    %773 = vmatprep.subr.mxu0 0.0
    %774 = vmatpush1.msra.mxu0 0.0
    %775 = vmatprep.subr.mxu0 0.0
    %776 = vmatpush1.msra.mxu0 0.0
    %777 = vmatprep.subr.mxu0 0.0
    %778 = vmatpush1.msra.mxu0 0.0
    %779 = vmatprep.subr.mxu0 0.0
    %780 = vmatpush1.msra.mxu0 0.0
    %781 = vmatprep.subr.mxu0 0.0
    %782 = vmatpush1.msra.mxu0 0.0
    %783 = vmatprep.subr.mxu0 0.0
    %784 = vmatpush1.msra.mxu0 0.0
    %785 = vmatprep.subr.mxu0 0.0
    %786 = vmatpush1.msra.mxu0 0.0
    %787 = vmatprep.subr.mxu0 0.0
    %788 = vmatpush1.msra.mxu0 0.0
    %789 = vmatprep.subr.mxu0 0.0
    %790 = vmatpush1.msra.mxu0 0.0
    %791 = vmatprep.subr.mxu0 0.0
    %792 = vmatpush1.msra.mxu0 0.0
    %793 = vmatprep.subr.mxu0 0.0
    %794 = vmatpush1.msra.mxu0 0.0
    %795 = vmatprep.subr.mxu0 0.0
    %796 = vmatpush1.msra.mxu0 0.0
    %797 = vmatprep.mubr.f32.mxu0 0.0
    %798 = vmatmul.mubr.f32.gmra.mrb[0].mxu0 %v625
    %v799 = vpop.f32.mrb[0].mxu0
    %v800 = vadd.f32 0.0, %v799
    %v801 = vpop.f32.mrb[0].mxu0
    %802 = vdwg.mxu0
    %v804 = vrot.slane %v800, 6
    %v805 = vrot.slane %v800, 7
    %v808 = vadd.f32 %v228, %v804
    %v809 = vadd.f32 %v234, %v805
    %v810 = vxor.u32 %v808, 2147483648
    %v811 = vxor.u32 %v809, 2147483648
    %v812 = vmul.f32 %v810, 1.442695
    %v813 = vpow.pop %v812
    %v814 = vmul.f32 %v811, 1.442695
    %v815 = vpow.pop %v814
    %v816 = vadd.f32 %v813, 1.0
    %v817 = vadd.f32 %v815, 1.0
    %v818 = vrcp.pop %v816
    %v819 = vmul.f32 1.0, %v818
    %v820 = vrcp.pop %v817
    %v821 = vmul.f32 1.0, %v820
    %v822 = vtanh.pop %v808
    %v823 = vtanh.pop %v809
    %v826 = vrot.slane %v605, 7
    %v827 = vrot.slane %v606, 7
    %v830 = vmul.f32 %v819, %v826
    %v831 = vmul.f32 %v821, %v827
    %834 = vrot.lane.b32.xlu0 %v822, 64
    %v835 = vpop.permute.xlu0 %834
    %836 = vrot.lane.b32.xlu0 %v823, 64
    %v837 = vpop.permute.xlu0 %836
    %v840 = vmul.f32 %v819, %v835
    %v841 = vmul.f32 %v821, %v837
    %844 = vrot.lane.b32.xlu0 %v840, 32
    %v845 = vpop.permute.xlu0 %844
    %846 = vrot.lane.b32.xlu0 %v841, 32
    %v847 = vpop.permute.xlu0 %846
    %v850 = vadd.f32 %v830, %v845
    %v851 = vadd.f32 %v831, %v847
    %v852 = vtanh.pop %v850
    %v853 = vtanh.pop %v851
    %856 = vrot.lane.b32.xlu0 %v852, 64
    %v857 = vpop.permute.xlu0 %856
    %858 = vrot.lane.b32.xlu0 %v853, 64
    %v859 = vpop.permute.xlu0 %858
    %v862 = vmul.f32 %v819, %v857
    %v863 = vmul.f32 %v821, %v859
    %v866 = vrot.slane %v862, 2
    %v867 = vrot.slane %v863, 1
    %v868 = vsel %vm377, %v867, %v866
    %869 = vrot.lane.b32.xlu0 %v868, 32
    %v870 = vpop.permute.xlu0 %869
    %v871 = vsel %vm240, %v870, 0
    %873 = vmatprep.subr.mxu0 0.0
    %874 = vmatpush1.msra.mxu0 %v126
    %875 = vmatprep.subr.mxu0 0.0
    %876 = vmatpush1.msra.mxu0 %v127
    %877 = vmatprep.subr.mxu0 0.0
    %878 = vmatpush1.msra.mxu0 %v128
    %879 = vmatprep.subr.mxu0 0.0
    %880 = vmatpush1.msra.mxu0 %v129
    %881 = vmatprep.subr.mxu0 0.0
    %882 = vmatpush1.msra.mxu0 0.0
    %883 = vmatprep.subr.mxu0 0.0
    %884 = vmatpush1.msra.mxu0 0.0
    %885 = vmatprep.subr.mxu0 0.0
    %886 = vmatpush1.msra.mxu0 0.0
    %887 = vmatprep.subr.mxu0 0.0
    %888 = vmatpush1.msra.mxu0 0.0
    %889 = vmatprep.subr.mxu0 0.0
    %890 = vmatpush1.msra.mxu0 0.0
    %891 = vmatprep.subr.mxu0 0.0
    %892 = vmatpush1.msra.mxu0 0.0
    %893 = vmatprep.subr.mxu0 0.0
    %894 = vmatpush1.msra.mxu0 0.0
    %895 = vmatprep.subr.mxu0 0.0
    %896 = vmatpush1.msra.mxu0 0.0
    %897 = vmatprep.subr.mxu0 0.0
    %898 = vmatpush1.msra.mxu0 0.0
    %899 = vmatprep.subr.mxu0 0.0
    %900 = vmatpush1.msra.mxu0 0.0
    %901 = vmatprep.subr.mxu0 0.0
    %902 = vmatpush1.msra.mxu0 0.0
    %903 = vmatprep.subr.mxu0 0.0
    %904 = vmatpush1.msra.mxu0 0.0
    %905 = vmatprep.subr.mxu0 0.0
    %906 = vmatpush1.msra.mxu0 0.0
    %907 = vmatprep.subr.mxu0 0.0
    %908 = vmatpush1.msra.mxu0 0.0
    %909 = vmatprep.subr.mxu0 0.0
    %910 = vmatpush1.msra.mxu0 0.0
    %911 = vmatprep.subr.mxu0 0.0
    %912 = vmatpush1.msra.mxu0 0.0
    %913 = vmatprep.subr.mxu0 0.0
    %914 = vmatpush1.msra.mxu0 0.0
    %915 = vmatprep.subr.mxu0 0.0
    %916 = vmatpush1.msra.mxu0 0.0
    %917 = vmatprep.subr.mxu0 0.0
    %918 = vmatpush1.msra.mxu0 0.0
    %919 = vmatprep.subr.mxu0 0.0
    %920 = vmatpush1.msra.mxu0 0.0
    %921 = vmatprep.subr.mxu0 0.0
    %922 = vmatpush1.msra.mxu0 0.0
    %923 = vmatprep.subr.mxu0 0.0
    %924 = vmatpush1.msra.mxu0 0.0
    %925 = vmatprep.subr.mxu0 0.0
    %926 = vmatpush1.msra.mxu0 0.0
    %927 = vmatprep.subr.mxu0 0.0
    %928 = vmatpush1.msra.mxu0 0.0
    %929 = vmatprep.subr.mxu0 0.0
    %930 = vmatpush1.msra.mxu0 0.0
    %931 = vmatprep.subr.mxu0 0.0
    %932 = vmatpush1.msra.mxu0 0.0
    %933 = vmatprep.subr.mxu0 0.0
    %934 = vmatpush1.msra.mxu0 0.0
    %935 = vmatprep.subr.mxu0 0.0
    %936 = vmatpush1.msra.mxu0 0.0
    %937 = vmatprep.mubr.f32.mxu0 0.0
    %938 = vmatmul.mubr.f32.gmra.mrb[0].mxu0 %v871
    %v939 = vpop.f32.mrb[0].mxu0
    %v940 = vadd.f32 %v372, %v939
    %v941 = vpop.f32.mrb[0].mxu0
    %942 = vdwg.mxu0
    %vm943 = vcmp.eq.s32.totalorder %v239, 2
    %v946 = vunpack.c.l.s4 1966171168
    %v947 = vunpack.c.0.s8 %v946
    %v948 = vlaneseq
    %v949 = vshrl.u32 %v948, 7
    %v950 = vsub.s32 %v947, %v949
    %v951 = vrot.slane %v940, %v950
    %v952 = vcombine.high %v951, %v951
    %v954 = vunpack.c.l.s4 1966171168
    %v955 = vunpack.c.0.s8 %v954
    %v956 = vlaneseq
    %v957 = vshrl.u32 %v956, 7
    %v958 = vsub.s32 %v955, %v957
    %v959 = vrot.slane %v951, %v958
    %v961 = vunpack.c.l.s4 1966171168
    %v962 = vunpack.c.0.s8 %v961
    %v963 = vlaneseq
    %v964 = vshrl.u32 %v963, 7
    %v965 = vsub.s32 %v962, %v964
    %v966 = vrot.slane %v952, %v965
    %v967 = vlaneseq
    %v968 = vshrl.u32 %v967, 7
    %v969 = vsub.s32 0, %v968
    %v970 = vrot.slane %v959, %v969
    %v971 = vlaneseq
    %v972 = vshrl.u32 %v971, 7
    %v973 = vsub.s32 0, %v972
    %v974 = vrot.slane %v966, %v973
    %v977 = vsel %vm943, %v970, %v731
    %v978 = vsel %vm943, %v974, %v732
    %979 = vmatprep.subr.mxu0 0.0
    %980 = vmatpush1.msra.mxu0 %v118
    %981 = vmatprep.subr.mxu0 0.0
    %982 = vmatpush1.msra.mxu0 %v119
    %983 = vmatprep.subr.mxu0 0.0
    %984 = vmatpush1.msra.mxu0 %v120
    %985 = vmatprep.subr.mxu0 0.0
    %986 = vmatpush1.msra.mxu0 %v121
    %987 = vmatprep.subr.mxu0 0.0
    %988 = vmatpush1.msra.mxu0 0.0
    %989 = vmatprep.subr.mxu0 0.0
    %990 = vmatpush1.msra.mxu0 0.0
    %991 = vmatprep.subr.mxu0 0.0
    %992 = vmatpush1.msra.mxu0 0.0
    %993 = vmatprep.subr.mxu0 0.0
    %994 = vmatpush1.msra.mxu0 0.0
    %995 = vmatprep.subr.mxu0 0.0
    %996 = vmatpush1.msra.mxu0 0.0
    %997 = vmatprep.subr.mxu0 0.0
    %998 = vmatpush1.msra.mxu0 0.0
    %999 = vmatprep.subr.mxu0 0.0
    %1000 = vmatpush1.msra.mxu0 0.0
    %1001 = vmatprep.subr.mxu0 0.0
    %1002 = vmatpush1.msra.mxu0 0.0
    %1003 = vmatprep.subr.mxu0 0.0
    %1004 = vmatpush1.msra.mxu0 0.0
    %1005 = vmatprep.subr.mxu0 0.0
    %1006 = vmatpush1.msra.mxu0 0.0
    %1007 = vmatprep.subr.mxu0 0.0
    %1008 = vmatpush1.msra.mxu0 0.0
    %1009 = vmatprep.subr.mxu0 0.0
    %1010 = vmatpush1.msra.mxu0 0.0
    %1011 = vmatprep.subr.mxu0 0.0
    %1012 = vmatpush1.msra.mxu0 0.0
    %1013 = vmatprep.subr.mxu0 0.0
    %1014 = vmatpush1.msra.mxu0 0.0
    %1015 = vmatprep.subr.mxu0 0.0
    %1016 = vmatpush1.msra.mxu0 0.0
    %1017 = vmatprep.subr.mxu0 0.0
    %1018 = vmatpush1.msra.mxu0 0.0
    %1019 = vmatprep.subr.mxu0 0.0
    %1020 = vmatpush1.msra.mxu0 0.0
    %1021 = vmatprep.subr.mxu0 0.0
    %1022 = vmatpush1.msra.mxu0 0.0
    %1023 = vmatprep.subr.mxu0 0.0
    %1024 = vmatpush1.msra.mxu0 0.0
    %1025 = vmatprep.subr.mxu0 0.0
    %1026 = vmatpush1.msra.mxu0 0.0
    %1027 = vmatprep.subr.mxu0 0.0
    %1028 = vmatpush1.msra.mxu0 0.0
    %1029 = vmatprep.subr.mxu0 0.0
    %1030 = vmatpush1.msra.mxu0 0.0
    %1031 = vmatprep.subr.mxu0 0.0
    %1032 = vmatpush1.msra.mxu0 0.0
    %1033 = vmatprep.subr.mxu0 0.0
    %1034 = vmatpush1.msra.mxu0 0.0
    %1035 = vmatprep.subr.mxu0 0.0
    %1036 = vmatpush1.msra.mxu0 0.0
    %1037 = vmatprep.subr.mxu0 0.0
    %1038 = vmatpush1.msra.mxu0 0.0
    %1039 = vmatprep.subr.mxu0 0.0
    %1040 = vmatpush1.msra.mxu0 0.0
    %1041 = vmatprep.subr.mxu0 0.0
    %1042 = vmatpush1.msra.mxu0 0.0
    %1043 = vmatprep.mubr.f32.mxu0 0.0
    %1044 = vmatmul.mubr.f32.gmra.mrb[0].mxu0 %v871
    %v1045 = vpop.f32.mrb[0].mxu0
    %v1046 = vadd.f32 0.0, %v1045
    %v1047 = vpop.f32.mrb[0].mxu0
    %1048 = vdwg.mxu0
    %v1050 = vrot.slane %v1046, 5
    %v1051 = vrot.slane %v1046, 6
    %v1054 = vadd.f32 %v228, %v1050
    %v1055 = vadd.f32 %v234, %v1051
    %v1056 = vxor.u32 %v1054, 2147483648
    %v1057 = vxor.u32 %v1055, 2147483648
    %v1058 = vmul.f32 %v1056, 1.442695
    %v1059 = vpow.pop %v1058
    %v1060 = vmul.f32 %v1057, 1.442695
    %v1061 = vpow.pop %v1060
    %v1062 = vadd.f32 %v1059, 1.0
    %v1063 = vadd.f32 %v1061, 1.0
    %v1064 = vrcp.pop %v1062
    %v1065 = vmul.f32 1.0, %v1064
    %v1066 = vrcp.pop %v1063
    %v1067 = vmul.f32 1.0, %v1066
    %v1068 = vtanh.pop %v1054
    %v1069 = vtanh.pop %v1055
    %v1072 = vrot.slane %v850, 7
    %v1073 = vrot.slane %v851, 7
    %v1076 = vmul.f32 %v1065, %v1072
    %v1077 = vmul.f32 %v1067, %v1073
    %1080 = vrot.lane.b32.xlu0 %v1068, 64
    %v1081 = vpop.permute.xlu0 %1080
    %1082 = vrot.lane.b32.xlu0 %v1069, 64
    %v1083 = vpop.permute.xlu0 %1082
    %v1086 = vmul.f32 %v1065, %v1081
    %v1087 = vmul.f32 %v1067, %v1083
    %1090 = vrot.lane.b32.xlu0 %v1086, 32
    %v1091 = vpop.permute.xlu0 %1090
    %1092 = vrot.lane.b32.xlu0 %v1087, 32
    %v1093 = vpop.permute.xlu0 %1092
    %v1096 = vadd.f32 %v1076, %v1091
    %v1097 = vadd.f32 %v1077, %v1093
    %v1098 = vtanh.pop %v1096
    %v1099 = vtanh.pop %v1097
    %1102 = vrot.lane.b32.xlu0 %v1098, 64
    %v1103 = vpop.permute.xlu0 %1102
    %1104 = vrot.lane.b32.xlu0 %v1099, 64
    %v1105 = vpop.permute.xlu0 %1104
    %v1108 = vmul.f32 %v1065, %v1103
    %v1109 = vmul.f32 %v1067, %v1105
    %v1112 = vrot.slane %v1108, 3
    %v1113 = vrot.slane %v1109, 2
    %v1114 = vsel %vm377, %v1113, %v1112
    %1115 = vrot.lane.b32.xlu0 %v1114, 32
    %v1116 = vpop.permute.xlu0 %1115
    %v1117 = vsel %vm240, %v1116, 0
    %1119 = vmatprep.subr.mxu0 0.0
    %1120 = vmatpush1.msra.mxu0 %v126
    %1121 = vmatprep.subr.mxu0 0.0
    %1122 = vmatpush1.msra.mxu0 %v127
    %1123 = vmatprep.subr.mxu0 0.0
    %1124 = vmatpush1.msra.mxu0 %v128
    %1125 = vmatprep.subr.mxu0 0.0
    %1126 = vmatpush1.msra.mxu0 %v129
    %1127 = vmatprep.subr.mxu0 0.0
    %1128 = vmatpush1.msra.mxu0 0.0
    %1129 = vmatprep.subr.mxu0 0.0
    %1130 = vmatpush1.msra.mxu0 0.0
    %1131 = vmatprep.subr.mxu0 0.0
    %1132 = vmatpush1.msra.mxu0 0.0
    %1133 = vmatprep.subr.mxu0 0.0
    %1134 = vmatpush1.msra.mxu0 0.0
    %1135 = vmatprep.subr.mxu0 0.0
    %1136 = vmatpush1.msra.mxu0 0.0
    %1137 = vmatprep.subr.mxu0 0.0
    %1138 = vmatpush1.msra.mxu0 0.0
    %1139 = vmatprep.subr.mxu0 0.0
    %1140 = vmatpush1.msra.mxu0 0.0
    %1141 = vmatprep.subr.mxu0 0.0
    %1142 = vmatpush1.msra.mxu0 0.0
    %1143 = vmatprep.subr.mxu0 0.0
    %1144 = vmatpush1.msra.mxu0 0.0
    %1145 = vmatprep.subr.mxu0 0.0
    %1146 = vmatpush1.msra.mxu0 0.0
    %1147 = vmatprep.subr.mxu0 0.0
    %1148 = vmatpush1.msra.mxu0 0.0
    %1149 = vmatprep.subr.mxu0 0.0
    %1150 = vmatpush1.msra.mxu0 0.0
    %1151 = vmatprep.subr.mxu0 0.0
    %1152 = vmatpush1.msra.mxu0 0.0
    %1153 = vmatprep.subr.mxu0 0.0
    %1154 = vmatpush1.msra.mxu0 0.0
    %1155 = vmatprep.subr.mxu0 0.0
    %1156 = vmatpush1.msra.mxu0 0.0
    %1157 = vmatprep.subr.mxu0 0.0
    %1158 = vmatpush1.msra.mxu0 0.0
    %1159 = vmatprep.subr.mxu0 0.0
    %1160 = vmatpush1.msra.mxu0 0.0
    %1161 = vmatprep.subr.mxu0 0.0
    %1162 = vmatpush1.msra.mxu0 0.0
    %1163 = vmatprep.subr.mxu0 0.0
    %1164 = vmatpush1.msra.mxu0 0.0
    %1165 = vmatprep.subr.mxu0 0.0
    %1166 = vmatpush1.msra.mxu0 0.0
    %1167 = vmatprep.subr.mxu0 0.0
    %1168 = vmatpush1.msra.mxu0 0.0
    %1169 = vmatprep.subr.mxu0 0.0
    %1170 = vmatpush1.msra.mxu0 0.0
    %1171 = vmatprep.subr.mxu0 0.0
    %1172 = vmatpush1.msra.mxu0 0.0
    %1173 = vmatprep.subr.mxu0 0.0
    %1174 = vmatpush1.msra.mxu0 0.0
    %1175 = vmatprep.subr.mxu0 0.0
    %1176 = vmatpush1.msra.mxu0 0.0
    %1177 = vmatprep.subr.mxu0 0.0
    %1178 = vmatpush1.msra.mxu0 0.0
    %1179 = vmatprep.subr.mxu0 0.0
    %1180 = vmatpush1.msra.mxu0 0.0
    %1181 = vmatprep.subr.mxu0 0.0
    %1182 = vmatpush1.msra.mxu0 0.0
    %1183 = vmatprep.mubr.f32.mxu0 0.0
    %1184 = vmatmul.mubr.f32.gmra.mrb[0].mxu0 %v1117
    %v1185 = vpop.f32.mrb[0].mxu0
    %v1186 = vadd.f32 %v372, %v1185
    %v1187 = vpop.f32.mrb[0].mxu0
    %1188 = vdwg.mxu0
    %vm1189 = vcmp.eq.s32.totalorder %v239, 3
    %v1192 = vunpack.c.l.s4 1966171168
    %v1193 = vunpack.c.0.s8 %v1192
    %v1194 = vlaneseq
    %v1195 = vshrl.u32 %v1194, 7
    %v1196 = vsub.s32 %v1193, %v1195
    %v1197 = vrot.slane %v1186, %v1196
    %v1198 = vcombine.high %v1197, %v1197
    %v1200 = vunpack.c.l.s4 1966171168
    %v1201 = vunpack.c.0.s8 %v1200
    %v1202 = vlaneseq
    %v1203 = vshrl.u32 %v1202, 7
    %v1204 = vsub.s32 %v1201, %v1203
    %v1205 = vrot.slane %v1197, %v1204
    %v1207 = vunpack.c.l.s4 1966171168
    %v1208 = vunpack.c.0.s8 %v1207
    %v1209 = vlaneseq
    %v1210 = vshrl.u32 %v1209, 7
    %v1211 = vsub.s32 %v1208, %v1210
    %v1212 = vrot.slane %v1198, %v1211
    %v1213 = vlaneseq
    %v1214 = vshrl.u32 %v1213, 7
    %v1215 = vsub.s32 0, %v1214
    %v1216 = vrot.slane %v1205, %v1215
    %v1217 = vlaneseq
    %v1218 = vshrl.u32 %v1217, 7
    %v1219 = vsub.s32 0, %v1218
    %v1220 = vrot.slane %v1212, %v1219
    %v1223 = vsel %vm1189, %v1216, %v977
    %v1224 = vsel %vm1189, %v1220, %v978
    %1225 = vmatprep.subr.mxu0 0.0
    %1226 = vmatpush1.msra.mxu0 %v118
    %1227 = vmatprep.subr.mxu0 0.0
    %1228 = vmatpush1.msra.mxu0 %v119
    %1229 = vmatprep.subr.mxu0 0.0
    %1230 = vmatpush1.msra.mxu0 %v120
    %1231 = vmatprep.subr.mxu0 0.0
    %1232 = vmatpush1.msra.mxu0 %v121
    %1233 = vmatprep.subr.mxu0 0.0
    %1234 = vmatpush1.msra.mxu0 0.0
    %1235 = vmatprep.subr.mxu0 0.0
    %1236 = vmatpush1.msra.mxu0 0.0
    %1237 = vmatprep.subr.mxu0 0.0
    %1238 = vmatpush1.msra.mxu0 0.0
    %1239 = vmatprep.subr.mxu0 0.0
    %1240 = vmatpush1.msra.mxu0 0.0
    %1241 = vmatprep.subr.mxu0 0.0
    %1242 = vmatpush1.msra.mxu0 0.0
    %1243 = vmatprep.subr.mxu0 0.0
    %1244 = vmatpush1.msra.mxu0 0.0
    %1245 = vmatprep.subr.mxu0 0.0
    %1246 = vmatpush1.msra.mxu0 0.0
    %1247 = vmatprep.subr.mxu0 0.0
    %1248 = vmatpush1.msra.mxu0 0.0
    %1249 = vmatprep.subr.mxu0 0.0
    %1250 = vmatpush1.msra.mxu0 0.0
    %1251 = vmatprep.subr.mxu0 0.0
    %1252 = vmatpush1.msra.mxu0 0.0
    %1253 = vmatprep.subr.mxu0 0.0
    %1254 = vmatpush1.msra.mxu0 0.0
    %1255 = vmatprep.subr.mxu0 0.0
    %1256 = vmatpush1.msra.mxu0 0.0
    %1257 = vmatprep.subr.mxu0 0.0
    %1258 = vmatpush1.msra.mxu0 0.0
    %1259 = vmatprep.subr.mxu0 0.0
    %1260 = vmatpush1.msra.mxu0 0.0
    %1261 = vmatprep.subr.mxu0 0.0
    %1262 = vmatpush1.msra.mxu0 0.0
    %1263 = vmatprep.subr.mxu0 0.0
    %1264 = vmatpush1.msra.mxu0 0.0
    %1265 = vmatprep.subr.mxu0 0.0
    %1266 = vmatpush1.msra.mxu0 0.0
    %1267 = vmatprep.subr.mxu0 0.0
    %1268 = vmatpush1.msra.mxu0 0.0
    %1269 = vmatprep.subr.mxu0 0.0
    %1270 = vmatpush1.msra.mxu0 0.0
    %1271 = vmatprep.subr.mxu0 0.0
    %1272 = vmatpush1.msra.mxu0 0.0
    %1273 = vmatprep.subr.mxu0 0.0
    %1274 = vmatpush1.msra.mxu0 0.0
    %1275 = vmatprep.subr.mxu0 0.0
    %1276 = vmatpush1.msra.mxu0 0.0
    %1277 = vmatprep.subr.mxu0 0.0
    %1278 = vmatpush1.msra.mxu0 0.0
    %1279 = vmatprep.subr.mxu0 0.0
    %1280 = vmatpush1.msra.mxu0 0.0
    %1281 = vmatprep.subr.mxu0 0.0
    %1282 = vmatpush1.msra.mxu0 0.0
    %1283 = vmatprep.subr.mxu0 0.0
    %1284 = vmatpush1.msra.mxu0 0.0
    %1285 = vmatprep.subr.mxu0 0.0
    %1286 = vmatpush1.msra.mxu0 0.0
    %1287 = vmatprep.subr.mxu0 0.0
    %1288 = vmatpush1.msra.mxu0 0.0
    %1289 = vmatprep.mubr.f32.mxu0 0.0
    %1290 = vmatmul.mubr.f32.gmra.mrb[0].mxu0 %v1117
    %v1291 = vpop.f32.mrb[0].mxu0
    %v1292 = vadd.f32 0.0, %v1291
    %v1293 = vpop.f32.mrb[0].mxu0
    %1294 = vdwg.mxu0
    %v1296 = vrot.slane %v1292, 4
    %v1297 = vrot.slane %v1292, 5
    %v1300 = vadd.f32 %v228, %v1296
    %v1301 = vadd.f32 %v234, %v1297
    %v1302 = vxor.u32 %v1300, 2147483648
    %v1303 = vxor.u32 %v1301, 2147483648
    %v1304 = vmul.f32 %v1302, 1.442695
    %v1305 = vpow.pop %v1304
    %v1306 = vmul.f32 %v1303, 1.442695
    %v1307 = vpow.pop %v1306
    %v1308 = vadd.f32 %v1305, 1.0
    %v1309 = vadd.f32 %v1307, 1.0
    %v1310 = vrcp.pop %v1308
    %v1311 = vmul.f32 1.0, %v1310
    %v1312 = vrcp.pop %v1309
    %v1313 = vmul.f32 1.0, %v1312
    %v1314 = vtanh.pop %v1300
    %v1315 = vtanh.pop %v1301
    %v1318 = vrot.slane %v1096, 7
    %v1319 = vrot.slane %v1097, 7
    %v1322 = vmul.f32 %v1311, %v1318
    %v1323 = vmul.f32 %v1313, %v1319
    %1326 = vrot.lane.b32.xlu0 %v1314, 64
    %v1327 = vpop.permute.xlu0 %1326
    %1328 = vrot.lane.b32.xlu0 %v1315, 64
    %v1329 = vpop.permute.xlu0 %1328
    %v1332 = vmul.f32 %v1311, %v1327
    %v1333 = vmul.f32 %v1313, %v1329
    %1336 = vrot.lane.b32.xlu0 %v1332, 32
    %v1337 = vpop.permute.xlu0 %1336
    %1338 = vrot.lane.b32.xlu0 %v1333, 32
    %v1339 = vpop.permute.xlu0 %1338
    %v1342 = vadd.f32 %v1322, %v1337
    %v1343 = vadd.f32 %v1323, %v1339
    %v1344 = vtanh.pop %v1342
    %v1345 = vtanh.pop %v1343
    %1348 = vrot.lane.b32.xlu0 %v1344, 64
    %v1349 = vpop.permute.xlu0 %1348
    %1350 = vrot.lane.b32.xlu0 %v1345, 64
    %v1351 = vpop.permute.xlu0 %1350
    %v1354 = vmul.f32 %v1311, %v1349
    %v1355 = vmul.f32 %v1313, %v1351
    %v1358 = vrot.slane %v1354, 4
    %v1359 = vrot.slane %v1355, 3
    %v1360 = vsel %vm377, %v1359, %v1358
    %1361 = vrot.lane.b32.xlu0 %v1360, 32
    %v1362 = vpop.permute.xlu0 %1361
    %v1363 = vsel %vm240, %v1362, 0
    %1365 = vmatprep.subr.mxu0 0.0
    %1366 = vmatpush1.msra.mxu0 %v126
    %1367 = vmatprep.subr.mxu0 0.0
    %1368 = vmatpush1.msra.mxu0 %v127
    %1369 = vmatprep.subr.mxu0 0.0
    %1370 = vmatpush1.msra.mxu0 %v128
    %1371 = vmatprep.subr.mxu0 0.0
    %1372 = vmatpush1.msra.mxu0 %v129
    %1373 = vmatprep.subr.mxu0 0.0
    %1374 = vmatpush1.msra.mxu0 0.0
    %1375 = vmatprep.subr.mxu0 0.0
    %1376 = vmatpush1.msra.mxu0 0.0
    %1377 = vmatprep.subr.mxu0 0.0
    %1378 = vmatpush1.msra.mxu0 0.0
    %1379 = vmatprep.subr.mxu0 0.0
    %1380 = vmatpush1.msra.mxu0 0.0
    %1381 = vmatprep.subr.mxu0 0.0
    %1382 = vmatpush1.msra.mxu0 0.0
    %1383 = vmatprep.subr.mxu0 0.0
    %1384 = vmatpush1.msra.mxu0 0.0
    %1385 = vmatprep.subr.mxu0 0.0
    %1386 = vmatpush1.msra.mxu0 0.0
    %1387 = vmatprep.subr.mxu0 0.0
    %1388 = vmatpush1.msra.mxu0 0.0
    %1389 = vmatprep.subr.mxu0 0.0
    %1390 = vmatpush1.msra.mxu0 0.0
    %1391 = vmatprep.subr.mxu0 0.0
    %1392 = vmatpush1.msra.mxu0 0.0
    %1393 = vmatprep.subr.mxu0 0.0
    %1394 = vmatpush1.msra.mxu0 0.0
    %1395 = vmatprep.subr.mxu0 0.0
    %1396 = vmatpush1.msra.mxu0 0.0
    %1397 = vmatprep.subr.mxu0 0.0
    %1398 = vmatpush1.msra.mxu0 0.0
    %1399 = vmatprep.subr.mxu0 0.0
    %1400 = vmatpush1.msra.mxu0 0.0
    %1401 = vmatprep.subr.mxu0 0.0
    %1402 = vmatpush1.msra.mxu0 0.0
    %1403 = vmatprep.subr.mxu0 0.0
    %1404 = vmatpush1.msra.mxu0 0.0
    %1405 = vmatprep.subr.mxu0 0.0
    %1406 = vmatpush1.msra.mxu0 0.0
    %1407 = vmatprep.subr.mxu0 0.0
    %1408 = vmatpush1.msra.mxu0 0.0
    %1409 = vmatprep.subr.mxu0 0.0
    %1410 = vmatpush1.msra.mxu0 0.0
    %1411 = vmatprep.subr.mxu0 0.0
    %1412 = vmatpush1.msra.mxu0 0.0
    %1413 = vmatprep.subr.mxu0 0.0
    %1414 = vmatpush1.msra.mxu0 0.0
    %1415 = vmatprep.subr.mxu0 0.0
    %1416 = vmatpush1.msra.mxu0 0.0
    %1417 = vmatprep.subr.mxu0 0.0
    %1418 = vmatpush1.msra.mxu0 0.0
    %1419 = vmatprep.subr.mxu0 0.0
    %1420 = vmatpush1.msra.mxu0 0.0
    %1421 = vmatprep.subr.mxu0 0.0
    %1422 = vmatpush1.msra.mxu0 0.0
    %1423 = vmatprep.subr.mxu0 0.0
    %1424 = vmatpush1.msra.mxu0 0.0
    %1425 = vmatprep.subr.mxu0 0.0
    %1426 = vmatpush1.msra.mxu0 0.0
    %1427 = vmatprep.subr.mxu0 0.0
    %1428 = vmatpush1.msra.mxu0 0.0
    %1429 = vmatprep.mubr.f32.mxu0 0.0
    %1430 = vmatmul.mubr.f32.gmra.mrb[0].mxu0 %v1363
    %v1431 = vpop.f32.mrb[0].mxu0
    %v1432 = vadd.f32 %v372, %v1431
    %v1433 = vpop.f32.mrb[0].mxu0
    %1434 = vdwg.mxu0
    %vm1435 = vcmp.eq.s32.totalorder %v239, 4
    %v1438 = vunpack.c.l.s4 1966171168
    %v1439 = vunpack.c.0.s8 %v1438
    %v1440 = vlaneseq
    %v1441 = vshrl.u32 %v1440, 7
    %v1442 = vsub.s32 %v1439, %v1441
    %v1443 = vrot.slane %v1432, %v1442
    %v1444 = vcombine.high %v1443, %v1443
    %v1446 = vunpack.c.l.s4 1966171168
    %v1447 = vunpack.c.0.s8 %v1446
    %v1448 = vlaneseq
    %v1449 = vshrl.u32 %v1448, 7
    %v1450 = vsub.s32 %v1447, %v1449
    %v1451 = vrot.slane %v1443, %v1450
    %v1453 = vunpack.c.l.s4 1966171168
    %v1454 = vunpack.c.0.s8 %v1453
    %v1455 = vlaneseq
    %v1456 = vshrl.u32 %v1455, 7
    %v1457 = vsub.s32 %v1454, %v1456
    %v1458 = vrot.slane %v1444, %v1457
    %v1459 = vlaneseq
    %v1460 = vshrl.u32 %v1459, 7
    %v1461 = vsub.s32 0, %v1460
    %v1462 = vrot.slane %v1451, %v1461
    %v1463 = vlaneseq
    %v1464 = vshrl.u32 %v1463, 7
    %v1465 = vsub.s32 0, %v1464
    %v1466 = vrot.slane %v1458, %v1465
    %v1469 = vsel %vm1435, %v1462, %v1223
    %v1470 = vsel %vm1435, %v1466, %v1224
    %1471 = vmatprep.subr.mxu0 0.0
    %1472 = vmatpush1.msra.mxu0 %v118
    %1473 = vmatprep.subr.mxu0 0.0
    %1474 = vmatpush1.msra.mxu0 %v119
    %1475 = vmatprep.subr.mxu0 0.0
    %1476 = vmatpush1.msra.mxu0 %v120
    %1477 = vmatprep.subr.mxu0 0.0
    %1478 = vmatpush1.msra.mxu0 %v121
    %1479 = vmatprep.subr.mxu0 0.0
    %1480 = vmatpush1.msra.mxu0 0.0
    %1481 = vmatprep.subr.mxu0 0.0
    %1482 = vmatpush1.msra.mxu0 0.0
    %1483 = vmatprep.subr.mxu0 0.0
    %1484 = vmatpush1.msra.mxu0 0.0
    %1485 = vmatprep.subr.mxu0 0.0
    %1486 = vmatpush1.msra.mxu0 0.0
    %1487 = vmatprep.subr.mxu0 0.0
    %1488 = vmatpush1.msra.mxu0 0.0
    %1489 = vmatprep.subr.mxu0 0.0
    %1490 = vmatpush1.msra.mxu0 0.0
    %1491 = vmatprep.subr.mxu0 0.0
    %1492 = vmatpush1.msra.mxu0 0.0
    %1493 = vmatprep.subr.mxu0 0.0
    %1494 = vmatpush1.msra.mxu0 0.0
    %1495 = vmatprep.subr.mxu0 0.0
    %1496 = vmatpush1.msra.mxu0 0.0
    %1497 = vmatprep.subr.mxu0 0.0
    %1498 = vmatpush1.msra.mxu0 0.0
    %1499 = vmatprep.subr.mxu0 0.0
    %1500 = vmatpush1.msra.mxu0 0.0
    %1501 = vmatprep.subr.mxu0 0.0
    %1502 = vmatpush1.msra.mxu0 0.0
    %1503 = vmatprep.subr.mxu0 0.0
    %1504 = vmatpush1.msra.mxu0 0.0
    %1505 = vmatprep.subr.mxu0 0.0
    %1506 = vmatpush1.msra.mxu0 0.0
    %1507 = vmatprep.subr.mxu0 0.0
    %1508 = vmatpush1.msra.mxu0 0.0
    %1509 = vmatprep.subr.mxu0 0.0
    %1510 = vmatpush1.msra.mxu0 0.0
    %1511 = vmatprep.subr.mxu0 0.0
    %1512 = vmatpush1.msra.mxu0 0.0
    %1513 = vmatprep.subr.mxu0 0.0
    %1514 = vmatpush1.msra.mxu0 0.0
    %1515 = vmatprep.subr.mxu0 0.0
    %1516 = vmatpush1.msra.mxu0 0.0
    %1517 = vmatprep.subr.mxu0 0.0
    %1518 = vmatpush1.msra.mxu0 0.0
    %1519 = vmatprep.subr.mxu0 0.0
    %1520 = vmatpush1.msra.mxu0 0.0
    %1521 = vmatprep.subr.mxu0 0.0
    %1522 = vmatpush1.msra.mxu0 0.0
    %1523 = vmatprep.subr.mxu0 0.0
    %1524 = vmatpush1.msra.mxu0 0.0
    %1525 = vmatprep.subr.mxu0 0.0
    %1526 = vmatpush1.msra.mxu0 0.0
    %1527 = vmatprep.subr.mxu0 0.0
    %1528 = vmatpush1.msra.mxu0 0.0
    %1529 = vmatprep.subr.mxu0 0.0
    %1530 = vmatpush1.msra.mxu0 0.0
    %1531 = vmatprep.subr.mxu0 0.0
    %1532 = vmatpush1.msra.mxu0 0.0
    %1533 = vmatprep.subr.mxu0 0.0
    %1534 = vmatpush1.msra.mxu0 0.0
    %1535 = vmatprep.mubr.f32.mxu0 0.0
    %1536 = vmatmul.mubr.f32.gmra.mrb[0].mxu0 %v1363
    %v1537 = vpop.f32.mrb[0].mxu0
    %v1538 = vadd.f32 0.0, %v1537
    %v1539 = vpop.f32.mrb[0].mxu0
    %1540 = vdwg.mxu0
    %v1542 = vrot.slane %v1538, 3
    %v1543 = vrot.slane %v1538, 4
    %v1546 = vadd.f32 %v228, %v1542
    %v1547 = vadd.f32 %v234, %v1543
    %v1548 = vxor.u32 %v1546, 2147483648
    %v1549 = vxor.u32 %v1547, 2147483648
    %v1550 = vmul.f32 %v1548, 1.442695
    %v1551 = vpow.pop %v1550
    %v1552 = vmul.f32 %v1549, 1.442695
    %v1553 = vpow.pop %v1552
    %v1554 = vadd.f32 %v1551, 1.0
    %v1555 = vadd.f32 %v1553, 1.0
    %v1556 = vrcp.pop %v1554
    %v1557 = vmul.f32 1.0, %v1556
    %v1558 = vrcp.pop %v1555
    %v1559 = vmul.f32 1.0, %v1558
    %v1560 = vtanh.pop %v1546
    %v1561 = vtanh.pop %v1547
    %v1564 = vrot.slane %v1342, 7
    %v1565 = vrot.slane %v1343, 7
    %v1568 = vmul.f32 %v1557, %v1564
    %v1569 = vmul.f32 %v1559, %v1565
    %1572 = vrot.lane.b32.xlu0 %v1560, 64
    %v1573 = vpop.permute.xlu0 %1572
    %1574 = vrot.lane.b32.xlu0 %v1561, 64
    %v1575 = vpop.permute.xlu0 %1574
    %v1578 = vmul.f32 %v1557, %v1573
    %v1579 = vmul.f32 %v1559, %v1575
    %1582 = vrot.lane.b32.xlu0 %v1578, 32
    %v1583 = vpop.permute.xlu0 %1582
    %1584 = vrot.lane.b32.xlu0 %v1579, 32
    %v1585 = vpop.permute.xlu0 %1584
    %v1588 = vadd.f32 %v1568, %v1583
    %v1589 = vadd.f32 %v1569, %v1585
    %v1590 = vtanh.pop %v1588
    %v1591 = vtanh.pop %v1589
    %1594 = vrot.lane.b32.xlu0 %v1590, 64
    %v1595 = vpop.permute.xlu0 %1594
    %1596 = vrot.lane.b32.xlu0 %v1591, 64
    %v1597 = vpop.permute.xlu0 %1596
    %v1600 = vmul.f32 %v1557, %v1595
    %v1601 = vmul.f32 %v1559, %v1597
    %v1604 = vrot.slane %v1600, 5
    %v1605 = vrot.slane %v1601, 4
    %v1606 = vsel %vm377, %v1605, %v1604
    %1607 = vrot.lane.b32.xlu0 %v1606, 32
    %v1608 = vpop.permute.xlu0 %1607
    %v1609 = vsel %vm240, %v1608, 0
    %1611 = vmatprep.subr.mxu0 0.0
    %1612 = vmatpush1.msra.mxu0 %v126
    %1613 = vmatprep.subr.mxu0 0.0
    %1614 = vmatpush1.msra.mxu0 %v127
    %1615 = vmatprep.subr.mxu0 0.0
    %1616 = vmatpush1.msra.mxu0 %v128
    %1617 = vmatprep.subr.mxu0 0.0
    %1618 = vmatpush1.msra.mxu0 %v129
    %1619 = vmatprep.subr.mxu0 0.0
    %1620 = vmatpush1.msra.mxu0 0.0
    %1621 = vmatprep.subr.mxu0 0.0
    %1622 = vmatpush1.msra.mxu0 0.0
    %1623 = vmatprep.subr.mxu0 0.0
    %1624 = vmatpush1.msra.mxu0 0.0
    %1625 = vmatprep.subr.mxu0 0.0
    %1626 = vmatpush1.msra.mxu0 0.0
    %1627 = vmatprep.subr.mxu0 0.0
    %1628 = vmatpush1.msra.mxu0 0.0
    %1629 = vmatprep.subr.mxu0 0.0
    %1630 = vmatpush1.msra.mxu0 0.0
    %1631 = vmatprep.subr.mxu0 0.0
    %1632 = vmatpush1.msra.mxu0 0.0
    %1633 = vmatprep.subr.mxu0 0.0
    %1634 = vmatpush1.msra.mxu0 0.0
    %1635 = vmatprep.subr.mxu0 0.0
    %1636 = vmatpush1.msra.mxu0 0.0
    %1637 = vmatprep.subr.mxu0 0.0
    %1638 = vmatpush1.msra.mxu0 0.0
    %1639 = vmatprep.subr.mxu0 0.0
    %1640 = vmatpush1.msra.mxu0 0.0
    %1641 = vmatprep.subr.mxu0 0.0
    %1642 = vmatpush1.msra.mxu0 0.0
    %1643 = vmatprep.subr.mxu0 0.0
    %1644 = vmatpush1.msra.mxu0 0.0
    %1645 = vmatprep.subr.mxu0 0.0
    %1646 = vmatpush1.msra.mxu0 0.0
    %1647 = vmatprep.subr.mxu0 0.0
    %1648 = vmatpush1.msra.mxu0 0.0
    %1649 = vmatprep.subr.mxu0 0.0
    %1650 = vmatpush1.msra.mxu0 0.0
    %1651 = vmatprep.subr.mxu0 0.0
    %1652 = vmatpush1.msra.mxu0 0.0
    %1653 = vmatprep.subr.mxu0 0.0
    %1654 = vmatpush1.msra.mxu0 0.0
    %1655 = vmatprep.subr.mxu0 0.0
    %1656 = vmatpush1.msra.mxu0 0.0
    %1657 = vmatprep.subr.mxu0 0.0
    %1658 = vmatpush1.msra.mxu0 0.0
    %1659 = vmatprep.subr.mxu0 0.0
    %1660 = vmatpush1.msra.mxu0 0.0
    %1661 = vmatprep.subr.mxu0 0.0
    %1662 = vmatpush1.msra.mxu0 0.0
    %1663 = vmatprep.subr.mxu0 0.0
    %1664 = vmatpush1.msra.mxu0 0.0
    %1665 = vmatprep.subr.mxu0 0.0
    %1666 = vmatpush1.msra.mxu0 0.0
    %1667 = vmatprep.subr.mxu0 0.0
    %1668 = vmatpush1.msra.mxu0 0.0
    %1669 = vmatprep.subr.mxu0 0.0
    %1670 = vmatpush1.msra.mxu0 0.0
    %1671 = vmatprep.subr.mxu0 0.0
    %1672 = vmatpush1.msra.mxu0 0.0
    %1673 = vmatprep.subr.mxu0 0.0
    %1674 = vmatpush1.msra.mxu0 0.0
    %1675 = vmatprep.mubr.f32.mxu0 0.0
    %1676 = vmatmul.mubr.f32.gmra.mrb[0].mxu0 %v1609
    %v1677 = vpop.f32.mrb[0].mxu0
    %v1678 = vadd.f32 %v372, %v1677
    %v1679 = vpop.f32.mrb[0].mxu0
    %1680 = vdwg.mxu0
    %vm1681 = vcmp.eq.s32.totalorder %v239, 5
    %v1684 = vunpack.c.l.s4 1966171168
    %v1685 = vunpack.c.0.s8 %v1684
    %v1686 = vlaneseq
    %v1687 = vshrl.u32 %v1686, 7
    %v1688 = vsub.s32 %v1685, %v1687
    %v1689 = vrot.slane %v1678, %v1688
    %v1690 = vcombine.high %v1689, %v1689
    %v1692 = vunpack.c.l.s4 1966171168
    %v1693 = vunpack.c.0.s8 %v1692
    %v1694 = vlaneseq
    %v1695 = vshrl.u32 %v1694, 7
    %v1696 = vsub.s32 %v1693, %v1695
    %v1697 = vrot.slane %v1689, %v1696
    %v1699 = vunpack.c.l.s4 1966171168
    %v1700 = vunpack.c.0.s8 %v1699
    %v1701 = vlaneseq
    %v1702 = vshrl.u32 %v1701, 7
    %v1703 = vsub.s32 %v1700, %v1702
    %v1704 = vrot.slane %v1690, %v1703
    %v1705 = vlaneseq
    %v1706 = vshrl.u32 %v1705, 7
    %v1707 = vsub.s32 0, %v1706
    %v1708 = vrot.slane %v1697, %v1707
    %v1709 = vlaneseq
    %v1710 = vshrl.u32 %v1709, 7
    %v1711 = vsub.s32 0, %v1710
    %v1712 = vrot.slane %v1704, %v1711
    %v1715 = vsel %vm1681, %v1708, %v1469
    %v1716 = vsel %vm1681, %v1712, %v1470
    %1717 = vmatprep.subr.mxu0 0.0
    %1718 = vmatpush1.msra.mxu0 %v118
    %1719 = vmatprep.subr.mxu0 0.0
    %1720 = vmatpush1.msra.mxu0 %v119
    %1721 = vmatprep.subr.mxu0 0.0
    %1722 = vmatpush1.msra.mxu0 %v120
    %1723 = vmatprep.subr.mxu0 0.0
    %1724 = vmatpush1.msra.mxu0 %v121
    %1725 = vmatprep.subr.mxu0 0.0
    %1726 = vmatpush1.msra.mxu0 0.0
    %1727 = vmatprep.subr.mxu0 0.0
    %1728 = vmatpush1.msra.mxu0 0.0
    %1729 = vmatprep.subr.mxu0 0.0
    %1730 = vmatpush1.msra.mxu0 0.0
    %1731 = vmatprep.subr.mxu0 0.0
    %1732 = vmatpush1.msra.mxu0 0.0
    %1733 = vmatprep.subr.mxu0 0.0
    %1734 = vmatpush1.msra.mxu0 0.0
    %1735 = vmatprep.subr.mxu0 0.0
    %1736 = vmatpush1.msra.mxu0 0.0
    %1737 = vmatprep.subr.mxu0 0.0
    %1738 = vmatpush1.msra.mxu0 0.0
    %1739 = vmatprep.subr.mxu0 0.0
    %1740 = vmatpush1.msra.mxu0 0.0
    %1741 = vmatprep.subr.mxu0 0.0
    %1742 = vmatpush1.msra.mxu0 0.0
    %1743 = vmatprep.subr.mxu0 0.0
    %1744 = vmatpush1.msra.mxu0 0.0
    %1745 = vmatprep.subr.mxu0 0.0
    %1746 = vmatpush1.msra.mxu0 0.0
    %1747 = vmatprep.subr.mxu0 0.0
    %1748 = vmatpush1.msra.mxu0 0.0
    %1749 = vmatprep.subr.mxu0 0.0
    %1750 = vmatpush1.msra.mxu0 0.0
    %1751 = vmatprep.subr.mxu0 0.0
    %1752 = vmatpush1.msra.mxu0 0.0
    %1753 = vmatprep.subr.mxu0 0.0
    %1754 = vmatpush1.msra.mxu0 0.0
    %1755 = vmatprep.subr.mxu0 0.0
    %1756 = vmatpush1.msra.mxu0 0.0
    %1757 = vmatprep.subr.mxu0 0.0
    %1758 = vmatpush1.msra.mxu0 0.0
    %1759 = vmatprep.subr.mxu0 0.0
    %1760 = vmatpush1.msra.mxu0 0.0
    %1761 = vmatprep.subr.mxu0 0.0
    %1762 = vmatpush1.msra.mxu0 0.0
    %1763 = vmatprep.subr.mxu0 0.0
    %1764 = vmatpush1.msra.mxu0 0.0
    %1765 = vmatprep.subr.mxu0 0.0
    %1766 = vmatpush1.msra.mxu0 0.0
    %1767 = vmatprep.subr.mxu0 0.0
    %1768 = vmatpush1.msra.mxu0 0.0
    %1769 = vmatprep.subr.mxu0 0.0
    %1770 = vmatpush1.msra.mxu0 0.0
    %1771 = vmatprep.subr.mxu0 0.0
    %1772 = vmatpush1.msra.mxu0 0.0
    %1773 = vmatprep.subr.mxu0 0.0
    %1774 = vmatpush1.msra.mxu0 0.0
    %1775 = vmatprep.subr.mxu0 0.0
    %1776 = vmatpush1.msra.mxu0 0.0
    %1777 = vmatprep.subr.mxu0 0.0
    %1778 = vmatpush1.msra.mxu0 0.0
    %1779 = vmatprep.subr.mxu0 0.0
    %1780 = vmatpush1.msra.mxu0 0.0
    %1781 = vmatprep.mubr.f32.mxu0 0.0
    %1782 = vmatmul.mubr.f32.gmra.mrb[0].mxu0 %v1609
    %v1783 = vpop.f32.mrb[0].mxu0
    %v1784 = vadd.f32 0.0, %v1783
    %v1785 = vpop.f32.mrb[0].mxu0
    %1786 = vdwg.mxu0
    %v1788 = vrot.slane %v1784, 2
    %v1789 = vrot.slane %v1784, 3
    %v1792 = vadd.f32 %v228, %v1788
    %v1793 = vadd.f32 %v234, %v1789
    %v1794 = vxor.u32 %v1792, 2147483648
    %v1795 = vxor.u32 %v1793, 2147483648
    %v1796 = vmul.f32 %v1794, 1.442695
    %v1797 = vpow.pop %v1796
    %v1798 = vmul.f32 %v1795, 1.442695
    %v1799 = vpow.pop %v1798
    %v1800 = vadd.f32 %v1797, 1.0
    %v1801 = vadd.f32 %v1799, 1.0
    %v1802 = vrcp.pop %v1800
    %v1803 = vmul.f32 1.0, %v1802
    %v1804 = vrcp.pop %v1801
    %v1805 = vmul.f32 1.0, %v1804
    %v1806 = vtanh.pop %v1792
    %v1807 = vtanh.pop %v1793
    %v1810 = vrot.slane %v1588, 7
    %v1811 = vrot.slane %v1589, 7
    %v1814 = vmul.f32 %v1803, %v1810
    %v1815 = vmul.f32 %v1805, %v1811
    %1818 = vrot.lane.b32.xlu0 %v1806, 64
    %v1819 = vpop.permute.xlu0 %1818
    %1820 = vrot.lane.b32.xlu0 %v1807, 64
    %v1821 = vpop.permute.xlu0 %1820
    %v1824 = vmul.f32 %v1803, %v1819
    %v1825 = vmul.f32 %v1805, %v1821
    %1828 = vrot.lane.b32.xlu0 %v1824, 32
    %v1829 = vpop.permute.xlu0 %1828
    %1830 = vrot.lane.b32.xlu0 %v1825, 32
    %v1831 = vpop.permute.xlu0 %1830
    %v1834 = vadd.f32 %v1814, %v1829
    %v1835 = vadd.f32 %v1815, %v1831
    %v1836 = vtanh.pop %v1834
    %v1837 = vtanh.pop %v1835
    %1840 = vrot.lane.b32.xlu0 %v1836, 64
    %v1841 = vpop.permute.xlu0 %1840
    %1842 = vrot.lane.b32.xlu0 %v1837, 64
    %v1843 = vpop.permute.xlu0 %1842
    %v1846 = vmul.f32 %v1803, %v1841
    %v1847 = vmul.f32 %v1805, %v1843
    %v1850 = vrot.slane %v1846, 6
    %v1851 = vrot.slane %v1847, 5
    %v1852 = vsel %vm377, %v1851, %v1850
    %1853 = vrot.lane.b32.xlu0 %v1852, 32
    %v1854 = vpop.permute.xlu0 %1853
    %v1855 = vsel %vm240, %v1854, 0
    %1857 = vmatprep.subr.mxu0 0.0
    %1858 = vmatpush1.msra.mxu0 %v126
    %1859 = vmatprep.subr.mxu0 0.0
    %1860 = vmatpush1.msra.mxu0 %v127
    %1861 = vmatprep.subr.mxu0 0.0
    %1862 = vmatpush1.msra.mxu0 %v128
    %1863 = vmatprep.subr.mxu0 0.0
    %1864 = vmatpush1.msra.mxu0 %v129
    %1865 = vmatprep.subr.mxu0 0.0
    %1866 = vmatpush1.msra.mxu0 0.0
    %1867 = vmatprep.subr.mxu0 0.0
    %1868 = vmatpush1.msra.mxu0 0.0
    %1869 = vmatprep.subr.mxu0 0.0
    %1870 = vmatpush1.msra.mxu0 0.0
    %1871 = vmatprep.subr.mxu0 0.0
    %1872 = vmatpush1.msra.mxu0 0.0
    %1873 = vmatprep.subr.mxu0 0.0
    %1874 = vmatpush1.msra.mxu0 0.0
    %1875 = vmatprep.subr.mxu0 0.0
    %1876 = vmatpush1.msra.mxu0 0.0
    %1877 = vmatprep.subr.mxu0 0.0
    %1878 = vmatpush1.msra.mxu0 0.0
    %1879 = vmatprep.subr.mxu0 0.0
    %1880 = vmatpush1.msra.mxu0 0.0
    %1881 = vmatprep.subr.mxu0 0.0
    %1882 = vmatpush1.msra.mxu0 0.0
    %1883 = vmatprep.subr.mxu0 0.0
    %1884 = vmatpush1.msra.mxu0 0.0
    %1885 = vmatprep.subr.mxu0 0.0
    %1886 = vmatpush1.msra.mxu0 0.0
    %1887 = vmatprep.subr.mxu0 0.0
    %1888 = vmatpush1.msra.mxu0 0.0
    %1889 = vmatprep.subr.mxu0 0.0
    %1890 = vmatpush1.msra.mxu0 0.0
    %1891 = vmatprep.subr.mxu0 0.0
    %1892 = vmatpush1.msra.mxu0 0.0
    %1893 = vmatprep.subr.mxu0 0.0
    %1894 = vmatpush1.msra.mxu0 0.0
    %1895 = vmatprep.subr.mxu0 0.0
    %1896 = vmatpush1.msra.mxu0 0.0
    %1897 = vmatprep.subr.mxu0 0.0
    %1898 = vmatpush1.msra.mxu0 0.0
    %1899 = vmatprep.subr.mxu0 0.0
    %1900 = vmatpush1.msra.mxu0 0.0
    %1901 = vmatprep.subr.mxu0 0.0
    %1902 = vmatpush1.msra.mxu0 0.0
    %1903 = vmatprep.subr.mxu0 0.0
    %1904 = vmatpush1.msra.mxu0 0.0
    %1905 = vmatprep.subr.mxu0 0.0
    %1906 = vmatpush1.msra.mxu0 0.0
    %1907 = vmatprep.subr.mxu0 0.0
    %1908 = vmatpush1.msra.mxu0 0.0
    %1909 = vmatprep.subr.mxu0 0.0
    %1910 = vmatpush1.msra.mxu0 0.0
    %1911 = vmatprep.subr.mxu0 0.0
    %1912 = vmatpush1.msra.mxu0 0.0
    %1913 = vmatprep.subr.mxu0 0.0
    %1914 = vmatpush1.msra.mxu0 0.0
    %1915 = vmatprep.subr.mxu0 0.0
    %1916 = vmatpush1.msra.mxu0 0.0
    %1917 = vmatprep.subr.mxu0 0.0
    %1918 = vmatpush1.msra.mxu0 0.0
    %1919 = vmatprep.subr.mxu0 0.0
    %1920 = vmatpush1.msra.mxu0 0.0
    %1921 = vmatprep.mubr.f32.mxu0 0.0
    %1922 = vmatmul.mubr.f32.gmra.mrb[0].mxu0 %v1855
    %v1923 = vpop.f32.mrb[0].mxu0
    %v1924 = vadd.f32 %v372, %v1923
    %v1925 = vpop.f32.mrb[0].mxu0
    %1926 = vdwg.mxu0
    %vm1927 = vcmp.eq.s32.totalorder %v239, 6
    %v1930 = vunpack.c.l.s4 1966171168
    %v1931 = vunpack.c.0.s8 %v1930
    %v1932 = vlaneseq
    %v1933 = vshrl.u32 %v1932, 7
    %v1934 = vsub.s32 %v1931, %v1933
    %v1935 = vrot.slane %v1924, %v1934
    %v1936 = vcombine.high %v1935, %v1935
    %v1938 = vunpack.c.l.s4 1966171168
    %v1939 = vunpack.c.0.s8 %v1938
    %v1940 = vlaneseq
    %v1941 = vshrl.u32 %v1940, 7
    %v1942 = vsub.s32 %v1939, %v1941
    %v1943 = vrot.slane %v1935, %v1942
    %v1945 = vunpack.c.l.s4 1966171168
    %v1946 = vunpack.c.0.s8 %v1945
    %v1947 = vlaneseq
    %v1948 = vshrl.u32 %v1947, 7
    %v1949 = vsub.s32 %v1946, %v1948
    %v1950 = vrot.slane %v1936, %v1949
    %v1951 = vlaneseq
    %v1952 = vshrl.u32 %v1951, 7
    %v1953 = vsub.s32 0, %v1952
    %v1954 = vrot.slane %v1943, %v1953
    %v1955 = vlaneseq
    %v1956 = vshrl.u32 %v1955, 7
    %v1957 = vsub.s32 0, %v1956
    %v1958 = vrot.slane %v1950, %v1957
    %v1961 = vsel %vm1927, %v1954, %v1715
    %v1962 = vsel %vm1927, %v1958, %v1716
    %1963 = vmatprep.subr.mxu0 0.0
    %1964 = vmatpush1.msra.mxu0 %v118
    %1965 = vmatprep.subr.mxu0 0.0
    %1966 = vmatpush1.msra.mxu0 %v119
    %1967 = vmatprep.subr.mxu0 0.0
    %1968 = vmatpush1.msra.mxu0 %v120
    %1969 = vmatprep.subr.mxu0 0.0
    %1970 = vmatpush1.msra.mxu0 %v121
    %1971 = vmatprep.subr.mxu0 0.0
    %1972 = vmatpush1.msra.mxu0 0.0
    %1973 = vmatprep.subr.mxu0 0.0
    %1974 = vmatpush1.msra.mxu0 0.0
    %1975 = vmatprep.subr.mxu0 0.0
    %1976 = vmatpush1.msra.mxu0 0.0
    %1977 = vmatprep.subr.mxu0 0.0
    %1978 = vmatpush1.msra.mxu0 0.0
    %1979 = vmatprep.subr.mxu0 0.0
    %1980 = vmatpush1.msra.mxu0 0.0
    %1981 = vmatprep.subr.mxu0 0.0
    %1982 = vmatpush1.msra.mxu0 0.0
    %1983 = vmatprep.subr.mxu0 0.0
    %1984 = vmatpush1.msra.mxu0 0.0
    %1985 = vmatprep.subr.mxu0 0.0
    %1986 = vmatpush1.msra.mxu0 0.0
    %1987 = vmatprep.subr.mxu0 0.0
    %1988 = vmatpush1.msra.mxu0 0.0
    %1989 = vmatprep.subr.mxu0 0.0
    %1990 = vmatpush1.msra.mxu0 0.0
    %1991 = vmatprep.subr.mxu0 0.0
    %1992 = vmatpush1.msra.mxu0 0.0
    %1993 = vmatprep.subr.mxu0 0.0
    %1994 = vmatpush1.msra.mxu0 0.0
    %1995 = vmatprep.subr.mxu0 0.0
    %1996 = vmatpush1.msra.mxu0 0.0
    %1997 = vmatprep.subr.mxu0 0.0
    %1998 = vmatpush1.msra.mxu0 0.0
    %1999 = vmatprep.subr.mxu0 0.0
    %2000 = vmatpush1.msra.mxu0 0.0
    %2001 = vmatprep.subr.mxu0 0.0
    %2002 = vmatpush1.msra.mxu0 0.0
    %2003 = vmatprep.subr.mxu0 0.0
    %2004 = vmatpush1.msra.mxu0 0.0
    %2005 = vmatprep.subr.mxu0 0.0
    %2006 = vmatpush1.msra.mxu0 0.0
    %2007 = vmatprep.subr.mxu0 0.0
    %2008 = vmatpush1.msra.mxu0 0.0
    %2009 = vmatprep.subr.mxu0 0.0
    %2010 = vmatpush1.msra.mxu0 0.0
    %2011 = vmatprep.subr.mxu0 0.0
    %2012 = vmatpush1.msra.mxu0 0.0
    %2013 = vmatprep.subr.mxu0 0.0
    %2014 = vmatpush1.msra.mxu0 0.0
    %2015 = vmatprep.subr.mxu0 0.0
    %2016 = vmatpush1.msra.mxu0 0.0
    %2017 = vmatprep.subr.mxu0 0.0
    %2018 = vmatpush1.msra.mxu0 0.0
    %2019 = vmatprep.subr.mxu0 0.0
    %2020 = vmatpush1.msra.mxu0 0.0
    %2021 = vmatprep.subr.mxu0 0.0
    %2022 = vmatpush1.msra.mxu0 0.0
    %2023 = vmatprep.subr.mxu0 0.0
    %2024 = vmatpush1.msra.mxu0 0.0
    %2025 = vmatprep.subr.mxu0 0.0
    %2026 = vmatpush1.msra.mxu0 0.0
    %2027 = vmatprep.mubr.f32.mxu0 0.0
    %2028 = vmatmul.mubr.f32.gmra.mrb[0].mxu0 %v1855
    %v2029 = vpop.f32.mrb[0].mxu0
    %v2030 = vadd.f32 0.0, %v2029
    %v2031 = vpop.f32.mrb[0].mxu0
    %2032 = vdwg.mxu0
    %v2034 = vrot.slane %v2030, 1
    %v2035 = vrot.slane %v2030, 2
    %v2038 = vadd.f32 %v228, %v2034
    %v2039 = vadd.f32 %v234, %v2035
    %v2040 = vxor.u32 %v2038, 2147483648
    %v2041 = vxor.u32 %v2039, 2147483648
    %v2042 = vmul.f32 %v2040, 1.442695
    %v2043 = vpow.pop %v2042
    %v2044 = vmul.f32 %v2041, 1.442695
    %v2045 = vpow.pop %v2044
    %v2046 = vadd.f32 %v2043, 1.0
    %v2047 = vadd.f32 %v2045, 1.0
    %v2048 = vrcp.pop %v2046
    %v2049 = vmul.f32 1.0, %v2048
    %v2050 = vrcp.pop %v2047
    %v2051 = vmul.f32 1.0, %v2050
    %v2052 = vtanh.pop %v2038
    %v2053 = vtanh.pop %v2039
    %v2056 = vrot.slane %v1834, 7
    %v2057 = vrot.slane %v1835, 7
    %v2060 = vmul.f32 %v2049, %v2056
    %v2061 = vmul.f32 %v2051, %v2057
    %2064 = vrot.lane.b32.xlu0 %v2052, 64
    %v2065 = vpop.permute.xlu0 %2064
    %2066 = vrot.lane.b32.xlu0 %v2053, 64
    %v2067 = vpop.permute.xlu0 %2066
    %v2070 = vmul.f32 %v2049, %v2065
    %v2071 = vmul.f32 %v2051, %v2067
    %2074 = vrot.lane.b32.xlu0 %v2070, 32
    %v2075 = vpop.permute.xlu0 %2074
    %2076 = vrot.lane.b32.xlu0 %v2071, 32
    %v2077 = vpop.permute.xlu0 %2076
    %v2080 = vadd.f32 %v2060, %v2075
    %v2081 = vadd.f32 %v2061, %v2077
    %v2082 = vtanh.pop %v2080
    %v2083 = vtanh.pop %v2081
    %2086 = vrot.lane.b32.xlu0 %v2082, 64
    %v2087 = vpop.permute.xlu0 %2086
    %2088 = vrot.lane.b32.xlu0 %v2083, 64
    %v2089 = vpop.permute.xlu0 %2088
    %v2092 = vmul.f32 %v2049, %v2087
    %v2093 = vmul.f32 %v2051, %v2089
    %v2096 = vrot.slane %v2092, 7
    %v2097 = vrot.slane %v2093, 6
    %v2098 = vsel %vm377, %v2097, %v2096
    %2099 = vrot.lane.b32.xlu0 %v2098, 32
    %v2100 = vpop.permute.xlu0 %2099
    %v2101 = vsel %vm240, %v2100, 0
    %2103 = vmatprep.subr.mxu0 0.0
    %2104 = vmatpush1.msra.mxu0 %v126
    %2105 = vmatprep.subr.mxu0 0.0
    %2106 = vmatpush1.msra.mxu0 %v127
    %2107 = vmatprep.subr.mxu0 0.0
    %2108 = vmatpush1.msra.mxu0 %v128
    %2109 = vmatprep.subr.mxu0 0.0
    %2110 = vmatpush1.msra.mxu0 %v129
    %2111 = vmatprep.subr.mxu0 0.0
    %2112 = vmatpush1.msra.mxu0 0.0
    %2113 = vmatprep.subr.mxu0 0.0
    %2114 = vmatpush1.msra.mxu0 0.0
    %2115 = vmatprep.subr.mxu0 0.0
    %2116 = vmatpush1.msra.mxu0 0.0
    %2117 = vmatprep.subr.mxu0 0.0
    %2118 = vmatpush1.msra.mxu0 0.0
    %2119 = vmatprep.subr.mxu0 0.0
    %2120 = vmatpush1.msra.mxu0 0.0
    %2121 = vmatprep.subr.mxu0 0.0
    %2122 = vmatpush1.msra.mxu0 0.0
    %2123 = vmatprep.subr.mxu0 0.0
    %2124 = vmatpush1.msra.mxu0 0.0
    %2125 = vmatprep.subr.mxu0 0.0
    %2126 = vmatpush1.msra.mxu0 0.0
    %2127 = vmatprep.subr.mxu0 0.0
    %2128 = vmatpush1.msra.mxu0 0.0
    %2129 = vmatprep.subr.mxu0 0.0
    %2130 = vmatpush1.msra.mxu0 0.0
    %2131 = vmatprep.subr.mxu0 0.0
    %2132 = vmatpush1.msra.mxu0 0.0
    %2133 = vmatprep.subr.mxu0 0.0
    %2134 = vmatpush1.msra.mxu0 0.0
    %2135 = vmatprep.subr.mxu0 0.0
    %2136 = vmatpush1.msra.mxu0 0.0
    %2137 = vmatprep.subr.mxu0 0.0
    %2138 = vmatpush1.msra.mxu0 0.0
    %2139 = vmatprep.subr.mxu0 0.0
    %2140 = vmatpush1.msra.mxu0 0.0
    %2141 = vmatprep.subr.mxu0 0.0
    %2142 = vmatpush1.msra.mxu0 0.0
    %2143 = vmatprep.subr.mxu0 0.0
    %2144 = vmatpush1.msra.mxu0 0.0
    %2145 = vmatprep.subr.mxu0 0.0
    %2146 = vmatpush1.msra.mxu0 0.0
    %2147 = vmatprep.subr.mxu0 0.0
    %2148 = vmatpush1.msra.mxu0 0.0
    %2149 = vmatprep.subr.mxu0 0.0
    %2150 = vmatpush1.msra.mxu0 0.0
    %2151 = vmatprep.subr.mxu0 0.0
    %2152 = vmatpush1.msra.mxu0 0.0
    %2153 = vmatprep.subr.mxu0 0.0
    %2154 = vmatpush1.msra.mxu0 0.0
    %2155 = vmatprep.subr.mxu0 0.0
    %2156 = vmatpush1.msra.mxu0 0.0
    %2157 = vmatprep.subr.mxu0 0.0
    %2158 = vmatpush1.msra.mxu0 0.0
    %2159 = vmatprep.subr.mxu0 0.0
    %2160 = vmatpush1.msra.mxu0 0.0
    %2161 = vmatprep.subr.mxu0 0.0
    %2162 = vmatpush1.msra.mxu0 0.0
    %2163 = vmatprep.subr.mxu0 0.0
    %2164 = vmatpush1.msra.mxu0 0.0
    %2165 = vmatprep.subr.mxu0 0.0
    %2166 = vmatpush1.msra.mxu0 0.0
    %2167 = vmatprep.mubr.f32.mxu0 0.0
    %2168 = vmatmul.mubr.f32.gmra.mrb[0].mxu0 %v2101
    %v2169 = vpop.f32.mrb[0].mxu0
    %v2170 = vadd.f32 %v372, %v2169
    %v2171 = vpop.f32.mrb[0].mxu0
    %2172 = vdwg.mxu0
    %vm2173 = vcmp.eq.s32.totalorder %v239, 7
    %v2176 = vunpack.c.l.s4 1966171168
    %v2177 = vunpack.c.0.s8 %v2176
    %v2178 = vlaneseq
    %v2179 = vshrl.u32 %v2178, 7
    %v2180 = vsub.s32 %v2177, %v2179
    %v2181 = vrot.slane %v2170, %v2180
    %v2182 = vcombine.high %v2181, %v2181
    %v2184 = vunpack.c.l.s4 1966171168
    %v2185 = vunpack.c.0.s8 %v2184
    %v2186 = vlaneseq
    %v2187 = vshrl.u32 %v2186, 7
    %v2188 = vsub.s32 %v2185, %v2187
    %v2189 = vrot.slane %v2181, %v2188
    %v2191 = vunpack.c.l.s4 1966171168
    %v2192 = vunpack.c.0.s8 %v2191
    %v2193 = vlaneseq
    %v2194 = vshrl.u32 %v2193, 7
    %v2195 = vsub.s32 %v2192, %v2194
    %v2196 = vrot.slane %v2182, %v2195
    %v2197 = vlaneseq
    %v2198 = vshrl.u32 %v2197, 7
    %v2199 = vsub.s32 0, %v2198
    %v2200 = vrot.slane %v2189, %v2199
    %v2201 = vlaneseq
    %v2202 = vshrl.u32 %v2201, 7
    %v2203 = vsub.s32 0, %v2202
    %v2204 = vrot.slane %v2196, %v2203
    %v2207 = vsel %vm2173, %v2200, %v1961
    %v2208 = vsel %vm2173, %v2204, %v1962
    %v2209 = vlaneseq
    %v2210 = vand.u32 %v2209, 127
    %v2211 = vcvt.s32.f32 %v2210
    %v2212 = vld [vmem:[#allocation11] sm:$0x1]
    %v2214 = vsel %vm149, %v2212, 0
    %2216 = vmatprep.subr.mxu0 %v159
    %2217 = vmatpush1.msra.mxu0 %v157
    %2218 = vmatprep.subr.mxu0 0.0
    %2219 = vmatpush1.msra.mxu0 0.0
    %2220 = vmatprep.subr.mxu0 0.0
    %2221 = vmatpush1.msra.mxu0 0.0
    %2222 = vmatprep.subr.mxu0 0.0
    %2223 = vmatpush1.msra.mxu0 0.0
    %2224 = vmatprep.subr.mxu0 0.0
    %2225 = vmatpush1.msra.mxu0 0.0
    %2226 = vmatprep.subr.mxu0 0.0
    %2227 = vmatpush1.msra.mxu0 0.0
    %2228 = vmatprep.subr.mxu0 0.0
    %2229 = vmatpush1.msra.mxu0 0.0
    %2230 = vmatprep.subr.mxu0 0.0
    %2231 = vmatpush1.msra.mxu0 0.0
    %2232 = vmatprep.subr.mxu0 0.0
    %2233 = vmatpush1.msra.mxu0 0.0
    %2234 = vmatprep.subr.mxu0 0.0
    %2235 = vmatpush1.msra.mxu0 0.0
    %2236 = vmatprep.subr.mxu0 0.0
    %2237 = vmatpush1.msra.mxu0 0.0
    %2238 = vmatprep.subr.mxu0 0.0
    %2239 = vmatpush1.msra.mxu0 0.0
    %2240 = vmatprep.subr.mxu0 0.0
    %2241 = vmatpush1.msra.mxu0 0.0
    %2242 = vmatprep.subr.mxu0 0.0
    %2243 = vmatpush1.msra.mxu0 0.0
    %2244 = vmatprep.subr.mxu0 0.0
    %2245 = vmatpush1.msra.mxu0 0.0
    %2246 = vmatprep.subr.mxu0 0.0
    %2247 = vmatpush1.msra.mxu0 0.0
    %2248 = vmatprep.subr.mxu0 0.0
    %2249 = vmatpush1.msra.mxu0 0.0
    %2250 = vmatprep.subr.mxu0 0.0
    %2251 = vmatpush1.msra.mxu0 0.0
    %2252 = vmatprep.subr.mxu0 0.0
    %2253 = vmatpush1.msra.mxu0 0.0
    %2254 = vmatprep.subr.mxu0 0.0
    %2255 = vmatpush1.msra.mxu0 0.0
    %2256 = vmatprep.subr.mxu0 0.0
    %2257 = vmatpush1.msra.mxu0 0.0
    %2258 = vmatprep.subr.mxu0 0.0
    %2259 = vmatpush1.msra.mxu0 0.0
    %2260 = vmatprep.subr.mxu0 0.0
    %2261 = vmatpush1.msra.mxu0 0.0
    %2262 = vmatprep.subr.mxu0 0.0
    %2263 = vmatpush1.msra.mxu0 0.0
    %2264 = vmatprep.subr.mxu0 0.0
    %2265 = vmatpush1.msra.mxu0 0.0
    %2266 = vmatprep.subr.mxu0 0.0
    %2267 = vmatpush1.msra.mxu0 0.0
    %2268 = vmatprep.subr.mxu0 0.0
    %2269 = vmatpush1.msra.mxu0 0.0
    %2270 = vmatprep.subr.mxu0 0.0
    %2271 = vmatpush1.msra.mxu0 0.0
    %2272 = vmatprep.subr.mxu0 0.0
    %2273 = vmatpush1.msra.mxu0 0.0
    %2274 = vmatprep.subr.mxu0 0.0
    %2275 = vmatpush1.msra.mxu0 0.0
    %2276 = vmatprep.subr.mxu0 0.0
    %2277 = vmatpush1.msra.mxu0 0.0
    %2278 = vmatprep.subr.mxu0 0.0
    %2279 = vmatpush1.msra.mxu0 0.0
    %2280 = vmatprep.mubr.f32.mxu0 0.0
    %2281 = vmatmul.mubr.f32.gmra.mrb[0].mxu0 %v2214
    %v2282 = vpop.f32.mrb[0].mxu0
    %v2283 = vpop.f32.mrb[0].mxu0
    %v2284 = vadd.f32 %v144, %v2283
    %2285 = vdwg.mxu0
    %v2286 = vlaneseq
    %v2287 = vshrl.u32 %v2286, 7
    %v2288 = vsub.s32 0, %v2287
    %v2289 = vrot.slane %v2284, %v2288
    %2290 = vmatprep.subr.mxu0 0.0
    %2291 = vmatpush1.msra.mxu0 %v122
    %2292 = vmatprep.subr.mxu0 0.0
    %2293 = vmatpush1.msra.mxu0 %v123
    %2294 = vmatprep.subr.mxu0 0.0
    %2295 = vmatpush1.msra.mxu0 %v124
    %2296 = vmatprep.subr.mxu0 0.0
    %2297 = vmatpush1.msra.mxu0 %v125
    %2298 = vmatprep.subr.mxu0 0.0
    %2299 = vmatpush1.msra.mxu0 0.0
    %2300 = vmatprep.subr.mxu0 0.0
    %2301 = vmatpush1.msra.mxu0 0.0
    %2302 = vmatprep.subr.mxu0 0.0
    %2303 = vmatpush1.msra.mxu0 0.0
    %2304 = vmatprep.subr.mxu0 0.0
    %2305 = vmatpush1.msra.mxu0 0.0
    %2306 = vmatprep.subr.mxu0 0.0
    %2307 = vmatpush1.msra.mxu0 0.0
    %2308 = vmatprep.subr.mxu0 0.0
    %2309 = vmatpush1.msra.mxu0 0.0
    %2310 = vmatprep.subr.mxu0 0.0
    %2311 = vmatpush1.msra.mxu0 0.0
    %2312 = vmatprep.subr.mxu0 0.0
    %2313 = vmatpush1.msra.mxu0 0.0
    %2314 = vmatprep.subr.mxu0 0.0
    %2315 = vmatpush1.msra.mxu0 0.0
    %2316 = vmatprep.subr.mxu0 0.0
    %2317 = vmatpush1.msra.mxu0 0.0
    %2318 = vmatprep.subr.mxu0 0.0
    %2319 = vmatpush1.msra.mxu0 0.0
    %2320 = vmatprep.subr.mxu0 0.0
    %2321 = vmatpush1.msra.mxu0 0.0
    %2322 = vmatprep.subr.mxu0 0.0
    %2323 = vmatpush1.msra.mxu0 0.0
    %2324 = vmatprep.subr.mxu0 0.0
    %2325 = vmatpush1.msra.mxu0 0.0
    %2326 = vmatprep.subr.mxu0 0.0
    %2327 = vmatpush1.msra.mxu0 0.0
    %2328 = vmatprep.subr.mxu0 0.0
    %2329 = vmatpush1.msra.mxu0 0.0
    %2330 = vmatprep.subr.mxu0 0.0
    %2331 = vmatpush1.msra.mxu0 0.0
    %2332 = vmatprep.subr.mxu0 0.0
    %2333 = vmatpush1.msra.mxu0 0.0
    %2334 = vmatprep.subr.mxu0 0.0
    %2335 = vmatpush1.msra.mxu0 0.0
    %2336 = vmatprep.subr.mxu0 0.0
    %2337 = vmatpush1.msra.mxu0 0.0
    %2338 = vmatprep.subr.mxu0 0.0
    %2339 = vmatpush1.msra.mxu0 0.0
    %2340 = vmatprep.subr.mxu0 0.0
    %2341 = vmatpush1.msra.mxu0 0.0
    %2342 = vmatprep.subr.mxu0 0.0
    %2343 = vmatpush1.msra.mxu0 0.0
    %2344 = vmatprep.subr.mxu0 0.0
    %2345 = vmatpush1.msra.mxu0 0.0
    %2346 = vmatprep.subr.mxu0 0.0
    %2347 = vmatpush1.msra.mxu0 0.0
    %2348 = vmatprep.subr.mxu0 0.0
    %2349 = vmatpush1.msra.mxu0 0.0
    %2350 = vmatprep.subr.mxu0 0.0
    %2351 = vmatpush1.msra.mxu0 0.0
    %2352 = vmatprep.subr.mxu0 0.0
    %2353 = vmatpush1.msra.mxu0 0.0
    %2354 = vmatprep.mubr.f32.mxu0 0.0
    %2355 = vmatmul.mubr.f32.gmra.mrb[0].mxu0 %v2101
    %v2356 = vpop.f32.mrb[0].mxu0
    %v2357 = vadd.f32 0.0, %v2356
    %v2358 = vpop.f32.mrb[0].mxu0
    %2359 = vdwg.mxu0
    %v2360 = vadd.f32 %v2289, %v2357
    %v2361 = vxor.u32 %v2360, 2147483648
    %v2362 = vmul.f32 %v2361, 1.442695
    %v2363 = vpow.pop %v2362
    %v2364 = vadd.f32 %v2363, 1.0
    %v2365 = vrcp.pop %v2364
    %v2366 = vmul.f32 1.0, %v2365
    %v2367 = vtanh.pop %v2360
    %v2370 = vrot.slane %v2080, 7
    %v2371 = vrot.slane %v2081, 6
    %v2372 = vsel %vm377, %v2371, %v2370
    %v2374 = vmul.f32 %v2366, %v2372
    %2376 = vrot.lane.b32.xlu0 %v2367, 64
    %v2377 = vpop.permute.xlu0 %2376
    %v2379 = vmul.f32 %v2366, %v2377
    %2381 = vrot.lane.b32.xlu0 %v2379, 32
    %v2382 = vpop.permute.xlu0 %2381
    %v2384 = vadd.f32 %v2374, %v2382
    %v2385 = vtanh.pop %v2384
    %2387 = vrot.lane.b32.xlu0 %v2385, 64
    %v2388 = vpop.permute.xlu0 %2387
    %v2390 = vmul.f32 %v2366, %v2388
    %2392 = vrot.lane.b32.xlu0 %v2390, 32
    %v2393 = vpop.permute.xlu0 %2392
    %v2394 = vsel %vm240, %v2393, 0
    %2396 = vmatprep.subr.mxu0 0.0
    %2397 = vmatpush1.msra.mxu0 %v131
    %2398 = vmatprep.subr.mxu0 0.0
    %2399 = vmatpush1.msra.mxu0 %v132
    %2400 = vmatprep.subr.mxu0 0.0
    %2401 = vmatpush1.msra.mxu0 %v133
    %2402 = vmatprep.subr.mxu0 0.0
    %2403 = vmatpush1.msra.mxu0 %v134
    %2404 = vmatprep.subr.mxu0 0.0
    %2405 = vmatpush1.msra.mxu0 0.0
    %2406 = vmatprep.subr.mxu0 0.0
    %2407 = vmatpush1.msra.mxu0 0.0
    %2408 = vmatprep.subr.mxu0 0.0
    %2409 = vmatpush1.msra.mxu0 0.0
    %2410 = vmatprep.subr.mxu0 0.0
    %2411 = vmatpush1.msra.mxu0 0.0
    %2412 = vmatprep.subr.mxu0 0.0
    %2413 = vmatpush1.msra.mxu0 0.0
    %2414 = vmatprep.subr.mxu0 0.0
    %2415 = vmatpush1.msra.mxu0 0.0
    %2416 = vmatprep.subr.mxu0 0.0
    %2417 = vmatpush1.msra.mxu0 0.0
    %2418 = vmatprep.subr.mxu0 0.0
    %2419 = vmatpush1.msra.mxu0 0.0
    %2420 = vmatprep.subr.mxu0 0.0
    %2421 = vmatpush1.msra.mxu0 0.0
    %2422 = vmatprep.subr.mxu0 0.0
    %2423 = vmatpush1.msra.mxu0 0.0
    %2424 = vmatprep.subr.mxu0 0.0
    %2425 = vmatpush1.msra.mxu0 0.0
    %2426 = vmatprep.subr.mxu0 0.0
    %2427 = vmatpush1.msra.mxu0 0.0
    %2428 = vmatprep.subr.mxu0 0.0
    %2429 = vmatpush1.msra.mxu0 0.0
    %2430 = vmatprep.subr.mxu0 0.0
    %2431 = vmatpush1.msra.mxu0 0.0
    %2432 = vmatprep.subr.mxu0 0.0
    %2433 = vmatpush1.msra.mxu0 0.0
    %2434 = vmatprep.subr.mxu0 0.0
    %2435 = vmatpush1.msra.mxu0 0.0
    %2436 = vmatprep.subr.mxu0 0.0
    %2437 = vmatpush1.msra.mxu0 0.0
    %2438 = vmatprep.subr.mxu0 0.0
    %2439 = vmatpush1.msra.mxu0 0.0
    %2440 = vmatprep.subr.mxu0 0.0
    %2441 = vmatpush1.msra.mxu0 0.0
    %2442 = vmatprep.subr.mxu0 0.0
    %2443 = vmatpush1.msra.mxu0 0.0
    %2444 = vmatprep.subr.mxu0 0.0
    %2445 = vmatpush1.msra.mxu0 0.0
    %2446 = vmatprep.subr.mxu0 0.0
    %2447 = vmatpush1.msra.mxu0 0.0
    %2448 = vmatprep.subr.mxu0 0.0
    %2449 = vmatpush1.msra.mxu0 0.0
    %2450 = vmatprep.subr.mxu0 0.0
    %2451 = vmatpush1.msra.mxu0 0.0
    %2452 = vmatprep.subr.mxu0 0.0
    %2453 = vmatpush1.msra.mxu0 0.0
    %2454 = vmatprep.subr.mxu0 0.0
    %2455 = vmatpush1.msra.mxu0 0.0
    %2456 = vmatprep.subr.mxu0 0.0
    %2457 = vmatpush1.msra.mxu0 0.0
    %2458 = vmatprep.subr.mxu0 0.0
    %2459 = vmatpush1.msra.mxu0 0.0
    %2460 = vmatprep.mubr.f32.mxu0 0.0
    %2461 = vmatmul.mubr.f32.gmra.mrb[0].mxu0 %v2394
    %v2462 = vpop.f32.mrb[0].mxu0
    %v2463 = vadd.f32 0.0, %v2462
    %v2464 = vpop.f32.mrb[0].mxu0
    %2465 = vdwg.mxu0
    %v2468 = vunpack.c.l.s4 1966171168
    %v2469 = vunpack.c.0.s8 %v2468
    %v2470 = vlaneseq
    %v2471 = vshrl.u32 %v2470, 7
    %v2472 = vsub.s32 %v2469, %v2471
    %v2473 = vrot.slane %v2463, %v2472
    %v2474 = vcombine.high %v2473, %v2473
    %v2476 = vunpack.c.l.s4 1966171168
    %v2477 = vunpack.c.0.s8 %v2476
    %v2478 = vlaneseq
    %v2479 = vshrl.u32 %v2478, 7
    %v2480 = vsub.s32 %v2477, %v2479
    %v2481 = vrot.slane %v2473, %v2480
    %v2483 = vunpack.c.l.s4 1966171168
    %v2484 = vunpack.c.0.s8 %v2483
    %v2485 = vlaneseq
    %v2486 = vshrl.u32 %v2485, 7
    %v2487 = vsub.s32 %v2484, %v2486
    %v2488 = vrot.slane %v2474, %v2487
    %v2489 = vlaneseq
    %v2490 = vshrl.u32 %v2489, 7
    %v2491 = vsub.s32 0, %v2490
    %v2492 = vrot.slane %v2481, %v2491
    %v2493 = vlaneseq
    %v2494 = vshrl.u32 %v2493, 7
    %v2495 = vsub.s32 0, %v2494
    %v2496 = vrot.slane %v2488, %v2495
    %v2499 = vadd.f32 %v2207, %v2492
    %v2500 = vadd.f32 %v2208, %v2496
    %v2501 = vtanh.pop %v2499
    %v2502 = vtanh.pop %v2500
    %v2504 = vlaneseq
    %v2505 = vshrl.u32 %v2504, 7
    %v2506 = vsub.s32 0, %v2505
    %v2507 = vrot.slane %v135, %v2506
    %v2509 = vmul.f32 %v2501, %v2507
    %v2510 = vmul.f32 %v2502, %v2507
    %v2511 = vsel %vm240, %v2509, 0.0
    %2512 = vadd.xlane.f32.xlu0 %v2511
    %v2513 = vpop.xlane.xlu0 %2512
    %v2514 = vsel %vm240, %v2510, 0.0
    %2515 = vadd.xlane.f32.xlu0 %v2514
    %v2516 = vpop.xlane.xlu0 %2515
    %v2517 = vadd.f32 %v2513, 0.0
    %v2518 = vadd.f32 %v2516, 0.0
    %v2521 = vlaneseq
    %v2522 = vshrl.u32 %v2521, 7
    %v2523 = vsub.s32 %v2210, %v2522
    %v2524 = vrot.slane %v2517, %v2523
    %v2525 = vlaneseq
    %v2526 = vshrl.u32 %v2525, 7
    %v2527 = vsub.s32 %v2210, %v2526
    %v2528 = vrot.slane %v2518, %v2527
    %v2529 = vsel %vm377, %v2528, %v2524
    %vm2531 = vcmask 58368
    %v2532 = vsel %vm2531, %v2529, -inf
    %2533 = vmax.xlane.f32.xlu0 %v2532
    %v2534 = vpop.xlane.xlu0 %2533
    %v2536 = vlaneseq
    %v2537 = vshrl.u32 %v2536, 7
    %v2538 = vsub.s32 0, %v2537
    %v2539 = vrot.slane %v2534, %v2538
    %v2540 = vlaneseq
    %v2541 = vshrl.u32 %v2540, 7
    %v2542 = vsub.s32 1, %v2541
    %v2543 = vrot.slane %v2534, %v2542
    %vm2546 = vcmp.eq.f32.partialorder %v2517, %v2539
    %vm2547 = vcmp.eq.f32.partialorder %v2518, %v2543
    %2550 = vbcast.lane.b32.xlu0 %v2211, 256
    %v2551 = vpop.permute.xlu0 %2550
    %v2553 = vsel %vm2546, %v2551, 8.0
    %v2554 = vsel %vm2547, %v2551, 8.0
    %2557 = vset.pattern.permute.xlu0 0
    %2558 = vperm.xlu0 %2557, %v2553
    %v2559 = vpop.permute.xlu0 %2558
    %2560 = vset.pattern.permute.xlu0 0
    %2561 = vperm.xlu0 %2560, %v2554
    %v2562 = vpop.permute.xlu0 %2561
    %v2563 = vlaneseq
    %v2564 = vshrl.u32 %v2563, 7
    %v2565 = vsub.s32 %v2210, %v2564
    %v2566 = vrot.slane %v2559, %v2565
    %v2567 = vlaneseq
    %v2568 = vshrl.u32 %v2567, 7
    %v2569 = vsub.s32 %v2210, %v2568
    %v2570 = vrot.slane %v2562, %v2569
    %v2571 = vsel %vm377, %v2570, %v2566
    %v2573 = vsel %vm2531, %v2571, inf
    %2574 = vmin.xlane.f32.xlu0 %v2573
    %v2575 = vpop.xlane.xlu0 %2574
    %v2576 = vcvt.f32.s32.to.zero.pseudo %v2575
    %v2577 = vsub.f32 %v2517, %v2539
    %v2578 = vsub.f32 %v2518, %v2543
    %v2579 = vmul.f32 %v2577, 1.442695
    %v2580 = vpow.pop %v2579
    %v2581 = vmul.f32 %v2578, 1.442695
    %v2582 = vpow.pop %v2581
    %2585 = vset.pattern.permute.xlu0 0
    %2586 = vperm.xlu0 %2585, %v2580
    %v2587 = vpop.permute.xlu0 %2586
    %2588 = vset.pattern.permute.xlu0 0
    %2589 = vperm.xlu0 %2588, %v2582
    %v2590 = vpop.permute.xlu0 %2589
    %v2591 = vlaneseq
    %v2592 = vshrl.u32 %v2591, 7
    %v2593 = vsub.s32 %v2210, %v2592
    %v2594 = vrot.slane %v2587, %v2593
    %v2595 = vlaneseq
    %v2596 = vshrl.u32 %v2595, 7
    %v2597 = vsub.s32 %v2210, %v2596
    %v2598 = vrot.slane %v2590, %v2597
    %v2599 = vsel %vm377, %v2598, %v2594
    %v2601 = vsel %vm2531, %v2599, 0.0
    %2602 = vadd.xlane.f32.xlu0 %v2601
    %v2603 = vpop.xlane.xlu0 %2602
    %v2604 = vlog2.pop %v2603
    %v2605 = vmul.f32 %v2604, 0.6931472
    %v2606 = vsub.f32 0.0, %v2605
    %vm2607 = vcmp.eq.s32.totalorder %v2210, 0
    %v2608 = vsel %vm2607, %v2576, 0
    %vm2609 = vcmp.eq.s32.totalorder %v2210, %v2576
    %v2610 = vsel %vm2609, -1e+30, 0.0
    %v2611 = vsel %vm2609, 1, 0
    %v2612 = vcvt.s32.f32 %v2611
    %v2613 = vlaneseq
    %v2614 = vshrl.u32 %v2613, 7
    %v2615 = vsub.s32 0, %v2614
    %v2616 = vrot.slane %v2612, %v2615
    %2618 = vbcast.lane.b32.xlu0 %v2616, 256
    %v2619 = vpop.permute.xlu0 %2618
    %v2620 = vlaneseq
    %v2621 = vshrl.u32 %v2620, 7
    %v2622 = vsub.s32 1, %v2621
    %v2623 = vrot.slane %v2612, %v2622
    %2625 = vbcast.lane.b32.xlu0 %v2623, 256
    %v2626 = vpop.permute.xlu0 %2625
    %v2627 = vmul.f32 %v2619, %v230
    %v2628 = vmul.f32 %v2626, %v236
    %v2629 = vrot.slane %v2627, 4
    %v2630 = vadd.f32 %v2627, %v2629
    %v2631 = vrot.slane %v2630, 2
    %v2632 = vadd.f32 %v2630, %v2631
    %v2633 = vrot.slane %v2632, 1
    %v2634 = vadd.f32 %v2632, %v2633
    %v2635 = vrot.slane %v2628, 4
    %v2636 = vadd.f32 %v2628, %v2635
    %v2637 = vrot.slane %v2636, 2
    %v2638 = vadd.f32 %v2636, %v2637
    %v2639 = vrot.slane %v2638, 1
    %v2640 = vadd.f32 %v2638, %v2639
    %2641 = vmatprep.subr.mxu0 0.0
    %2642 = vmatpush1.msra.mxu0 %v122
    %2643 = vmatprep.subr.mxu0 0.0
    %2644 = vmatpush1.msra.mxu0 %v123
    %2645 = vmatprep.subr.mxu0 0.0
    %2646 = vmatpush1.msra.mxu0 %v124
    %2647 = vmatprep.subr.mxu0 0.0
    %2648 = vmatpush1.msra.mxu0 %v125
    %2649 = vmatprep.subr.mxu0 0.0
    %2650 = vmatpush1.msra.mxu0 0.0
    %2651 = vmatprep.subr.mxu0 0.0
    %2652 = vmatpush1.msra.mxu0 0.0
    %2653 = vmatprep.subr.mxu0 0.0
    %2654 = vmatpush1.msra.mxu0 0.0
    %2655 = vmatprep.subr.mxu0 0.0
    %2656 = vmatpush1.msra.mxu0 0.0
    %2657 = vmatprep.subr.mxu0 0.0
    %2658 = vmatpush1.msra.mxu0 0.0
    %2659 = vmatprep.subr.mxu0 0.0
    %2660 = vmatpush1.msra.mxu0 0.0
    %2661 = vmatprep.subr.mxu0 0.0
    %2662 = vmatpush1.msra.mxu0 0.0
    %2663 = vmatprep.subr.mxu0 0.0
    %2664 = vmatpush1.msra.mxu0 0.0
    %2665 = vmatprep.subr.mxu0 0.0
    %2666 = vmatpush1.msra.mxu0 0.0
    %2667 = vmatprep.subr.mxu0 0.0
    %2668 = vmatpush1.msra.mxu0 0.0
    %2669 = vmatprep.subr.mxu0 0.0
    %2670 = vmatpush1.msra.mxu0 0.0
    %2671 = vmatprep.subr.mxu0 0.0
    %2672 = vmatpush1.msra.mxu0 0.0
    %2673 = vmatprep.subr.mxu0 0.0
    %2674 = vmatpush1.msra.mxu0 0.0
    %2675 = vmatprep.subr.mxu0 0.0
    %2676 = vmatpush1.msra.mxu0 0.0
    %2677 = vmatprep.subr.mxu0 0.0
    %2678 = vmatpush1.msra.mxu0 0.0
    %2679 = vmatprep.subr.mxu0 0.0
    %2680 = vmatpush1.msra.mxu0 0.0
    %2681 = vmatprep.subr.mxu0 0.0
    %2682 = vmatpush1.msra.mxu0 0.0
    %2683 = vmatprep.subr.mxu0 0.0
    %2684 = vmatpush1.msra.mxu0 0.0
    %2685 = vmatprep.subr.mxu0 0.0
    %2686 = vmatpush1.msra.mxu0 0.0
    %2687 = vmatprep.subr.mxu0 0.0
    %2688 = vmatpush1.msra.mxu0 0.0
    %2689 = vmatprep.subr.mxu0 0.0
    %2690 = vmatpush1.msra.mxu0 0.0
    %2691 = vmatprep.subr.mxu0 0.0
    %2692 = vmatpush1.msra.mxu0 0.0
    %2693 = vmatprep.subr.mxu0 0.0
    %2694 = vmatpush1.msra.mxu0 0.0
    %2695 = vmatprep.subr.mxu0 0.0
    %2696 = vmatpush1.msra.mxu0 0.0
    %2697 = vmatprep.subr.mxu0 0.0
    %2698 = vmatpush1.msra.mxu0 0.0
    %2699 = vmatprep.subr.mxu0 0.0
    %2700 = vmatpush1.msra.mxu0 0.0
    %2701 = vmatprep.subr.mxu0 0.0
    %2702 = vmatpush1.msra.mxu0 0.0
    %2703 = vmatprep.subr.mxu0 0.0
    %2704 = vmatpush1.msra.mxu0 0.0
    %2705 = vmatprep.mubr.f32.mxu0 0.0
    %2706 = vmatmul.mubr.f32.gmra.mrb[0].mxu0 %v2394
    %v2707 = vpop.f32.mrb[0].mxu0
    %v2708 = vadd.f32 0.0, %v2707
    %v2709 = vpop.f32.mrb[0].mxu0
    %2710 = vdwg.mxu0
    %v2712 = vrot.slane %v2708, 1
    %v2715 = vadd.f32 %v2634, %v2708
    %v2716 = vadd.f32 %v2640, %v2712
    %v2717 = vxor.u32 %v2715, 2147483648
    %v2718 = vxor.u32 %v2716, 2147483648
    %v2719 = vmul.f32 %v2717, 1.442695
    %v2720 = vpow.pop %v2719
    %v2721 = vmul.f32 %v2718, 1.442695
    %v2722 = vpow.pop %v2721
    %v2723 = vadd.f32 %v2720, 1.0
    %v2724 = vadd.f32 %v2722, 1.0
    %v2725 = vrcp.pop %v2723
    %v2726 = vmul.f32 1.0, %v2725
    %v2727 = vrcp.pop %v2724
    %v2728 = vmul.f32 1.0, %v2727
    %v2729 = vtanh.pop %v2715
    %v2730 = vtanh.pop %v2716
    %v2732 = vrot.slane %v2384, 1
    %v2735 = vmul.f32 %v2726, %v2384
    %v2736 = vmul.f32 %v2728, %v2732
    %2739 = vrot.lane.b32.xlu0 %v2729, 64
    %v2740 = vpop.permute.xlu0 %2739
    %2741 = vrot.lane.b32.xlu0 %v2730, 64
    %v2742 = vpop.permute.xlu0 %2741
    %v2745 = vmul.f32 %v2726, %v2740
    %v2746 = vmul.f32 %v2728, %v2742
    %2749 = vrot.lane.b32.xlu0 %v2745, 32
    %v2750 = vpop.permute.xlu0 %2749
    %2751 = vrot.lane.b32.xlu0 %v2746, 32
    %v2752 = vpop.permute.xlu0 %2751
    %v2755 = vadd.f32 %v2735, %v2750
    %v2756 = vadd.f32 %v2736, %v2752
    %v2757 = vtanh.pop %v2755
    %v2758 = vtanh.pop %v2756
    %2761 = vrot.lane.b32.xlu0 %v2757, 64
    %v2762 = vpop.permute.xlu0 %2761
    %2763 = vrot.lane.b32.xlu0 %v2758, 64
    %v2764 = vpop.permute.xlu0 %2763
    %v2767 = vmul.f32 %v2726, %v2762
    %v2768 = vmul.f32 %v2728, %v2764
    %v2771 = vrot.slane %v2768, 7
    %v2772 = vsel %vm377, %v2771, %v2767
    %2773 = vrot.lane.b32.xlu0 %v2772, 32
    %v2774 = vpop.permute.xlu0 %2773
    %v2775 = vsel %vm240, %v2774, 0
    %2777 = vmatprep.subr.mxu0 0.0
    %2778 = vmatpush1.msra.mxu0 %v131
    %2779 = vmatprep.subr.mxu0 0.0
    %2780 = vmatpush1.msra.mxu0 %v132
    %2781 = vmatprep.subr.mxu0 0.0
    %2782 = vmatpush1.msra.mxu0 %v133
    %2783 = vmatprep.subr.mxu0 0.0
    %2784 = vmatpush1.msra.mxu0 %v134
    %2785 = vmatprep.subr.mxu0 0.0
    %2786 = vmatpush1.msra.mxu0 0.0
    %2787 = vmatprep.subr.mxu0 0.0
    %2788 = vmatpush1.msra.mxu0 0.0
    %2789 = vmatprep.subr.mxu0 0.0
    %2790 = vmatpush1.msra.mxu0 0.0
    %2791 = vmatprep.subr.mxu0 0.0
    %2792 = vmatpush1.msra.mxu0 0.0
    %2793 = vmatprep.subr.mxu0 0.0
    %2794 = vmatpush1.msra.mxu0 0.0
    %2795 = vmatprep.subr.mxu0 0.0
    %2796 = vmatpush1.msra.mxu0 0.0
    %2797 = vmatprep.subr.mxu0 0.0
    %2798 = vmatpush1.msra.mxu0 0.0
    %2799 = vmatprep.subr.mxu0 0.0
    %2800 = vmatpush1.msra.mxu0 0.0
    %2801 = vmatprep.subr.mxu0 0.0
    %2802 = vmatpush1.msra.mxu0 0.0
    %2803 = vmatprep.subr.mxu0 0.0
    %2804 = vmatpush1.msra.mxu0 0.0
    %2805 = vmatprep.subr.mxu0 0.0
    %2806 = vmatpush1.msra.mxu0 0.0
    %2807 = vmatprep.subr.mxu0 0.0
    %2808 = vmatpush1.msra.mxu0 0.0
    %2809 = vmatprep.subr.mxu0 0.0
    %2810 = vmatpush1.msra.mxu0 0.0
    %2811 = vmatprep.subr.mxu0 0.0
    %2812 = vmatpush1.msra.mxu0 0.0
    %2813 = vmatprep.subr.mxu0 0.0
    %2814 = vmatpush1.msra.mxu0 0.0
    %2815 = vmatprep.subr.mxu0 0.0
    %2816 = vmatpush1.msra.mxu0 0.0
    %2817 = vmatprep.subr.mxu0 0.0
    %2818 = vmatpush1.msra.mxu0 0.0
    %2819 = vmatprep.subr.mxu0 0.0
    %2820 = vmatpush1.msra.mxu0 0.0
    %2821 = vmatprep.subr.mxu0 0.0
    %2822 = vmatpush1.msra.mxu0 0.0
    %2823 = vmatprep.subr.mxu0 0.0
    %2824 = vmatpush1.msra.mxu0 0.0
    %2825 = vmatprep.subr.mxu0 0.0
    %2826 = vmatpush1.msra.mxu0 0.0
    %2827 = vmatprep.subr.mxu0 0.0
    %2828 = vmatpush1.msra.mxu0 0.0
    %2829 = vmatprep.subr.mxu0 0.0
    %2830 = vmatpush1.msra.mxu0 0.0
    %2831 = vmatprep.subr.mxu0 0.0
    %2832 = vmatpush1.msra.mxu0 0.0
    %2833 = vmatprep.subr.mxu0 0.0
    %2834 = vmatpush1.msra.mxu0 0.0
    %2835 = vmatprep.subr.mxu0 0.0
    %2836 = vmatpush1.msra.mxu0 0.0
    %2837 = vmatprep.subr.mxu0 0.0
    %2838 = vmatpush1.msra.mxu0 0.0
    %2839 = vmatprep.subr.mxu0 0.0
    %2840 = vmatpush1.msra.mxu0 0.0
    %2841 = vmatprep.mubr.f32.mxu0 0.0
    %2842 = vmatmul.mubr.f32.gmra.mrb[0].mxu0 %v2775
    %v2843 = vpop.f32.mrb[0].mxu0
    %v2844 = vadd.f32 0.0, %v2843
    %v2845 = vpop.f32.mrb[0].mxu0
    %2846 = vdwg.mxu0
    %v2849 = vunpack.c.l.s4 1966171168
    %v2850 = vunpack.c.0.s8 %v2849
    %v2851 = vlaneseq
    %v2852 = vshrl.u32 %v2851, 7
    %v2853 = vsub.s32 %v2850, %v2852
    %v2854 = vrot.slane %v2844, %v2853
    %v2855 = vcombine.high %v2854, %v2854
    %v2857 = vunpack.c.l.s4 1966171168
    %v2858 = vunpack.c.0.s8 %v2857
    %v2859 = vlaneseq
    %v2860 = vshrl.u32 %v2859, 7
    %v2861 = vsub.s32 %v2858, %v2860
    %v2862 = vrot.slane %v2854, %v2861
    %v2864 = vunpack.c.l.s4 1966171168
    %v2865 = vunpack.c.0.s8 %v2864
    %v2866 = vlaneseq
    %v2867 = vshrl.u32 %v2866, 7
    %v2868 = vsub.s32 %v2865, %v2867
    %v2869 = vrot.slane %v2855, %v2868
    %v2870 = vlaneseq
    %v2871 = vshrl.u32 %v2870, 7
    %v2872 = vsub.s32 0, %v2871
    %v2873 = vrot.slane %v2862, %v2872
    %v2874 = vlaneseq
    %v2875 = vshrl.u32 %v2874, 7
    %v2876 = vsub.s32 0, %v2875
    %v2877 = vrot.slane %v2869, %v2876
    %v2880 = vadd.f32 %v2207, %v2873
    %v2881 = vadd.f32 %v2208, %v2877
    %v2882 = vtanh.pop %v2880
    %v2883 = vtanh.pop %v2881
    %v2884 = vmul.f32 %v2882, %v2507
    %v2885 = vmul.f32 %v2883, %v2507
    %v2886 = vsel %vm240, %v2884, 0.0
    %2887 = vadd.xlane.f32.xlu0 %v2886
    %v2888 = vpop.xlane.xlu0 %2887
    %v2889 = vsel %vm240, %v2885, 0.0
    %2890 = vadd.xlane.f32.xlu0 %v2889
    %v2891 = vpop.xlane.xlu0 %2890
    %v2893 = vlaneseq
    %v2894 = vshrl.u32 %v2893, 7
    %v2895 = vsub.s32 0, %v2894
    %v2896 = vrot.slane %v2610, %v2895
    %2898 = vbcast.lane.b32.xlu0 %v2896, 256
    %v2899 = vpop.permute.xlu0 %2898
    %v2900 = vlaneseq
    %v2901 = vshrl.u32 %v2900, 7
    %v2902 = vsub.s32 1, %v2901
    %v2903 = vrot.slane %v2610, %v2902
    %2905 = vbcast.lane.b32.xlu0 %v2903, 256
    %v2906 = vpop.permute.xlu0 %2905
    %v2909 = vadd.f32 %v2888, %v2899
    %v2910 = vadd.f32 %v2891, %v2906
    %2913 = vset.pattern.permute.xlu0 0
    %2914 = vperm.xlu0 %2913, %v2909
    %v2915 = vpop.permute.xlu0 %2914
    %2916 = vset.pattern.permute.xlu0 0
    %2917 = vperm.xlu0 %2916, %v2910
    %v2918 = vpop.permute.xlu0 %2917
    %v2919 = vlaneseq
    %v2920 = vshrl.u32 %v2919, 7
    %v2921 = vsub.s32 %v2210, %v2920
    %v2922 = vrot.slane %v2915, %v2921
    %v2923 = vlaneseq
    %v2924 = vshrl.u32 %v2923, 7
    %v2925 = vsub.s32 %v2210, %v2924
    %v2926 = vrot.slane %v2918, %v2925
    %v2927 = vsel %vm377, %v2926, %v2922
    %v2929 = vsel %vm2531, %v2927, -inf
    %2930 = vmax.xlane.f32.xlu0 %v2929
    %v2931 = vpop.xlane.xlu0 %2930
    %v2933 = vlaneseq
    %v2934 = vshrl.u32 %v2933, 7
    %v2935 = vsub.s32 0, %v2934
    %v2936 = vrot.slane %v2931, %v2935
    %v2937 = vlaneseq
    %v2938 = vshrl.u32 %v2937, 7
    %v2939 = vsub.s32 1, %v2938
    %v2940 = vrot.slane %v2931, %v2939
    %vm2943 = vcmp.eq.f32.partialorder %v2909, %v2936
    %vm2944 = vcmp.eq.f32.partialorder %v2910, %v2940
    %v2945 = vsel %vm2943, %v2551, 8.0
    %v2946 = vsel %vm2944, %v2551, 8.0
    %2949 = vset.pattern.permute.xlu0 0
    %2950 = vperm.xlu0 %2949, %v2945
    %v2951 = vpop.permute.xlu0 %2950
    %2952 = vset.pattern.permute.xlu0 0
    %2953 = vperm.xlu0 %2952, %v2946
    %v2954 = vpop.permute.xlu0 %2953
    %v2955 = vlaneseq
    %v2956 = vshrl.u32 %v2955, 7
    %v2957 = vsub.s32 %v2210, %v2956
    %v2958 = vrot.slane %v2951, %v2957
    %v2959 = vlaneseq
    %v2960 = vshrl.u32 %v2959, 7
    %v2961 = vsub.s32 %v2210, %v2960
    %v2962 = vrot.slane %v2954, %v2961
    %v2963 = vsel %vm377, %v2962, %v2958
    %v2965 = vsel %vm2531, %v2963, inf
    %2966 = vmin.xlane.f32.xlu0 %v2965
    %v2967 = vpop.xlane.xlu0 %2966
    %v2968 = vcvt.f32.s32.to.zero.pseudo %v2967
    %v2969 = vsub.f32 %v2909, %v2936
    %v2970 = vsub.f32 %v2910, %v2940
    %v2971 = vmul.f32 %v2969, 1.442695
    %v2972 = vpow.pop %v2971
    %v2973 = vmul.f32 %v2970, 1.442695
    %v2974 = vpow.pop %v2973
    %2977 = vset.pattern.permute.xlu0 0
    %2978 = vperm.xlu0 %2977, %v2972
    %v2979 = vpop.permute.xlu0 %2978
    %2980 = vset.pattern.permute.xlu0 0
    %2981 = vperm.xlu0 %2980, %v2974
    %v2982 = vpop.permute.xlu0 %2981
    %v2983 = vlaneseq
    %v2984 = vshrl.u32 %v2983, 7
    %v2985 = vsub.s32 %v2210, %v2984
    %v2986 = vrot.slane %v2979, %v2985
    %v2987 = vlaneseq
    %v2988 = vshrl.u32 %v2987, 7
    %v2989 = vsub.s32 %v2210, %v2988
    %v2990 = vrot.slane %v2982, %v2989
    %v2991 = vsel %vm377, %v2990, %v2986
    %v2993 = vsel %vm2531, %v2991, 0.0
    %2994 = vadd.xlane.f32.xlu0 %v2993
    %v2995 = vpop.xlane.xlu0 %2994
    %v2996 = vlog2.pop %v2995
    %v2997 = vmul.f32 %v2996, 0.6931472
    %v2998 = vsub.f32 %v2606, %v2997
    %vm2999 = vcmp.eq.s32.totalorder %v2210, 1
    %v3000 = vsel %vm2999, %v2968, %v2608
    %vm3001 = vcmp.eq.s32.totalorder %v2210, %v2968
    %v3002 = vsel %vm3001, -1e+30, %v2610
    %v3003 = vsel %vm3001, 1, 0
    %v3004 = vcvt.s32.f32 %v3003
    %v3005 = vlaneseq
    %v3006 = vshrl.u32 %v3005, 7
    %v3007 = vsub.s32 0, %v3006
    %v3008 = vrot.slane %v3004, %v3007
    %3010 = vbcast.lane.b32.xlu0 %v3008, 256
    %v3011 = vpop.permute.xlu0 %3010
    %v3012 = vlaneseq
    %v3013 = vshrl.u32 %v3012, 7
    %v3014 = vsub.s32 1, %v3013
    %v3015 = vrot.slane %v3004, %v3014
    %3017 = vbcast.lane.b32.xlu0 %v3015, 256
    %v3018 = vpop.permute.xlu0 %3017
    %v3019 = vmul.f32 %v3011, %v230
    %v3020 = vmul.f32 %v3018, %v236
    %v3021 = vrot.slane %v3019, 4
    %v3022 = vadd.f32 %v3019, %v3021
    %v3023 = vrot.slane %v3022, 2
    %v3024 = vadd.f32 %v3022, %v3023
    %v3025 = vrot.slane %v3024, 1
    %v3026 = vadd.f32 %v3024, %v3025
    %v3027 = vrot.slane %v3020, 4
    %v3028 = vadd.f32 %v3020, %v3027
    %v3029 = vrot.slane %v3028, 2
    %v3030 = vadd.f32 %v3028, %v3029
    %v3031 = vrot.slane %v3030, 1
    %v3032 = vadd.f32 %v3030, %v3031
    %3033 = vmatprep.subr.mxu0 0.0
    %3034 = vmatpush1.msra.mxu0 %v122
    %3035 = vmatprep.subr.mxu0 0.0
    %3036 = vmatpush1.msra.mxu0 %v123
    %3037 = vmatprep.subr.mxu0 0.0
    %3038 = vmatpush1.msra.mxu0 %v124
    %3039 = vmatprep.subr.mxu0 0.0
    %3040 = vmatpush1.msra.mxu0 %v125
    %3041 = vmatprep.subr.mxu0 0.0
    %3042 = vmatpush1.msra.mxu0 0.0
    %3043 = vmatprep.subr.mxu0 0.0
    %3044 = vmatpush1.msra.mxu0 0.0
    %3045 = vmatprep.subr.mxu0 0.0
    %3046 = vmatpush1.msra.mxu0 0.0
    %3047 = vmatprep.subr.mxu0 0.0
    %3048 = vmatpush1.msra.mxu0 0.0
    %3049 = vmatprep.subr.mxu0 0.0
    %3050 = vmatpush1.msra.mxu0 0.0
    %3051 = vmatprep.subr.mxu0 0.0
    %3052 = vmatpush1.msra.mxu0 0.0
    %3053 = vmatprep.subr.mxu0 0.0
    %3054 = vmatpush1.msra.mxu0 0.0
    %3055 = vmatprep.subr.mxu0 0.0
    %3056 = vmatpush1.msra.mxu0 0.0
    %3057 = vmatprep.subr.mxu0 0.0
    %3058 = vmatpush1.msra.mxu0 0.0
    %3059 = vmatprep.subr.mxu0 0.0
    %3060 = vmatpush1.msra.mxu0 0.0
    %3061 = vmatprep.subr.mxu0 0.0
    %3062 = vmatpush1.msra.mxu0 0.0
    %3063 = vmatprep.subr.mxu0 0.0
    %3064 = vmatpush1.msra.mxu0 0.0
    %3065 = vmatprep.subr.mxu0 0.0
    %3066 = vmatpush1.msra.mxu0 0.0
    %3067 = vmatprep.subr.mxu0 0.0
    %3068 = vmatpush1.msra.mxu0 0.0
    %3069 = vmatprep.subr.mxu0 0.0
    %3070 = vmatpush1.msra.mxu0 0.0
    %3071 = vmatprep.subr.mxu0 0.0
    %3072 = vmatpush1.msra.mxu0 0.0
    %3073 = vmatprep.subr.mxu0 0.0
    %3074 = vmatpush1.msra.mxu0 0.0
    %3075 = vmatprep.subr.mxu0 0.0
    %3076 = vmatpush1.msra.mxu0 0.0
    %3077 = vmatprep.subr.mxu0 0.0
    %3078 = vmatpush1.msra.mxu0 0.0
    %3079 = vmatprep.subr.mxu0 0.0
    %3080 = vmatpush1.msra.mxu0 0.0
    %3081 = vmatprep.subr.mxu0 0.0
    %3082 = vmatpush1.msra.mxu0 0.0
    %3083 = vmatprep.subr.mxu0 0.0
    %3084 = vmatpush1.msra.mxu0 0.0
    %3085 = vmatprep.subr.mxu0 0.0
    %3086 = vmatpush1.msra.mxu0 0.0
    %3087 = vmatprep.subr.mxu0 0.0
    %3088 = vmatpush1.msra.mxu0 0.0
    %3089 = vmatprep.subr.mxu0 0.0
    %3090 = vmatpush1.msra.mxu0 0.0
    %3091 = vmatprep.subr.mxu0 0.0
    %3092 = vmatpush1.msra.mxu0 0.0
    %3093 = vmatprep.subr.mxu0 0.0
    %3094 = vmatpush1.msra.mxu0 0.0
    %3095 = vmatprep.subr.mxu0 0.0
    %3096 = vmatpush1.msra.mxu0 0.0
    %3097 = vmatprep.mubr.f32.mxu0 0.0
    %3098 = vmatmul.mubr.f32.gmra.mrb[0].mxu0 %v2775
    %v3099 = vpop.f32.mrb[0].mxu0
    %v3100 = vadd.f32 0.0, %v3099
    %v3101 = vpop.f32.mrb[0].mxu0
    %3102 = vdwg.mxu0
    %v3104 = vrot.slane %v3100, 1
    %v3107 = vadd.f32 %v3026, %v3100
    %v3108 = vadd.f32 %v3032, %v3104
    %v3109 = vxor.u32 %v3107, 2147483648
    %v3110 = vxor.u32 %v3108, 2147483648
    %v3111 = vmul.f32 %v3109, 1.442695
    %v3112 = vpow.pop %v3111
    %v3113 = vmul.f32 %v3110, 1.442695
    %v3114 = vpow.pop %v3113
    %v3115 = vadd.f32 %v3112, 1.0
    %v3116 = vadd.f32 %v3114, 1.0
    %v3117 = vrcp.pop %v3115
    %v3118 = vmul.f32 1.0, %v3117
    %v3119 = vrcp.pop %v3116
    %v3120 = vmul.f32 1.0, %v3119
    %v3121 = vtanh.pop %v3107
    %v3122 = vtanh.pop %v3108
    %v3123 = vmul.f32 %v3118, %v2755
    %v3124 = vmul.f32 %v3120, %v2756
    %3127 = vrot.lane.b32.xlu0 %v3121, 64
    %v3128 = vpop.permute.xlu0 %3127
    %3129 = vrot.lane.b32.xlu0 %v3122, 64
    %v3130 = vpop.permute.xlu0 %3129
    %v3133 = vmul.f32 %v3118, %v3128
    %v3134 = vmul.f32 %v3120, %v3130
    %3137 = vrot.lane.b32.xlu0 %v3133, 32
    %v3138 = vpop.permute.xlu0 %3137
    %3139 = vrot.lane.b32.xlu0 %v3134, 32
    %v3140 = vpop.permute.xlu0 %3139
    %v3143 = vadd.f32 %v3123, %v3138
    %v3144 = vadd.f32 %v3124, %v3140
    %v3145 = vtanh.pop %v3143
    %v3146 = vtanh.pop %v3144
    %3149 = vrot.lane.b32.xlu0 %v3145, 64
    %v3150 = vpop.permute.xlu0 %3149
    %3151 = vrot.lane.b32.xlu0 %v3146, 64
    %v3152 = vpop.permute.xlu0 %3151
    %v3155 = vmul.f32 %v3118, %v3150
    %v3156 = vmul.f32 %v3120, %v3152
    %v3159 = vrot.slane %v3156, 7
    %v3160 = vsel %vm377, %v3159, %v3155
    %3161 = vrot.lane.b32.xlu0 %v3160, 32
    %v3162 = vpop.permute.xlu0 %3161
    %v3163 = vsel %vm240, %v3162, 0
    %3165 = vmatprep.subr.mxu0 0.0
    %3166 = vmatpush1.msra.mxu0 %v131
    %3167 = vmatprep.subr.mxu0 0.0
    %3168 = vmatpush1.msra.mxu0 %v132
    %3169 = vmatprep.subr.mxu0 0.0
    %3170 = vmatpush1.msra.mxu0 %v133
    %3171 = vmatprep.subr.mxu0 0.0
    %3172 = vmatpush1.msra.mxu0 %v134
    %3173 = vmatprep.subr.mxu0 0.0
    %3174 = vmatpush1.msra.mxu0 0.0
    %3175 = vmatprep.subr.mxu0 0.0
    %3176 = vmatpush1.msra.mxu0 0.0
    %3177 = vmatprep.subr.mxu0 0.0
    %3178 = vmatpush1.msra.mxu0 0.0
    %3179 = vmatprep.subr.mxu0 0.0
    %3180 = vmatpush1.msra.mxu0 0.0
    %3181 = vmatprep.subr.mxu0 0.0
    %3182 = vmatpush1.msra.mxu0 0.0
    %3183 = vmatprep.subr.mxu0 0.0
    %3184 = vmatpush1.msra.mxu0 0.0
    %3185 = vmatprep.subr.mxu0 0.0
    %3186 = vmatpush1.msra.mxu0 0.0
    %3187 = vmatprep.subr.mxu0 0.0
    %3188 = vmatpush1.msra.mxu0 0.0
    %3189 = vmatprep.subr.mxu0 0.0
    %3190 = vmatpush1.msra.mxu0 0.0
    %3191 = vmatprep.subr.mxu0 0.0
    %3192 = vmatpush1.msra.mxu0 0.0
    %3193 = vmatprep.subr.mxu0 0.0
    %3194 = vmatpush1.msra.mxu0 0.0
    %3195 = vmatprep.subr.mxu0 0.0
    %3196 = vmatpush1.msra.mxu0 0.0
    %3197 = vmatprep.subr.mxu0 0.0
    %3198 = vmatpush1.msra.mxu0 0.0
    %3199 = vmatprep.subr.mxu0 0.0
    %3200 = vmatpush1.msra.mxu0 0.0
    %3201 = vmatprep.subr.mxu0 0.0
    %3202 = vmatpush1.msra.mxu0 0.0
    %3203 = vmatprep.subr.mxu0 0.0
    %3204 = vmatpush1.msra.mxu0 0.0
    %3205 = vmatprep.subr.mxu0 0.0
    %3206 = vmatpush1.msra.mxu0 0.0
    %3207 = vmatprep.subr.mxu0 0.0
    %3208 = vmatpush1.msra.mxu0 0.0
    %3209 = vmatprep.subr.mxu0 0.0
    %3210 = vmatpush1.msra.mxu0 0.0
    %3211 = vmatprep.subr.mxu0 0.0
    %3212 = vmatpush1.msra.mxu0 0.0
    %3213 = vmatprep.subr.mxu0 0.0
    %3214 = vmatpush1.msra.mxu0 0.0
    %3215 = vmatprep.subr.mxu0 0.0
    %3216 = vmatpush1.msra.mxu0 0.0
    %3217 = vmatprep.subr.mxu0 0.0
    %3218 = vmatpush1.msra.mxu0 0.0
    %3219 = vmatprep.subr.mxu0 0.0
    %3220 = vmatpush1.msra.mxu0 0.0
    %3221 = vmatprep.subr.mxu0 0.0
    %3222 = vmatpush1.msra.mxu0 0.0
    %3223 = vmatprep.subr.mxu0 0.0
    %3224 = vmatpush1.msra.mxu0 0.0
    %3225 = vmatprep.subr.mxu0 0.0
    %3226 = vmatpush1.msra.mxu0 0.0
    %3227 = vmatprep.subr.mxu0 0.0
    %3228 = vmatpush1.msra.mxu0 0.0
    %3229 = vmatprep.mubr.f32.mxu0 0.0
    %3230 = vmatmul.mubr.f32.gmra.mrb[0].mxu0 %v3163
    %v3231 = vpop.f32.mrb[0].mxu0
    %v3232 = vadd.f32 0.0, %v3231
    %v3233 = vpop.f32.mrb[0].mxu0
    %3234 = vdwg.mxu0
    %v3237 = vunpack.c.l.s4 1966171168
    %v3238 = vunpack.c.0.s8 %v3237
    %v3239 = vlaneseq
    %v3240 = vshrl.u32 %v3239, 7
    %v3241 = vsub.s32 %v3238, %v3240
    %v3242 = vrot.slane %v3232, %v3241
    %v3243 = vcombine.high %v3242, %v3242
    %v3245 = vunpack.c.l.s4 1966171168
    %v3246 = vunpack.c.0.s8 %v3245
    %v3247 = vlaneseq
    %v3248 = vshrl.u32 %v3247, 7
    %v3249 = vsub.s32 %v3246, %v3248
    %v3250 = vrot.slane %v3242, %v3249
    %v3252 = vunpack.c.l.s4 1966171168
    %v3253 = vunpack.c.0.s8 %v3252
    %v3254 = vlaneseq
    %v3255 = vshrl.u32 %v3254, 7
    %v3256 = vsub.s32 %v3253, %v3255
    %v3257 = vrot.slane %v3243, %v3256
    %v3258 = vlaneseq
    %v3259 = vshrl.u32 %v3258, 7
    %v3260 = vsub.s32 0, %v3259
    %v3261 = vrot.slane %v3250, %v3260
    %v3262 = vlaneseq
    %v3263 = vshrl.u32 %v3262, 7
    %v3264 = vsub.s32 0, %v3263
    %v3265 = vrot.slane %v3257, %v3264
    %v3268 = vadd.f32 %v2207, %v3261
    %v3269 = vadd.f32 %v2208, %v3265
    %v3270 = vtanh.pop %v3268
    %v3271 = vtanh.pop %v3269
    %v3272 = vmul.f32 %v3270, %v2507
    %v3273 = vmul.f32 %v3271, %v2507
    %v3274 = vsel %vm240, %v3272, 0.0
    %3275 = vadd.xlane.f32.xlu0 %v3274
    %v3276 = vpop.xlane.xlu0 %3275
    %v3277 = vsel %vm240, %v3273, 0.0
    %3278 = vadd.xlane.f32.xlu0 %v3277
    %v3279 = vpop.xlane.xlu0 %3278
    %v3281 = vlaneseq
    %v3282 = vshrl.u32 %v3281, 7
    %v3283 = vsub.s32 0, %v3282
    %v3284 = vrot.slane %v3002, %v3283
    %3286 = vbcast.lane.b32.xlu0 %v3284, 256
    %v3287 = vpop.permute.xlu0 %3286
    %v3288 = vlaneseq
    %v3289 = vshrl.u32 %v3288, 7
    %v3290 = vsub.s32 1, %v3289
    %v3291 = vrot.slane %v3002, %v3290
    %3293 = vbcast.lane.b32.xlu0 %v3291, 256
    %v3294 = vpop.permute.xlu0 %3293
    %v3297 = vadd.f32 %v3276, %v3287
    %v3298 = vadd.f32 %v3279, %v3294
    %3301 = vset.pattern.permute.xlu0 0
    %3302 = vperm.xlu0 %3301, %v3297
    %v3303 = vpop.permute.xlu0 %3302
    %3304 = vset.pattern.permute.xlu0 0
    %3305 = vperm.xlu0 %3304, %v3298
    %v3306 = vpop.permute.xlu0 %3305
    %v3307 = vlaneseq
    %v3308 = vshrl.u32 %v3307, 7
    %v3309 = vsub.s32 %v2210, %v3308
    %v3310 = vrot.slane %v3303, %v3309
    %v3311 = vlaneseq
    %v3312 = vshrl.u32 %v3311, 7
    %v3313 = vsub.s32 %v2210, %v3312
    %v3314 = vrot.slane %v3306, %v3313
    %v3315 = vsel %vm377, %v3314, %v3310
    %v3317 = vsel %vm2531, %v3315, -inf
    %3318 = vmax.xlane.f32.xlu0 %v3317
    %v3319 = vpop.xlane.xlu0 %3318
    %v3321 = vlaneseq
    %v3322 = vshrl.u32 %v3321, 7
    %v3323 = vsub.s32 0, %v3322
    %v3324 = vrot.slane %v3319, %v3323
    %v3325 = vlaneseq
    %v3326 = vshrl.u32 %v3325, 7
    %v3327 = vsub.s32 1, %v3326
    %v3328 = vrot.slane %v3319, %v3327
    %vm3331 = vcmp.eq.f32.partialorder %v3297, %v3324
    %vm3332 = vcmp.eq.f32.partialorder %v3298, %v3328
    %v3333 = vsel %vm3331, %v2551, 8.0
    %v3334 = vsel %vm3332, %v2551, 8.0
    %3337 = vset.pattern.permute.xlu0 0
    %3338 = vperm.xlu0 %3337, %v3333
    %v3339 = vpop.permute.xlu0 %3338
    %3340 = vset.pattern.permute.xlu0 0
    %3341 = vperm.xlu0 %3340, %v3334
    %v3342 = vpop.permute.xlu0 %3341
    %v3343 = vlaneseq
    %v3344 = vshrl.u32 %v3343, 7
    %v3345 = vsub.s32 %v2210, %v3344
    %v3346 = vrot.slane %v3339, %v3345
    %v3347 = vlaneseq
    %v3348 = vshrl.u32 %v3347, 7
    %v3349 = vsub.s32 %v2210, %v3348
    %v3350 = vrot.slane %v3342, %v3349
    %v3351 = vsel %vm377, %v3350, %v3346
    %v3353 = vsel %vm2531, %v3351, inf
    %3354 = vmin.xlane.f32.xlu0 %v3353
    %v3355 = vpop.xlane.xlu0 %3354
    %v3356 = vcvt.f32.s32.to.zero.pseudo %v3355
    %v3357 = vsub.f32 %v3297, %v3324
    %v3358 = vsub.f32 %v3298, %v3328
    %v3359 = vmul.f32 %v3357, 1.442695
    %v3360 = vpow.pop %v3359
    %v3361 = vmul.f32 %v3358, 1.442695
    %v3362 = vpow.pop %v3361
    %3365 = vset.pattern.permute.xlu0 0
    %3366 = vperm.xlu0 %3365, %v3360
    %v3367 = vpop.permute.xlu0 %3366
    %3368 = vset.pattern.permute.xlu0 0
    %3369 = vperm.xlu0 %3368, %v3362
    %v3370 = vpop.permute.xlu0 %3369
    %v3371 = vlaneseq
    %v3372 = vshrl.u32 %v3371, 7
    %v3373 = vsub.s32 %v2210, %v3372
    %v3374 = vrot.slane %v3367, %v3373
    %v3375 = vlaneseq
    %v3376 = vshrl.u32 %v3375, 7
    %v3377 = vsub.s32 %v2210, %v3376
    %v3378 = vrot.slane %v3370, %v3377
    %v3379 = vsel %vm377, %v3378, %v3374
    %v3381 = vsel %vm2531, %v3379, 0.0
    %3382 = vadd.xlane.f32.xlu0 %v3381
    %v3383 = vpop.xlane.xlu0 %3382
    %v3384 = vlog2.pop %v3383
    %v3385 = vmul.f32 %v3384, 0.6931472
    %v3386 = vsub.f32 %v2998, %v3385
    %vm3387 = vcmp.eq.s32.totalorder %v2210, 2
    %v3388 = vsel %vm3387, %v3356, %v3000
    %vm3389 = vcmp.eq.s32.totalorder %v2210, %v3356
    %v3390 = vsel %vm3389, -1e+30, %v3002
    %v3391 = vsel %vm3389, 1, 0
    %v3392 = vcvt.s32.f32 %v3391
    %v3393 = vlaneseq
    %v3394 = vshrl.u32 %v3393, 7
    %v3395 = vsub.s32 0, %v3394
    %v3396 = vrot.slane %v3392, %v3395
    %3398 = vbcast.lane.b32.xlu0 %v3396, 256
    %v3399 = vpop.permute.xlu0 %3398
    %v3400 = vlaneseq
    %v3401 = vshrl.u32 %v3400, 7
    %v3402 = vsub.s32 1, %v3401
    %v3403 = vrot.slane %v3392, %v3402
    %3405 = vbcast.lane.b32.xlu0 %v3403, 256
    %v3406 = vpop.permute.xlu0 %3405
    %v3407 = vmul.f32 %v3399, %v230
    %v3408 = vmul.f32 %v3406, %v236
    %v3409 = vrot.slane %v3407, 4
    %v3410 = vadd.f32 %v3407, %v3409
    %v3411 = vrot.slane %v3410, 2
    %v3412 = vadd.f32 %v3410, %v3411
    %v3413 = vrot.slane %v3412, 1
    %v3414 = vadd.f32 %v3412, %v3413
    %v3415 = vrot.slane %v3408, 4
    %v3416 = vadd.f32 %v3408, %v3415
    %v3417 = vrot.slane %v3416, 2
    %v3418 = vadd.f32 %v3416, %v3417
    %v3419 = vrot.slane %v3418, 1
    %v3420 = vadd.f32 %v3418, %v3419
    %3421 = vmatprep.subr.mxu0 0.0
    %3422 = vmatpush1.msra.mxu0 %v122
    %3423 = vmatprep.subr.mxu0 0.0
    %3424 = vmatpush1.msra.mxu0 %v123
    %3425 = vmatprep.subr.mxu0 0.0
    %3426 = vmatpush1.msra.mxu0 %v124
    %3427 = vmatprep.subr.mxu0 0.0
    %3428 = vmatpush1.msra.mxu0 %v125
    %3429 = vmatprep.subr.mxu0 0.0
    %3430 = vmatpush1.msra.mxu0 0.0
    %3431 = vmatprep.subr.mxu0 0.0
    %3432 = vmatpush1.msra.mxu0 0.0
    %3433 = vmatprep.subr.mxu0 0.0
    %3434 = vmatpush1.msra.mxu0 0.0
    %3435 = vmatprep.subr.mxu0 0.0
    %3436 = vmatpush1.msra.mxu0 0.0
    %3437 = vmatprep.subr.mxu0 0.0
    %3438 = vmatpush1.msra.mxu0 0.0
    %3439 = vmatprep.subr.mxu0 0.0
    %3440 = vmatpush1.msra.mxu0 0.0
    %3441 = vmatprep.subr.mxu0 0.0
    %3442 = vmatpush1.msra.mxu0 0.0
    %3443 = vmatprep.subr.mxu0 0.0
    %3444 = vmatpush1.msra.mxu0 0.0
    %3445 = vmatprep.subr.mxu0 0.0
    %3446 = vmatpush1.msra.mxu0 0.0
    %3447 = vmatprep.subr.mxu0 0.0
    %3448 = vmatpush1.msra.mxu0 0.0
    %3449 = vmatprep.subr.mxu0 0.0
    %3450 = vmatpush1.msra.mxu0 0.0
    %3451 = vmatprep.subr.mxu0 0.0
    %3452 = vmatpush1.msra.mxu0 0.0
    %3453 = vmatprep.subr.mxu0 0.0
    %3454 = vmatpush1.msra.mxu0 0.0
    %3455 = vmatprep.subr.mxu0 0.0
    %3456 = vmatpush1.msra.mxu0 0.0
    %3457 = vmatprep.subr.mxu0 0.0
    %3458 = vmatpush1.msra.mxu0 0.0
    %3459 = vmatprep.subr.mxu0 0.0
    %3460 = vmatpush1.msra.mxu0 0.0
    %3461 = vmatprep.subr.mxu0 0.0
    %3462 = vmatpush1.msra.mxu0 0.0
    %3463 = vmatprep.subr.mxu0 0.0
    %3464 = vmatpush1.msra.mxu0 0.0
    %3465 = vmatprep.subr.mxu0 0.0
    %3466 = vmatpush1.msra.mxu0 0.0
    %3467 = vmatprep.subr.mxu0 0.0
    %3468 = vmatpush1.msra.mxu0 0.0
    %3469 = vmatprep.subr.mxu0 0.0
    %3470 = vmatpush1.msra.mxu0 0.0
    %3471 = vmatprep.subr.mxu0 0.0
    %3472 = vmatpush1.msra.mxu0 0.0
    %3473 = vmatprep.subr.mxu0 0.0
    %3474 = vmatpush1.msra.mxu0 0.0
    %3475 = vmatprep.subr.mxu0 0.0
    %3476 = vmatpush1.msra.mxu0 0.0
    %3477 = vmatprep.subr.mxu0 0.0
    %3478 = vmatpush1.msra.mxu0 0.0
    %3479 = vmatprep.subr.mxu0 0.0
    %3480 = vmatpush1.msra.mxu0 0.0
    %3481 = vmatprep.subr.mxu0 0.0
    %3482 = vmatpush1.msra.mxu0 0.0
    %3483 = vmatprep.subr.mxu0 0.0
    %3484 = vmatpush1.msra.mxu0 0.0
    %3485 = vmatprep.mubr.f32.mxu0 0.0
    %3486 = vmatmul.mubr.f32.gmra.mrb[0].mxu0 %v3163
    %v3487 = vpop.f32.mrb[0].mxu0
    %v3488 = vadd.f32 0.0, %v3487
    %v3489 = vpop.f32.mrb[0].mxu0
    %3490 = vdwg.mxu0
    %v3492 = vrot.slane %v3488, 1
    %v3495 = vadd.f32 %v3414, %v3488
    %v3496 = vadd.f32 %v3420, %v3492
    %v3497 = vxor.u32 %v3495, 2147483648
    %v3498 = vxor.u32 %v3496, 2147483648
    %v3499 = vmul.f32 %v3497, 1.442695
    %v3500 = vpow.pop %v3499
    %v3501 = vmul.f32 %v3498, 1.442695
    %v3502 = vpow.pop %v3501
    %v3503 = vadd.f32 %v3500, 1.0
    %v3504 = vadd.f32 %v3502, 1.0
    %v3505 = vrcp.pop %v3503
    %v3506 = vmul.f32 1.0, %v3505
    %v3507 = vrcp.pop %v3504
    %v3508 = vmul.f32 1.0, %v3507
    %v3509 = vtanh.pop %v3495
    %v3510 = vtanh.pop %v3496
    %v3511 = vmul.f32 %v3506, %v3143
    %v3512 = vmul.f32 %v3508, %v3144
    %3515 = vrot.lane.b32.xlu0 %v3509, 64
    %v3516 = vpop.permute.xlu0 %3515
    %3517 = vrot.lane.b32.xlu0 %v3510, 64
    %v3518 = vpop.permute.xlu0 %3517
    %v3521 = vmul.f32 %v3506, %v3516
    %v3522 = vmul.f32 %v3508, %v3518
    %3525 = vrot.lane.b32.xlu0 %v3521, 32
    %v3526 = vpop.permute.xlu0 %3525
    %3527 = vrot.lane.b32.xlu0 %v3522, 32
    %v3528 = vpop.permute.xlu0 %3527
    %v3531 = vadd.f32 %v3511, %v3526
    %v3532 = vadd.f32 %v3512, %v3528
    %v3533 = vtanh.pop %v3531
    %v3534 = vtanh.pop %v3532
    %3537 = vrot.lane.b32.xlu0 %v3533, 64
    %v3538 = vpop.permute.xlu0 %3537
    %3539 = vrot.lane.b32.xlu0 %v3534, 64
    %v3540 = vpop.permute.xlu0 %3539
    %v3543 = vmul.f32 %v3506, %v3538
    %v3544 = vmul.f32 %v3508, %v3540
    %v3547 = vrot.slane %v3544, 7
    %v3548 = vsel %vm377, %v3547, %v3543
    %3549 = vrot.lane.b32.xlu0 %v3548, 32
    %v3550 = vpop.permute.xlu0 %3549
    %v3551 = vsel %vm240, %v3550, 0
    %3553 = vmatprep.subr.mxu0 0.0
    %3554 = vmatpush1.msra.mxu0 %v131
    %3555 = vmatprep.subr.mxu0 0.0
    %3556 = vmatpush1.msra.mxu0 %v132
    %3557 = vmatprep.subr.mxu0 0.0
    %3558 = vmatpush1.msra.mxu0 %v133
    %3559 = vmatprep.subr.mxu0 0.0
    %3560 = vmatpush1.msra.mxu0 %v134
    %3561 = vmatprep.subr.mxu0 0.0
    %3562 = vmatpush1.msra.mxu0 0.0
    %3563 = vmatprep.subr.mxu0 0.0
    %3564 = vmatpush1.msra.mxu0 0.0
    %3565 = vmatprep.subr.mxu0 0.0
    %3566 = vmatpush1.msra.mxu0 0.0
    %3567 = vmatprep.subr.mxu0 0.0
    %3568 = vmatpush1.msra.mxu0 0.0
    %3569 = vmatprep.subr.mxu0 0.0
    %3570 = vmatpush1.msra.mxu0 0.0
    %3571 = vmatprep.subr.mxu0 0.0
    %3572 = vmatpush1.msra.mxu0 0.0
    %3573 = vmatprep.subr.mxu0 0.0
    %3574 = vmatpush1.msra.mxu0 0.0
    %3575 = vmatprep.subr.mxu0 0.0
    %3576 = vmatpush1.msra.mxu0 0.0
    %3577 = vmatprep.subr.mxu0 0.0
    %3578 = vmatpush1.msra.mxu0 0.0
    %3579 = vmatprep.subr.mxu0 0.0
    %3580 = vmatpush1.msra.mxu0 0.0
    %3581 = vmatprep.subr.mxu0 0.0
    %3582 = vmatpush1.msra.mxu0 0.0
    %3583 = vmatprep.subr.mxu0 0.0
    %3584 = vmatpush1.msra.mxu0 0.0
    %3585 = vmatprep.subr.mxu0 0.0
    %3586 = vmatpush1.msra.mxu0 0.0
    %3587 = vmatprep.subr.mxu0 0.0
    %3588 = vmatpush1.msra.mxu0 0.0
    %3589 = vmatprep.subr.mxu0 0.0
    %3590 = vmatpush1.msra.mxu0 0.0
    %3591 = vmatprep.subr.mxu0 0.0
    %3592 = vmatpush1.msra.mxu0 0.0
    %3593 = vmatprep.subr.mxu0 0.0
    %3594 = vmatpush1.msra.mxu0 0.0
    %3595 = vmatprep.subr.mxu0 0.0
    %3596 = vmatpush1.msra.mxu0 0.0
    %3597 = vmatprep.subr.mxu0 0.0
    %3598 = vmatpush1.msra.mxu0 0.0
    %3599 = vmatprep.subr.mxu0 0.0
    %3600 = vmatpush1.msra.mxu0 0.0
    %3601 = vmatprep.subr.mxu0 0.0
    %3602 = vmatpush1.msra.mxu0 0.0
    %3603 = vmatprep.subr.mxu0 0.0
    %3604 = vmatpush1.msra.mxu0 0.0
    %3605 = vmatprep.subr.mxu0 0.0
    %3606 = vmatpush1.msra.mxu0 0.0
    %3607 = vmatprep.subr.mxu0 0.0
    %3608 = vmatpush1.msra.mxu0 0.0
    %3609 = vmatprep.subr.mxu0 0.0
    %3610 = vmatpush1.msra.mxu0 0.0
    %3611 = vmatprep.subr.mxu0 0.0
    %3612 = vmatpush1.msra.mxu0 0.0
    %3613 = vmatprep.subr.mxu0 0.0
    %3614 = vmatpush1.msra.mxu0 0.0
    %3615 = vmatprep.subr.mxu0 0.0
    %3616 = vmatpush1.msra.mxu0 0.0
    %3617 = vmatprep.mubr.f32.mxu0 0.0
    %3618 = vmatmul.mubr.f32.gmra.mrb[0].mxu0 %v3551
    %v3619 = vpop.f32.mrb[0].mxu0
    %v3620 = vadd.f32 0.0, %v3619
    %v3621 = vpop.f32.mrb[0].mxu0
    %3622 = vdwg.mxu0
    %v3625 = vunpack.c.l.s4 1966171168
    %v3626 = vunpack.c.0.s8 %v3625
    %v3627 = vlaneseq
    %v3628 = vshrl.u32 %v3627, 7
    %v3629 = vsub.s32 %v3626, %v3628
    %v3630 = vrot.slane %v3620, %v3629
    %v3631 = vcombine.high %v3630, %v3630
    %v3633 = vunpack.c.l.s4 1966171168
    %v3634 = vunpack.c.0.s8 %v3633
    %v3635 = vlaneseq
    %v3636 = vshrl.u32 %v3635, 7
    %v3637 = vsub.s32 %v3634, %v3636
    %v3638 = vrot.slane %v3630, %v3637
    %v3640 = vunpack.c.l.s4 1966171168
    %v3641 = vunpack.c.0.s8 %v3640
    %v3642 = vlaneseq
    %v3643 = vshrl.u32 %v3642, 7
    %v3644 = vsub.s32 %v3641, %v3643
    %v3645 = vrot.slane %v3631, %v3644
    %v3646 = vlaneseq
    %v3647 = vshrl.u32 %v3646, 7
    %v3648 = vsub.s32 0, %v3647
    %v3649 = vrot.slane %v3638, %v3648
    %v3650 = vlaneseq
    %v3651 = vshrl.u32 %v3650, 7
    %v3652 = vsub.s32 0, %v3651
    %v3653 = vrot.slane %v3645, %v3652
    %v3656 = vadd.f32 %v2207, %v3649
    %v3657 = vadd.f32 %v2208, %v3653
    %v3658 = vtanh.pop %v3656
    %v3659 = vtanh.pop %v3657
    %v3660 = vmul.f32 %v3658, %v2507
    %v3661 = vmul.f32 %v3659, %v2507
    %v3662 = vsel %vm240, %v3660, 0.0
    %3663 = vadd.xlane.f32.xlu0 %v3662
    %v3664 = vpop.xlane.xlu0 %3663
    %v3665 = vsel %vm240, %v3661, 0.0
    %3666 = vadd.xlane.f32.xlu0 %v3665
    %v3667 = vpop.xlane.xlu0 %3666
    %v3669 = vlaneseq
    %v3670 = vshrl.u32 %v3669, 7
    %v3671 = vsub.s32 0, %v3670
    %v3672 = vrot.slane %v3390, %v3671
    %3674 = vbcast.lane.b32.xlu0 %v3672, 256
    %v3675 = vpop.permute.xlu0 %3674
    %v3676 = vlaneseq
    %v3677 = vshrl.u32 %v3676, 7
    %v3678 = vsub.s32 1, %v3677
    %v3679 = vrot.slane %v3390, %v3678
    %3681 = vbcast.lane.b32.xlu0 %v3679, 256
    %v3682 = vpop.permute.xlu0 %3681
    %v3685 = vadd.f32 %v3664, %v3675
    %v3686 = vadd.f32 %v3667, %v3682
    %3689 = vset.pattern.permute.xlu0 0
    %3690 = vperm.xlu0 %3689, %v3685
    %v3691 = vpop.permute.xlu0 %3690
    %3692 = vset.pattern.permute.xlu0 0
    %3693 = vperm.xlu0 %3692, %v3686
    %v3694 = vpop.permute.xlu0 %3693
    %v3695 = vlaneseq
    %v3696 = vshrl.u32 %v3695, 7
    %v3697 = vsub.s32 %v2210, %v3696
    %v3698 = vrot.slane %v3691, %v3697
    %v3699 = vlaneseq
    %v3700 = vshrl.u32 %v3699, 7
    %v3701 = vsub.s32 %v2210, %v3700
    %v3702 = vrot.slane %v3694, %v3701
    %v3703 = vsel %vm377, %v3702, %v3698
    %v3705 = vsel %vm2531, %v3703, -inf
    %3706 = vmax.xlane.f32.xlu0 %v3705
    %v3707 = vpop.xlane.xlu0 %3706
    %v3709 = vlaneseq
    %v3710 = vshrl.u32 %v3709, 7
    %v3711 = vsub.s32 0, %v3710
    %v3712 = vrot.slane %v3707, %v3711
    %v3713 = vlaneseq
    %v3714 = vshrl.u32 %v3713, 7
    %v3715 = vsub.s32 1, %v3714
    %v3716 = vrot.slane %v3707, %v3715
    %vm3719 = vcmp.eq.f32.partialorder %v3685, %v3712
    %vm3720 = vcmp.eq.f32.partialorder %v3686, %v3716
    %v3721 = vsel %vm3719, %v2551, 8.0
    %v3722 = vsel %vm3720, %v2551, 8.0
    %3725 = vset.pattern.permute.xlu0 0
    %3726 = vperm.xlu0 %3725, %v3721
    %v3727 = vpop.permute.xlu0 %3726
    %3728 = vset.pattern.permute.xlu0 0
    %3729 = vperm.xlu0 %3728, %v3722
    %v3730 = vpop.permute.xlu0 %3729
    %v3731 = vlaneseq
    %v3732 = vshrl.u32 %v3731, 7
    %v3733 = vsub.s32 %v2210, %v3732
    %v3734 = vrot.slane %v3727, %v3733
    %v3735 = vlaneseq
    %v3736 = vshrl.u32 %v3735, 7
    %v3737 = vsub.s32 %v2210, %v3736
    %v3738 = vrot.slane %v3730, %v3737
    %v3739 = vsel %vm377, %v3738, %v3734
    %v3741 = vsel %vm2531, %v3739, inf
    %3742 = vmin.xlane.f32.xlu0 %v3741
    %v3743 = vpop.xlane.xlu0 %3742
    %v3744 = vcvt.f32.s32.to.zero.pseudo %v3743
    %v3745 = vsub.f32 %v3685, %v3712
    %v3746 = vsub.f32 %v3686, %v3716
    %v3747 = vmul.f32 %v3745, 1.442695
    %v3748 = vpow.pop %v3747
    %v3749 = vmul.f32 %v3746, 1.442695
    %v3750 = vpow.pop %v3749
    %3753 = vset.pattern.permute.xlu0 0
    %3754 = vperm.xlu0 %3753, %v3748
    %v3755 = vpop.permute.xlu0 %3754
    %3756 = vset.pattern.permute.xlu0 0
    %3757 = vperm.xlu0 %3756, %v3750
    %v3758 = vpop.permute.xlu0 %3757
    %v3759 = vlaneseq
    %v3760 = vshrl.u32 %v3759, 7
    %v3761 = vsub.s32 %v2210, %v3760
    %v3762 = vrot.slane %v3755, %v3761
    %v3763 = vlaneseq
    %v3764 = vshrl.u32 %v3763, 7
    %v3765 = vsub.s32 %v2210, %v3764
    %v3766 = vrot.slane %v3758, %v3765
    %v3767 = vsel %vm377, %v3766, %v3762
    %v3769 = vsel %vm2531, %v3767, 0.0
    %3770 = vadd.xlane.f32.xlu0 %v3769
    %v3771 = vpop.xlane.xlu0 %3770
    %v3772 = vlog2.pop %v3771
    %v3773 = vmul.f32 %v3772, 0.6931472
    %v3774 = vsub.f32 %v3386, %v3773
    %vm3775 = vcmp.eq.s32.totalorder %v2210, 3
    %v3776 = vsel %vm3775, %v3744, %v3388
    %vm3777 = vcmp.eq.s32.totalorder %v2210, %v3744
    %v3778 = vsel %vm3777, -1e+30, %v3390
    %v3779 = vsel %vm3777, 1, 0
    %v3780 = vcvt.s32.f32 %v3779
    %v3781 = vlaneseq
    %v3782 = vshrl.u32 %v3781, 7
    %v3783 = vsub.s32 0, %v3782
    %v3784 = vrot.slane %v3780, %v3783
    %3786 = vbcast.lane.b32.xlu0 %v3784, 256
    %v3787 = vpop.permute.xlu0 %3786
    %v3788 = vlaneseq
    %v3789 = vshrl.u32 %v3788, 7
    %v3790 = vsub.s32 1, %v3789
    %v3791 = vrot.slane %v3780, %v3790
    %3793 = vbcast.lane.b32.xlu0 %v3791, 256
    %v3794 = vpop.permute.xlu0 %3793
    %v3795 = vmul.f32 %v3787, %v230
    %v3796 = vmul.f32 %v3794, %v236
    %v3797 = vrot.slane %v3795, 4
    %v3798 = vadd.f32 %v3795, %v3797
    %v3799 = vrot.slane %v3798, 2
    %v3800 = vadd.f32 %v3798, %v3799
    %v3801 = vrot.slane %v3800, 1
    %v3802 = vadd.f32 %v3800, %v3801
    %v3803 = vrot.slane %v3796, 4
    %v3804 = vadd.f32 %v3796, %v3803
    %v3805 = vrot.slane %v3804, 2
    %v3806 = vadd.f32 %v3804, %v3805
    %v3807 = vrot.slane %v3806, 1
    %v3808 = vadd.f32 %v3806, %v3807
    %3809 = vmatprep.subr.mxu0 0.0
    %3810 = vmatpush1.msra.mxu0 %v122
    %3811 = vmatprep.subr.mxu0 0.0
    %3812 = vmatpush1.msra.mxu0 %v123
    %3813 = vmatprep.subr.mxu0 0.0
    %3814 = vmatpush1.msra.mxu0 %v124
    %3815 = vmatprep.subr.mxu0 0.0
    %3816 = vmatpush1.msra.mxu0 %v125
    %3817 = vmatprep.subr.mxu0 0.0
    %3818 = vmatpush1.msra.mxu0 0.0
    %3819 = vmatprep.subr.mxu0 0.0
    %3820 = vmatpush1.msra.mxu0 0.0
    %3821 = vmatprep.subr.mxu0 0.0
    %3822 = vmatpush1.msra.mxu0 0.0
    %3823 = vmatprep.subr.mxu0 0.0
    %3824 = vmatpush1.msra.mxu0 0.0
    %3825 = vmatprep.subr.mxu0 0.0
    %3826 = vmatpush1.msra.mxu0 0.0
    %3827 = vmatprep.subr.mxu0 0.0
    %3828 = vmatpush1.msra.mxu0 0.0
    %3829 = vmatprep.subr.mxu0 0.0
    %3830 = vmatpush1.msra.mxu0 0.0
    %3831 = vmatprep.subr.mxu0 0.0
    %3832 = vmatpush1.msra.mxu0 0.0
    %3833 = vmatprep.subr.mxu0 0.0
    %3834 = vmatpush1.msra.mxu0 0.0
    %3835 = vmatprep.subr.mxu0 0.0
    %3836 = vmatpush1.msra.mxu0 0.0
    %3837 = vmatprep.subr.mxu0 0.0
    %3838 = vmatpush1.msra.mxu0 0.0
    %3839 = vmatprep.subr.mxu0 0.0
    %3840 = vmatpush1.msra.mxu0 0.0
    %3841 = vmatprep.subr.mxu0 0.0
    %3842 = vmatpush1.msra.mxu0 0.0
    %3843 = vmatprep.subr.mxu0 0.0
    %3844 = vmatpush1.msra.mxu0 0.0
    %3845 = vmatprep.subr.mxu0 0.0
    %3846 = vmatpush1.msra.mxu0 0.0
    %3847 = vmatprep.subr.mxu0 0.0
    %3848 = vmatpush1.msra.mxu0 0.0
    %3849 = vmatprep.subr.mxu0 0.0
    %3850 = vmatpush1.msra.mxu0 0.0
    %3851 = vmatprep.subr.mxu0 0.0
    %3852 = vmatpush1.msra.mxu0 0.0
    %3853 = vmatprep.subr.mxu0 0.0
    %3854 = vmatpush1.msra.mxu0 0.0
    %3855 = vmatprep.subr.mxu0 0.0
    %3856 = vmatpush1.msra.mxu0 0.0
    %3857 = vmatprep.subr.mxu0 0.0
    %3858 = vmatpush1.msra.mxu0 0.0
    %3859 = vmatprep.subr.mxu0 0.0
    %3860 = vmatpush1.msra.mxu0 0.0
    %3861 = vmatprep.subr.mxu0 0.0
    %3862 = vmatpush1.msra.mxu0 0.0
    %3863 = vmatprep.subr.mxu0 0.0
    %3864 = vmatpush1.msra.mxu0 0.0
    %3865 = vmatprep.subr.mxu0 0.0
    %3866 = vmatpush1.msra.mxu0 0.0
    %3867 = vmatprep.subr.mxu0 0.0
    %3868 = vmatpush1.msra.mxu0 0.0
    %3869 = vmatprep.subr.mxu0 0.0
    %3870 = vmatpush1.msra.mxu0 0.0
    %3871 = vmatprep.subr.mxu0 0.0
    %3872 = vmatpush1.msra.mxu0 0.0
    %3873 = vmatprep.mubr.f32.mxu0 0.0
    %3874 = vmatmul.mubr.f32.gmra.mrb[0].mxu0 %v3551
    %v3875 = vpop.f32.mrb[0].mxu0
    %v3876 = vadd.f32 0.0, %v3875
    %v3877 = vpop.f32.mrb[0].mxu0
    %3878 = vdwg.mxu0
    %v3880 = vrot.slane %v3876, 1
    %v3883 = vadd.f32 %v3802, %v3876
    %v3884 = vadd.f32 %v3808, %v3880
    %v3885 = vxor.u32 %v3883, 2147483648
    %v3886 = vxor.u32 %v3884, 2147483648
    %v3887 = vmul.f32 %v3885, 1.442695
    %v3888 = vpow.pop %v3887
    %v3889 = vmul.f32 %v3886, 1.442695
    %v3890 = vpow.pop %v3889
    %v3891 = vadd.f32 %v3888, 1.0
    %v3892 = vadd.f32 %v3890, 1.0
    %v3893 = vrcp.pop %v3891
    %v3894 = vmul.f32 1.0, %v3893
    %v3895 = vrcp.pop %v3892
    %v3896 = vmul.f32 1.0, %v3895
    %v3897 = vtanh.pop %v3883
    %v3898 = vtanh.pop %v3884
    %v3899 = vmul.f32 %v3894, %v3531
    %v3900 = vmul.f32 %v3896, %v3532
    %3903 = vrot.lane.b32.xlu0 %v3897, 64
    %v3904 = vpop.permute.xlu0 %3903
    %3905 = vrot.lane.b32.xlu0 %v3898, 64
    %v3906 = vpop.permute.xlu0 %3905
    %v3909 = vmul.f32 %v3894, %v3904
    %v3910 = vmul.f32 %v3896, %v3906
    %3913 = vrot.lane.b32.xlu0 %v3909, 32
    %v3914 = vpop.permute.xlu0 %3913
    %3915 = vrot.lane.b32.xlu0 %v3910, 32
    %v3916 = vpop.permute.xlu0 %3915
    %v3919 = vadd.f32 %v3899, %v3914
    %v3920 = vadd.f32 %v3900, %v3916
    %v3921 = vtanh.pop %v3919
    %v3922 = vtanh.pop %v3920
    %3925 = vrot.lane.b32.xlu0 %v3921, 64
    %v3926 = vpop.permute.xlu0 %3925
    %3927 = vrot.lane.b32.xlu0 %v3922, 64
    %v3928 = vpop.permute.xlu0 %3927
    %v3931 = vmul.f32 %v3894, %v3926
    %v3932 = vmul.f32 %v3896, %v3928
    %v3935 = vrot.slane %v3932, 7
    %v3936 = vsel %vm377, %v3935, %v3931
    %3937 = vrot.lane.b32.xlu0 %v3936, 32
    %v3938 = vpop.permute.xlu0 %3937
    %v3939 = vsel %vm240, %v3938, 0
    %3941 = vmatprep.subr.mxu0 0.0
    %3942 = vmatpush1.msra.mxu0 %v131
    %3943 = vmatprep.subr.mxu0 0.0
    %3944 = vmatpush1.msra.mxu0 %v132
    %3945 = vmatprep.subr.mxu0 0.0
    %3946 = vmatpush1.msra.mxu0 %v133
    %3947 = vmatprep.subr.mxu0 0.0
    %3948 = vmatpush1.msra.mxu0 %v134
    %3949 = vmatprep.subr.mxu0 0.0
    %3950 = vmatpush1.msra.mxu0 0.0
    %3951 = vmatprep.subr.mxu0 0.0
    %3952 = vmatpush1.msra.mxu0 0.0
    %3953 = vmatprep.subr.mxu0 0.0
    %3954 = vmatpush1.msra.mxu0 0.0
    %3955 = vmatprep.subr.mxu0 0.0
    %3956 = vmatpush1.msra.mxu0 0.0
    %3957 = vmatprep.subr.mxu0 0.0
    %3958 = vmatpush1.msra.mxu0 0.0
    %3959 = vmatprep.subr.mxu0 0.0
    %3960 = vmatpush1.msra.mxu0 0.0
    %3961 = vmatprep.subr.mxu0 0.0
    %3962 = vmatpush1.msra.mxu0 0.0
    %3963 = vmatprep.subr.mxu0 0.0
    %3964 = vmatpush1.msra.mxu0 0.0
    %3965 = vmatprep.subr.mxu0 0.0
    %3966 = vmatpush1.msra.mxu0 0.0
    %3967 = vmatprep.subr.mxu0 0.0
    %3968 = vmatpush1.msra.mxu0 0.0
    %3969 = vmatprep.subr.mxu0 0.0
    %3970 = vmatpush1.msra.mxu0 0.0
    %3971 = vmatprep.subr.mxu0 0.0
    %3972 = vmatpush1.msra.mxu0 0.0
    %3973 = vmatprep.subr.mxu0 0.0
    %3974 = vmatpush1.msra.mxu0 0.0
    %3975 = vmatprep.subr.mxu0 0.0
    %3976 = vmatpush1.msra.mxu0 0.0
    %3977 = vmatprep.subr.mxu0 0.0
    %3978 = vmatpush1.msra.mxu0 0.0
    %3979 = vmatprep.subr.mxu0 0.0
    %3980 = vmatpush1.msra.mxu0 0.0
    %3981 = vmatprep.subr.mxu0 0.0
    %3982 = vmatpush1.msra.mxu0 0.0
    %3983 = vmatprep.subr.mxu0 0.0
    %3984 = vmatpush1.msra.mxu0 0.0
    %3985 = vmatprep.subr.mxu0 0.0
    %3986 = vmatpush1.msra.mxu0 0.0
    %3987 = vmatprep.subr.mxu0 0.0
    %3988 = vmatpush1.msra.mxu0 0.0
    %3989 = vmatprep.subr.mxu0 0.0
    %3990 = vmatpush1.msra.mxu0 0.0
    %3991 = vmatprep.subr.mxu0 0.0
    %3992 = vmatpush1.msra.mxu0 0.0
    %3993 = vmatprep.subr.mxu0 0.0
    %3994 = vmatpush1.msra.mxu0 0.0
    %3995 = vmatprep.subr.mxu0 0.0
    %3996 = vmatpush1.msra.mxu0 0.0
    %3997 = vmatprep.subr.mxu0 0.0
    %3998 = vmatpush1.msra.mxu0 0.0
    %3999 = vmatprep.subr.mxu0 0.0
    %4000 = vmatpush1.msra.mxu0 0.0
    %4001 = vmatprep.subr.mxu0 0.0
    %4002 = vmatpush1.msra.mxu0 0.0
    %4003 = vmatprep.subr.mxu0 0.0
    %4004 = vmatpush1.msra.mxu0 0.0
    %4005 = vmatprep.mubr.f32.mxu0 0.0
    %4006 = vmatmul.mubr.f32.gmra.mrb[0].mxu0 %v3939
    %v4007 = vpop.f32.mrb[0].mxu0
    %v4008 = vadd.f32 0.0, %v4007
    %v4009 = vpop.f32.mrb[0].mxu0
    %4010 = vdwg.mxu0
    %v4013 = vunpack.c.l.s4 1966171168
    %v4014 = vunpack.c.0.s8 %v4013
    %v4015 = vlaneseq
    %v4016 = vshrl.u32 %v4015, 7
    %v4017 = vsub.s32 %v4014, %v4016
    %v4018 = vrot.slane %v4008, %v4017
    %v4019 = vcombine.high %v4018, %v4018
    %v4021 = vunpack.c.l.s4 1966171168
    %v4022 = vunpack.c.0.s8 %v4021
    %v4023 = vlaneseq
    %v4024 = vshrl.u32 %v4023, 7
    %v4025 = vsub.s32 %v4022, %v4024
    %v4026 = vrot.slane %v4018, %v4025
    %v4028 = vunpack.c.l.s4 1966171168
    %v4029 = vunpack.c.0.s8 %v4028
    %v4030 = vlaneseq
    %v4031 = vshrl.u32 %v4030, 7
    %v4032 = vsub.s32 %v4029, %v4031
    %v4033 = vrot.slane %v4019, %v4032
    %v4034 = vlaneseq
    %v4035 = vshrl.u32 %v4034, 7
    %v4036 = vsub.s32 0, %v4035
    %v4037 = vrot.slane %v4026, %v4036
    %v4038 = vlaneseq
    %v4039 = vshrl.u32 %v4038, 7
    %v4040 = vsub.s32 0, %v4039
    %v4041 = vrot.slane %v4033, %v4040
    %v4044 = vadd.f32 %v2207, %v4037
    %v4045 = vadd.f32 %v2208, %v4041
    %v4046 = vtanh.pop %v4044
    %v4047 = vtanh.pop %v4045
    %v4048 = vmul.f32 %v4046, %v2507
    %v4049 = vmul.f32 %v4047, %v2507
    %v4050 = vsel %vm240, %v4048, 0.0
    %4051 = vadd.xlane.f32.xlu0 %v4050
    %v4052 = vpop.xlane.xlu0 %4051
    %v4053 = vsel %vm240, %v4049, 0.0
    %4054 = vadd.xlane.f32.xlu0 %v4053
    %v4055 = vpop.xlane.xlu0 %4054
    %v4057 = vlaneseq
    %v4058 = vshrl.u32 %v4057, 7
    %v4059 = vsub.s32 0, %v4058
    %v4060 = vrot.slane %v3778, %v4059
    %4062 = vbcast.lane.b32.xlu0 %v4060, 256
    %v4063 = vpop.permute.xlu0 %4062
    %v4064 = vlaneseq
    %v4065 = vshrl.u32 %v4064, 7
    %v4066 = vsub.s32 1, %v4065
    %v4067 = vrot.slane %v3778, %v4066
    %4069 = vbcast.lane.b32.xlu0 %v4067, 256
    %v4070 = vpop.permute.xlu0 %4069
    %v4073 = vadd.f32 %v4052, %v4063
    %v4074 = vadd.f32 %v4055, %v4070
    %4077 = vset.pattern.permute.xlu0 0
    %4078 = vperm.xlu0 %4077, %v4073
    %v4079 = vpop.permute.xlu0 %4078
    %4080 = vset.pattern.permute.xlu0 0
    %4081 = vperm.xlu0 %4080, %v4074
    %v4082 = vpop.permute.xlu0 %4081
    %v4083 = vlaneseq
    %v4084 = vshrl.u32 %v4083, 7
    %v4085 = vsub.s32 %v2210, %v4084
    %v4086 = vrot.slane %v4079, %v4085
    %v4087 = vlaneseq
    %v4088 = vshrl.u32 %v4087, 7
    %v4089 = vsub.s32 %v2210, %v4088
    %v4090 = vrot.slane %v4082, %v4089
    %v4091 = vsel %vm377, %v4090, %v4086
    %v4093 = vsel %vm2531, %v4091, -inf
    %4094 = vmax.xlane.f32.xlu0 %v4093
    %v4095 = vpop.xlane.xlu0 %4094
    %v4097 = vlaneseq
    %v4098 = vshrl.u32 %v4097, 7
    %v4099 = vsub.s32 0, %v4098
    %v4100 = vrot.slane %v4095, %v4099
    %v4101 = vlaneseq
    %v4102 = vshrl.u32 %v4101, 7
    %v4103 = vsub.s32 1, %v4102
    %v4104 = vrot.slane %v4095, %v4103
    %vm4107 = vcmp.eq.f32.partialorder %v4073, %v4100
    %vm4108 = vcmp.eq.f32.partialorder %v4074, %v4104
    %v4109 = vsel %vm4107, %v2551, 8.0
    %v4110 = vsel %vm4108, %v2551, 8.0
    %4113 = vset.pattern.permute.xlu0 0
    %4114 = vperm.xlu0 %4113, %v4109
    %v4115 = vpop.permute.xlu0 %4114
    %4116 = vset.pattern.permute.xlu0 0
    %4117 = vperm.xlu0 %4116, %v4110
    %v4118 = vpop.permute.xlu0 %4117
    %v4119 = vlaneseq
    %v4120 = vshrl.u32 %v4119, 7
    %v4121 = vsub.s32 %v2210, %v4120
    %v4122 = vrot.slane %v4115, %v4121
    %v4123 = vlaneseq
    %v4124 = vshrl.u32 %v4123, 7
    %v4125 = vsub.s32 %v2210, %v4124
    %v4126 = vrot.slane %v4118, %v4125
    %v4127 = vsel %vm377, %v4126, %v4122
    %v4129 = vsel %vm2531, %v4127, inf
    %4130 = vmin.xlane.f32.xlu0 %v4129
    %v4131 = vpop.xlane.xlu0 %4130
    %v4132 = vcvt.f32.s32.to.zero.pseudo %v4131
    %v4133 = vsub.f32 %v4073, %v4100
    %v4134 = vsub.f32 %v4074, %v4104
    %v4135 = vmul.f32 %v4133, 1.442695
    %v4136 = vpow.pop %v4135
    %v4137 = vmul.f32 %v4134, 1.442695
    %v4138 = vpow.pop %v4137
    %4141 = vset.pattern.permute.xlu0 0
    %4142 = vperm.xlu0 %4141, %v4136
    %v4143 = vpop.permute.xlu0 %4142
    %4144 = vset.pattern.permute.xlu0 0
    %4145 = vperm.xlu0 %4144, %v4138
    %v4146 = vpop.permute.xlu0 %4145
    %v4147 = vlaneseq
    %v4148 = vshrl.u32 %v4147, 7
    %v4149 = vsub.s32 %v2210, %v4148
    %v4150 = vrot.slane %v4143, %v4149
    %v4151 = vlaneseq
    %v4152 = vshrl.u32 %v4151, 7
    %v4153 = vsub.s32 %v2210, %v4152
    %v4154 = vrot.slane %v4146, %v4153
    %v4155 = vsel %vm377, %v4154, %v4150
    %v4157 = vsel %vm2531, %v4155, 0.0
    %4158 = vadd.xlane.f32.xlu0 %v4157
    %v4159 = vpop.xlane.xlu0 %4158
    %v4160 = vlog2.pop %v4159
    %v4161 = vmul.f32 %v4160, 0.6931472
    %v4162 = vsub.f32 %v3774, %v4161
    %vm4163 = vcmp.eq.s32.totalorder %v2210, 4
    %v4164 = vsel %vm4163, %v4132, %v3776
    %vm4165 = vcmp.eq.s32.totalorder %v2210, %v4132
    %v4166 = vsel %vm4165, -1e+30, %v3778
    %v4167 = vsel %vm4165, 1, 0
    %v4168 = vcvt.s32.f32 %v4167
    %v4169 = vlaneseq
    %v4170 = vshrl.u32 %v4169, 7
    %v4171 = vsub.s32 0, %v4170
    %v4172 = vrot.slane %v4168, %v4171
    %4174 = vbcast.lane.b32.xlu0 %v4172, 256
    %v4175 = vpop.permute.xlu0 %4174
    %v4176 = vlaneseq
    %v4177 = vshrl.u32 %v4176, 7
    %v4178 = vsub.s32 1, %v4177
    %v4179 = vrot.slane %v4168, %v4178
    %4181 = vbcast.lane.b32.xlu0 %v4179, 256
    %v4182 = vpop.permute.xlu0 %4181
    %v4183 = vmul.f32 %v4175, %v230
    %v4184 = vmul.f32 %v4182, %v236
    %v4185 = vrot.slane %v4183, 4
    %v4186 = vadd.f32 %v4183, %v4185
    %v4187 = vrot.slane %v4186, 2
    %v4188 = vadd.f32 %v4186, %v4187
    %v4189 = vrot.slane %v4188, 1
    %v4190 = vadd.f32 %v4188, %v4189
    %v4191 = vrot.slane %v4184, 4
    %v4192 = vadd.f32 %v4184, %v4191
    %v4193 = vrot.slane %v4192, 2
    %v4194 = vadd.f32 %v4192, %v4193
    %v4195 = vrot.slane %v4194, 1
    %v4196 = vadd.f32 %v4194, %v4195
    %4197 = vmatprep.subr.mxu0 0.0
    %4198 = vmatpush1.msra.mxu0 %v122
    %4199 = vmatprep.subr.mxu0 0.0
    %4200 = vmatpush1.msra.mxu0 %v123
    %4201 = vmatprep.subr.mxu0 0.0
    %4202 = vmatpush1.msra.mxu0 %v124
    %4203 = vmatprep.subr.mxu0 0.0
    %4204 = vmatpush1.msra.mxu0 %v125
    %4205 = vmatprep.subr.mxu0 0.0
    %4206 = vmatpush1.msra.mxu0 0.0
    %4207 = vmatprep.subr.mxu0 0.0
    %4208 = vmatpush1.msra.mxu0 0.0
    %4209 = vmatprep.subr.mxu0 0.0
    %4210 = vmatpush1.msra.mxu0 0.0
    %4211 = vmatprep.subr.mxu0 0.0
    %4212 = vmatpush1.msra.mxu0 0.0
    %4213 = vmatprep.subr.mxu0 0.0
    %4214 = vmatpush1.msra.mxu0 0.0
    %4215 = vmatprep.subr.mxu0 0.0
    %4216 = vmatpush1.msra.mxu0 0.0
    %4217 = vmatprep.subr.mxu0 0.0
    %4218 = vmatpush1.msra.mxu0 0.0
    %4219 = vmatprep.subr.mxu0 0.0
    %4220 = vmatpush1.msra.mxu0 0.0
    %4221 = vmatprep.subr.mxu0 0.0
    %4222 = vmatpush1.msra.mxu0 0.0
    %4223 = vmatprep.subr.mxu0 0.0
    %4224 = vmatpush1.msra.mxu0 0.0
    %4225 = vmatprep.subr.mxu0 0.0
    %4226 = vmatpush1.msra.mxu0 0.0
    %4227 = vmatprep.subr.mxu0 0.0
    %4228 = vmatpush1.msra.mxu0 0.0
    %4229 = vmatprep.subr.mxu0 0.0
    %4230 = vmatpush1.msra.mxu0 0.0
    %4231 = vmatprep.subr.mxu0 0.0
    %4232 = vmatpush1.msra.mxu0 0.0
    %4233 = vmatprep.subr.mxu0 0.0
    %4234 = vmatpush1.msra.mxu0 0.0
    %4235 = vmatprep.subr.mxu0 0.0
    %4236 = vmatpush1.msra.mxu0 0.0
    %4237 = vmatprep.subr.mxu0 0.0
    %4238 = vmatpush1.msra.mxu0 0.0
    %4239 = vmatprep.subr.mxu0 0.0
    %4240 = vmatpush1.msra.mxu0 0.0
    %4241 = vmatprep.subr.mxu0 0.0
    %4242 = vmatpush1.msra.mxu0 0.0
    %4243 = vmatprep.subr.mxu0 0.0
    %4244 = vmatpush1.msra.mxu0 0.0
    %4245 = vmatprep.subr.mxu0 0.0
    %4246 = vmatpush1.msra.mxu0 0.0
    %4247 = vmatprep.subr.mxu0 0.0
    %4248 = vmatpush1.msra.mxu0 0.0
    %4249 = vmatprep.subr.mxu0 0.0
    %4250 = vmatpush1.msra.mxu0 0.0
    %4251 = vmatprep.subr.mxu0 0.0
    %4252 = vmatpush1.msra.mxu0 0.0
    %4253 = vmatprep.subr.mxu0 0.0
    %4254 = vmatpush1.msra.mxu0 0.0
    %4255 = vmatprep.subr.mxu0 0.0
    %4256 = vmatpush1.msra.mxu0 0.0
    %4257 = vmatprep.subr.mxu0 0.0
    %4258 = vmatpush1.msra.mxu0 0.0
    %4259 = vmatprep.subr.mxu0 0.0
    %4260 = vmatpush1.msra.mxu0 0.0
    %4261 = vmatprep.mubr.f32.mxu0 0.0
    %4262 = vmatmul.mubr.f32.gmra.mrb[0].mxu0 %v3939
    %v4263 = vpop.f32.mrb[0].mxu0
    %v4264 = vadd.f32 0.0, %v4263
    %v4265 = vpop.f32.mrb[0].mxu0
    %4266 = vdwg.mxu0
    %v4268 = vrot.slane %v4264, 1
    %v4271 = vadd.f32 %v4190, %v4264
    %v4272 = vadd.f32 %v4196, %v4268
    %v4273 = vxor.u32 %v4271, 2147483648
    %v4274 = vxor.u32 %v4272, 2147483648
    %v4275 = vmul.f32 %v4273, 1.442695
    %v4276 = vpow.pop %v4275
    %v4277 = vmul.f32 %v4274, 1.442695
    %v4278 = vpow.pop %v4277
    %v4279 = vadd.f32 %v4276, 1.0
    %v4280 = vadd.f32 %v4278, 1.0
    %v4281 = vrcp.pop %v4279
    %v4282 = vmul.f32 1.0, %v4281
    %v4283 = vrcp.pop %v4280
    %v4284 = vmul.f32 1.0, %v4283
    %v4285 = vtanh.pop %v4271
    %v4286 = vtanh.pop %v4272
    %v4287 = vmul.f32 %v4282, %v3919
    %v4288 = vmul.f32 %v4284, %v3920
    %4291 = vrot.lane.b32.xlu0 %v4285, 64
    %v4292 = vpop.permute.xlu0 %4291
    %4293 = vrot.lane.b32.xlu0 %v4286, 64
    %v4294 = vpop.permute.xlu0 %4293
    %v4297 = vmul.f32 %v4282, %v4292
    %v4298 = vmul.f32 %v4284, %v4294
    %4301 = vrot.lane.b32.xlu0 %v4297, 32
    %v4302 = vpop.permute.xlu0 %4301
    %4303 = vrot.lane.b32.xlu0 %v4298, 32
    %v4304 = vpop.permute.xlu0 %4303
    %v4307 = vadd.f32 %v4287, %v4302
    %v4308 = vadd.f32 %v4288, %v4304
    %v4309 = vtanh.pop %v4307
    %v4310 = vtanh.pop %v4308
    %4313 = vrot.lane.b32.xlu0 %v4309, 64
    %v4314 = vpop.permute.xlu0 %4313
    %4315 = vrot.lane.b32.xlu0 %v4310, 64
    %v4316 = vpop.permute.xlu0 %4315
    %v4319 = vmul.f32 %v4282, %v4314
    %v4320 = vmul.f32 %v4284, %v4316
    %v4323 = vrot.slane %v4320, 7
    %v4324 = vsel %vm377, %v4323, %v4319
    %4325 = vrot.lane.b32.xlu0 %v4324, 32
    %v4326 = vpop.permute.xlu0 %4325
    %v4327 = vsel %vm240, %v4326, 0
    %4329 = vmatprep.subr.mxu0 0.0
    %4330 = vmatpush1.msra.mxu0 %v131
    %4331 = vmatprep.subr.mxu0 0.0
    %4332 = vmatpush1.msra.mxu0 %v132
    %4333 = vmatprep.subr.mxu0 0.0
    %4334 = vmatpush1.msra.mxu0 %v133
    %4335 = vmatprep.subr.mxu0 0.0
    %4336 = vmatpush1.msra.mxu0 %v134
    %4337 = vmatprep.subr.mxu0 0.0
    %4338 = vmatpush1.msra.mxu0 0.0
    %4339 = vmatprep.subr.mxu0 0.0
    %4340 = vmatpush1.msra.mxu0 0.0
    %4341 = vmatprep.subr.mxu0 0.0
    %4342 = vmatpush1.msra.mxu0 0.0
    %4343 = vmatprep.subr.mxu0 0.0
    %4344 = vmatpush1.msra.mxu0 0.0
    %4345 = vmatprep.subr.mxu0 0.0
    %4346 = vmatpush1.msra.mxu0 0.0
    %4347 = vmatprep.subr.mxu0 0.0
    %4348 = vmatpush1.msra.mxu0 0.0
    %4349 = vmatprep.subr.mxu0 0.0
    %4350 = vmatpush1.msra.mxu0 0.0
    %4351 = vmatprep.subr.mxu0 0.0
    %4352 = vmatpush1.msra.mxu0 0.0
    %4353 = vmatprep.subr.mxu0 0.0
    %4354 = vmatpush1.msra.mxu0 0.0
    %4355 = vmatprep.subr.mxu0 0.0
    %4356 = vmatpush1.msra.mxu0 0.0
    %4357 = vmatprep.subr.mxu0 0.0
    %4358 = vmatpush1.msra.mxu0 0.0
    %4359 = vmatprep.subr.mxu0 0.0
    %4360 = vmatpush1.msra.mxu0 0.0
    %4361 = vmatprep.subr.mxu0 0.0
    %4362 = vmatpush1.msra.mxu0 0.0
    %4363 = vmatprep.subr.mxu0 0.0
    %4364 = vmatpush1.msra.mxu0 0.0
    %4365 = vmatprep.subr.mxu0 0.0
    %4366 = vmatpush1.msra.mxu0 0.0
    %4367 = vmatprep.subr.mxu0 0.0
    %4368 = vmatpush1.msra.mxu0 0.0
    %4369 = vmatprep.subr.mxu0 0.0
    %4370 = vmatpush1.msra.mxu0 0.0
    %4371 = vmatprep.subr.mxu0 0.0
    %4372 = vmatpush1.msra.mxu0 0.0
    %4373 = vmatprep.subr.mxu0 0.0
    %4374 = vmatpush1.msra.mxu0 0.0
    %4375 = vmatprep.subr.mxu0 0.0
    %4376 = vmatpush1.msra.mxu0 0.0
    %4377 = vmatprep.subr.mxu0 0.0
    %4378 = vmatpush1.msra.mxu0 0.0
    %4379 = vmatprep.subr.mxu0 0.0
    %4380 = vmatpush1.msra.mxu0 0.0
    %4381 = vmatprep.subr.mxu0 0.0
    %4382 = vmatpush1.msra.mxu0 0.0
    %4383 = vmatprep.subr.mxu0 0.0
    %4384 = vmatpush1.msra.mxu0 0.0
    %4385 = vmatprep.subr.mxu0 0.0
    %4386 = vmatpush1.msra.mxu0 0.0
    %4387 = vmatprep.subr.mxu0 0.0
    %4388 = vmatpush1.msra.mxu0 0.0
    %4389 = vmatprep.subr.mxu0 0.0
    %4390 = vmatpush1.msra.mxu0 0.0
    %4391 = vmatprep.subr.mxu0 0.0
    %4392 = vmatpush1.msra.mxu0 0.0
    %4393 = vmatprep.mubr.f32.mxu0 0.0
    %4394 = vmatmul.mubr.f32.gmra.mrb[0].mxu0 %v4327
    %v4395 = vpop.f32.mrb[0].mxu0
    %v4396 = vadd.f32 0.0, %v4395
    %v4397 = vpop.f32.mrb[0].mxu0
    %4398 = vdwg.mxu0
    %v4401 = vunpack.c.l.s4 1966171168
    %v4402 = vunpack.c.0.s8 %v4401
    %v4403 = vlaneseq
    %v4404 = vshrl.u32 %v4403, 7
    %v4405 = vsub.s32 %v4402, %v4404
    %v4406 = vrot.slane %v4396, %v4405
    %v4407 = vcombine.high %v4406, %v4406
    %v4409 = vunpack.c.l.s4 1966171168
    %v4410 = vunpack.c.0.s8 %v4409
    %v4411 = vlaneseq
    %v4412 = vshrl.u32 %v4411, 7
    %v4413 = vsub.s32 %v4410, %v4412
    %v4414 = vrot.slane %v4406, %v4413
    %v4416 = vunpack.c.l.s4 1966171168
    %v4417 = vunpack.c.0.s8 %v4416
    %v4418 = vlaneseq
    %v4419 = vshrl.u32 %v4418, 7
    %v4420 = vsub.s32 %v4417, %v4419
    %v4421 = vrot.slane %v4407, %v4420
    %v4422 = vlaneseq
    %v4423 = vshrl.u32 %v4422, 7
    %v4424 = vsub.s32 0, %v4423
    %v4425 = vrot.slane %v4414, %v4424
    %v4426 = vlaneseq
    %v4427 = vshrl.u32 %v4426, 7
    %v4428 = vsub.s32 0, %v4427
    %v4429 = vrot.slane %v4421, %v4428
    %v4432 = vadd.f32 %v2207, %v4425
    %v4433 = vadd.f32 %v2208, %v4429
    %v4434 = vtanh.pop %v4432
    %v4435 = vtanh.pop %v4433
    %v4436 = vmul.f32 %v4434, %v2507
    %v4437 = vmul.f32 %v4435, %v2507
    %v4438 = vsel %vm240, %v4436, 0.0
    %4439 = vadd.xlane.f32.xlu0 %v4438
    %v4440 = vpop.xlane.xlu0 %4439
    %v4441 = vsel %vm240, %v4437, 0.0
    %4442 = vadd.xlane.f32.xlu0 %v4441
    %v4443 = vpop.xlane.xlu0 %4442
    %v4445 = vlaneseq
    %v4446 = vshrl.u32 %v4445, 7
    %v4447 = vsub.s32 0, %v4446
    %v4448 = vrot.slane %v4166, %v4447
    %4450 = vbcast.lane.b32.xlu0 %v4448, 256
    %v4451 = vpop.permute.xlu0 %4450
    %v4452 = vlaneseq
    %v4453 = vshrl.u32 %v4452, 7
    %v4454 = vsub.s32 1, %v4453
    %v4455 = vrot.slane %v4166, %v4454
    %4457 = vbcast.lane.b32.xlu0 %v4455, 256
    %v4458 = vpop.permute.xlu0 %4457
    %v4461 = vadd.f32 %v4440, %v4451
    %v4462 = vadd.f32 %v4443, %v4458
    %4465 = vset.pattern.permute.xlu0 0
    %4466 = vperm.xlu0 %4465, %v4461
    %v4467 = vpop.permute.xlu0 %4466
    %4468 = vset.pattern.permute.xlu0 0
    %4469 = vperm.xlu0 %4468, %v4462
    %v4470 = vpop.permute.xlu0 %4469
    %v4471 = vlaneseq
    %v4472 = vshrl.u32 %v4471, 7
    %v4473 = vsub.s32 %v2210, %v4472
    %v4474 = vrot.slane %v4467, %v4473
    %v4475 = vlaneseq
    %v4476 = vshrl.u32 %v4475, 7
    %v4477 = vsub.s32 %v2210, %v4476
    %v4478 = vrot.slane %v4470, %v4477
    %v4479 = vsel %vm377, %v4478, %v4474
    %v4481 = vsel %vm2531, %v4479, -inf
    %4482 = vmax.xlane.f32.xlu0 %v4481
    %v4483 = vpop.xlane.xlu0 %4482
    %v4485 = vlaneseq
    %v4486 = vshrl.u32 %v4485, 7
    %v4487 = vsub.s32 0, %v4486
    %v4488 = vrot.slane %v4483, %v4487
    %v4489 = vlaneseq
    %v4490 = vshrl.u32 %v4489, 7
    %v4491 = vsub.s32 1, %v4490
    %v4492 = vrot.slane %v4483, %v4491
    %vm4495 = vcmp.eq.f32.partialorder %v4461, %v4488
    %vm4496 = vcmp.eq.f32.partialorder %v4462, %v4492
    %v4497 = vsel %vm4495, %v2551, 8.0
    %v4498 = vsel %vm4496, %v2551, 8.0
    %4501 = vset.pattern.permute.xlu0 0
    %4502 = vperm.xlu0 %4501, %v4497
    %v4503 = vpop.permute.xlu0 %4502
    %4504 = vset.pattern.permute.xlu0 0
    %4505 = vperm.xlu0 %4504, %v4498
    %v4506 = vpop.permute.xlu0 %4505
    %v4507 = vlaneseq
    %v4508 = vshrl.u32 %v4507, 7
    %v4509 = vsub.s32 %v2210, %v4508
    %v4510 = vrot.slane %v4503, %v4509
    %v4511 = vlaneseq
    %v4512 = vshrl.u32 %v4511, 7
    %v4513 = vsub.s32 %v2210, %v4512
    %v4514 = vrot.slane %v4506, %v4513
    %v4515 = vsel %vm377, %v4514, %v4510
    %v4517 = vsel %vm2531, %v4515, inf
    %4518 = vmin.xlane.f32.xlu0 %v4517
    %v4519 = vpop.xlane.xlu0 %4518
    %v4520 = vcvt.f32.s32.to.zero.pseudo %v4519
    %v4521 = vsub.f32 %v4461, %v4488
    %v4522 = vsub.f32 %v4462, %v4492
    %v4523 = vmul.f32 %v4521, 1.442695
    %v4524 = vpow.pop %v4523
    %v4525 = vmul.f32 %v4522, 1.442695
    %v4526 = vpow.pop %v4525
    %4529 = vset.pattern.permute.xlu0 0
    %4530 = vperm.xlu0 %4529, %v4524
    %v4531 = vpop.permute.xlu0 %4530
    %4532 = vset.pattern.permute.xlu0 0
    %4533 = vperm.xlu0 %4532, %v4526
    %v4534 = vpop.permute.xlu0 %4533
    %v4535 = vlaneseq
    %v4536 = vshrl.u32 %v4535, 7
    %v4537 = vsub.s32 %v2210, %v4536
    %v4538 = vrot.slane %v4531, %v4537
    %v4539 = vlaneseq
    %v4540 = vshrl.u32 %v4539, 7
    %v4541 = vsub.s32 %v2210, %v4540
    %v4542 = vrot.slane %v4534, %v4541
    %v4543 = vsel %vm377, %v4542, %v4538
    %v4545 = vsel %vm2531, %v4543, 0.0
    %4546 = vadd.xlane.f32.xlu0 %v4545
    %v4547 = vpop.xlane.xlu0 %4546
    %v4548 = vlog2.pop %v4547
    %v4549 = vmul.f32 %v4548, 0.6931472
    %v4550 = vsub.f32 %v4162, %v4549
    %vm4551 = vcmp.eq.s32.totalorder %v2210, 5
    %v4552 = vsel %vm4551, %v4520, %v4164
    %vm4553 = vcmp.eq.s32.totalorder %v2210, %v4520
    %v4554 = vsel %vm4553, -1e+30, %v4166
    %v4555 = vsel %vm4553, 1, 0
    %v4556 = vcvt.s32.f32 %v4555
    %v4557 = vlaneseq
    %v4558 = vshrl.u32 %v4557, 7
    %v4559 = vsub.s32 0, %v4558
    %v4560 = vrot.slane %v4556, %v4559
    %4562 = vbcast.lane.b32.xlu0 %v4560, 256
    %v4563 = vpop.permute.xlu0 %4562
    %v4564 = vlaneseq
    %v4565 = vshrl.u32 %v4564, 7
    %v4566 = vsub.s32 1, %v4565
    %v4567 = vrot.slane %v4556, %v4566
    %4569 = vbcast.lane.b32.xlu0 %v4567, 256
    %v4570 = vpop.permute.xlu0 %4569
    %v4571 = vmul.f32 %v4563, %v230
    %v4572 = vmul.f32 %v4570, %v236
    %v4573 = vrot.slane %v4571, 4
    %v4574 = vadd.f32 %v4571, %v4573
    %v4575 = vrot.slane %v4574, 2
    %v4576 = vadd.f32 %v4574, %v4575
    %v4577 = vrot.slane %v4576, 1
    %v4578 = vadd.f32 %v4576, %v4577
    %v4579 = vrot.slane %v4572, 4
    %v4580 = vadd.f32 %v4572, %v4579
    %v4581 = vrot.slane %v4580, 2
    %v4582 = vadd.f32 %v4580, %v4581
    %v4583 = vrot.slane %v4582, 1
    %v4584 = vadd.f32 %v4582, %v4583
    %4585 = vmatprep.subr.mxu0 0.0
    %4586 = vmatpush1.msra.mxu0 %v122
    %4587 = vmatprep.subr.mxu0 0.0
    %4588 = vmatpush1.msra.mxu0 %v123
    %4589 = vmatprep.subr.mxu0 0.0
    %4590 = vmatpush1.msra.mxu0 %v124
    %4591 = vmatprep.subr.mxu0 0.0
    %4592 = vmatpush1.msra.mxu0 %v125
    %4593 = vmatprep.subr.mxu0 0.0
    %4594 = vmatpush1.msra.mxu0 0.0
    %4595 = vmatprep.subr.mxu0 0.0
    %4596 = vmatpush1.msra.mxu0 0.0
    %4597 = vmatprep.subr.mxu0 0.0
    %4598 = vmatpush1.msra.mxu0 0.0
    %4599 = vmatprep.subr.mxu0 0.0
    %4600 = vmatpush1.msra.mxu0 0.0
    %4601 = vmatprep.subr.mxu0 0.0
    %4602 = vmatpush1.msra.mxu0 0.0
    %4603 = vmatprep.subr.mxu0 0.0
    %4604 = vmatpush1.msra.mxu0 0.0
    %4605 = vmatprep.subr.mxu0 0.0
    %4606 = vmatpush1.msra.mxu0 0.0
    %4607 = vmatprep.subr.mxu0 0.0
    %4608 = vmatpush1.msra.mxu0 0.0
    %4609 = vmatprep.subr.mxu0 0.0
    %4610 = vmatpush1.msra.mxu0 0.0
    %4611 = vmatprep.subr.mxu0 0.0
    %4612 = vmatpush1.msra.mxu0 0.0
    %4613 = vmatprep.subr.mxu0 0.0
    %4614 = vmatpush1.msra.mxu0 0.0
    %4615 = vmatprep.subr.mxu0 0.0
    %4616 = vmatpush1.msra.mxu0 0.0
    %4617 = vmatprep.subr.mxu0 0.0
    %4618 = vmatpush1.msra.mxu0 0.0
    %4619 = vmatprep.subr.mxu0 0.0
    %4620 = vmatpush1.msra.mxu0 0.0
    %4621 = vmatprep.subr.mxu0 0.0
    %4622 = vmatpush1.msra.mxu0 0.0
    %4623 = vmatprep.subr.mxu0 0.0
    %4624 = vmatpush1.msra.mxu0 0.0
    %4625 = vmatprep.subr.mxu0 0.0
    %4626 = vmatpush1.msra.mxu0 0.0
    %4627 = vmatprep.subr.mxu0 0.0
    %4628 = vmatpush1.msra.mxu0 0.0
    %4629 = vmatprep.subr.mxu0 0.0
    %4630 = vmatpush1.msra.mxu0 0.0
    %4631 = vmatprep.subr.mxu0 0.0
    %4632 = vmatpush1.msra.mxu0 0.0
    %4633 = vmatprep.subr.mxu0 0.0
    %4634 = vmatpush1.msra.mxu0 0.0
    %4635 = vmatprep.subr.mxu0 0.0
    %4636 = vmatpush1.msra.mxu0 0.0
    %4637 = vmatprep.subr.mxu0 0.0
    %4638 = vmatpush1.msra.mxu0 0.0
    %4639 = vmatprep.subr.mxu0 0.0
    %4640 = vmatpush1.msra.mxu0 0.0
    %4641 = vmatprep.subr.mxu0 0.0
    %4642 = vmatpush1.msra.mxu0 0.0
    %4643 = vmatprep.subr.mxu0 0.0
    %4644 = vmatpush1.msra.mxu0 0.0
    %4645 = vmatprep.subr.mxu0 0.0
    %4646 = vmatpush1.msra.mxu0 0.0
    %4647 = vmatprep.subr.mxu0 0.0
    %4648 = vmatpush1.msra.mxu0 0.0
    %4649 = vmatprep.mubr.f32.mxu0 0.0
    %4650 = vmatmul.mubr.f32.gmra.mrb[0].mxu0 %v4327
    %v4651 = vpop.f32.mrb[0].mxu0
    %v4652 = vadd.f32 0.0, %v4651
    %v4653 = vpop.f32.mrb[0].mxu0
    %4654 = vdwg.mxu0
    %v4656 = vrot.slane %v4652, 1
    %v4659 = vadd.f32 %v4578, %v4652
    %v4660 = vadd.f32 %v4584, %v4656
    %v4661 = vxor.u32 %v4659, 2147483648
    %v4662 = vxor.u32 %v4660, 2147483648
    %v4663 = vmul.f32 %v4661, 1.442695
    %v4664 = vpow.pop %v4663
    %v4665 = vmul.f32 %v4662, 1.442695
    %v4666 = vpow.pop %v4665
    %v4667 = vadd.f32 %v4664, 1.0
    %v4668 = vadd.f32 %v4666, 1.0
    %v4669 = vrcp.pop %v4667
    %v4670 = vmul.f32 1.0, %v4669
    %v4671 = vrcp.pop %v4668
    %v4672 = vmul.f32 1.0, %v4671
    %v4673 = vtanh.pop %v4659
    %v4674 = vtanh.pop %v4660
    %v4675 = vmul.f32 %v4670, %v4307
    %v4676 = vmul.f32 %v4672, %v4308
    %4679 = vrot.lane.b32.xlu0 %v4673, 64
    %v4680 = vpop.permute.xlu0 %4679
    %4681 = vrot.lane.b32.xlu0 %v4674, 64
    %v4682 = vpop.permute.xlu0 %4681
    %v4685 = vmul.f32 %v4670, %v4680
    %v4686 = vmul.f32 %v4672, %v4682
    %4689 = vrot.lane.b32.xlu0 %v4685, 32
    %v4690 = vpop.permute.xlu0 %4689
    %4691 = vrot.lane.b32.xlu0 %v4686, 32
    %v4692 = vpop.permute.xlu0 %4691
    %v4695 = vadd.f32 %v4675, %v4690
    %v4696 = vadd.f32 %v4676, %v4692
    %v4697 = vtanh.pop %v4695
    %v4698 = vtanh.pop %v4696
    %4701 = vrot.lane.b32.xlu0 %v4697, 64
    %v4702 = vpop.permute.xlu0 %4701
    %4703 = vrot.lane.b32.xlu0 %v4698, 64
    %v4704 = vpop.permute.xlu0 %4703
    %v4707 = vmul.f32 %v4670, %v4702
    %v4708 = vmul.f32 %v4672, %v4704
    %v4711 = vrot.slane %v4708, 7
    %v4712 = vsel %vm377, %v4711, %v4707
    %4713 = vrot.lane.b32.xlu0 %v4712, 32
    %v4714 = vpop.permute.xlu0 %4713
    %v4715 = vsel %vm240, %v4714, 0
    %4717 = vmatprep.subr.mxu0 0.0
    %4718 = vmatpush1.msra.mxu0 %v131
    %4719 = vmatprep.subr.mxu0 0.0
    %4720 = vmatpush1.msra.mxu0 %v132
    %4721 = vmatprep.subr.mxu0 0.0
    %4722 = vmatpush1.msra.mxu0 %v133
    %4723 = vmatprep.subr.mxu0 0.0
    %4724 = vmatpush1.msra.mxu0 %v134
    %4725 = vmatprep.subr.mxu0 0.0
    %4726 = vmatpush1.msra.mxu0 0.0
    %4727 = vmatprep.subr.mxu0 0.0
    %4728 = vmatpush1.msra.mxu0 0.0
    %4729 = vmatprep.subr.mxu0 0.0
    %4730 = vmatpush1.msra.mxu0 0.0
    %4731 = vmatprep.subr.mxu0 0.0
    %4732 = vmatpush1.msra.mxu0 0.0
    %4733 = vmatprep.subr.mxu0 0.0
    %4734 = vmatpush1.msra.mxu0 0.0
    %4735 = vmatprep.subr.mxu0 0.0
    %4736 = vmatpush1.msra.mxu0 0.0
    %4737 = vmatprep.subr.mxu0 0.0
    %4738 = vmatpush1.msra.mxu0 0.0
    %4739 = vmatprep.subr.mxu0 0.0
    %4740 = vmatpush1.msra.mxu0 0.0
    %4741 = vmatprep.subr.mxu0 0.0
    %4742 = vmatpush1.msra.mxu0 0.0
    %4743 = vmatprep.subr.mxu0 0.0
    %4744 = vmatpush1.msra.mxu0 0.0
    %4745 = vmatprep.subr.mxu0 0.0
    %4746 = vmatpush1.msra.mxu0 0.0
    %4747 = vmatprep.subr.mxu0 0.0
    %4748 = vmatpush1.msra.mxu0 0.0
    %4749 = vmatprep.subr.mxu0 0.0
    %4750 = vmatpush1.msra.mxu0 0.0
    %4751 = vmatprep.subr.mxu0 0.0
    %4752 = vmatpush1.msra.mxu0 0.0
    %4753 = vmatprep.subr.mxu0 0.0
    %4754 = vmatpush1.msra.mxu0 0.0
    %4755 = vmatprep.subr.mxu0 0.0
    %4756 = vmatpush1.msra.mxu0 0.0
    %4757 = vmatprep.subr.mxu0 0.0
    %4758 = vmatpush1.msra.mxu0 0.0
    %4759 = vmatprep.subr.mxu0 0.0
    %4760 = vmatpush1.msra.mxu0 0.0
    %4761 = vmatprep.subr.mxu0 0.0
    %4762 = vmatpush1.msra.mxu0 0.0
    %4763 = vmatprep.subr.mxu0 0.0
    %4764 = vmatpush1.msra.mxu0 0.0
    %4765 = vmatprep.subr.mxu0 0.0
    %4766 = vmatpush1.msra.mxu0 0.0
    %4767 = vmatprep.subr.mxu0 0.0
    %4768 = vmatpush1.msra.mxu0 0.0
    %4769 = vmatprep.subr.mxu0 0.0
    %4770 = vmatpush1.msra.mxu0 0.0
    %4771 = vmatprep.subr.mxu0 0.0
    %4772 = vmatpush1.msra.mxu0 0.0
    %4773 = vmatprep.subr.mxu0 0.0
    %4774 = vmatpush1.msra.mxu0 0.0
    %4775 = vmatprep.subr.mxu0 0.0
    %4776 = vmatpush1.msra.mxu0 0.0
    %4777 = vmatprep.subr.mxu0 0.0
    %4778 = vmatpush1.msra.mxu0 0.0
    %4779 = vmatprep.subr.mxu0 0.0
    %4780 = vmatpush1.msra.mxu0 0.0
    %4781 = vmatprep.mubr.f32.mxu0 0.0
    %4782 = vmatmul.mubr.f32.gmra.mrb[0].mxu0 %v4715
    %v4783 = vpop.f32.mrb[0].mxu0
    %v4784 = vadd.f32 0.0, %v4783
    %v4785 = vpop.f32.mrb[0].mxu0
    %4786 = vdwg.mxu0
    %v4789 = vunpack.c.l.s4 1966171168
    %v4790 = vunpack.c.0.s8 %v4789
    %v4791 = vlaneseq
    %v4792 = vshrl.u32 %v4791, 7
    %v4793 = vsub.s32 %v4790, %v4792
    %v4794 = vrot.slane %v4784, %v4793
    %v4795 = vcombine.high %v4794, %v4794
    %v4797 = vunpack.c.l.s4 1966171168
    %v4798 = vunpack.c.0.s8 %v4797
    %v4799 = vlaneseq
    %v4800 = vshrl.u32 %v4799, 7
    %v4801 = vsub.s32 %v4798, %v4800
    %v4802 = vrot.slane %v4794, %v4801
    %v4804 = vunpack.c.l.s4 1966171168
    %v4805 = vunpack.c.0.s8 %v4804
    %v4806 = vlaneseq
    %v4807 = vshrl.u32 %v4806, 7
    %v4808 = vsub.s32 %v4805, %v4807
    %v4809 = vrot.slane %v4795, %v4808
    %v4810 = vlaneseq
    %v4811 = vshrl.u32 %v4810, 7
    %v4812 = vsub.s32 0, %v4811
    %v4813 = vrot.slane %v4802, %v4812
    %v4814 = vlaneseq
    %v4815 = vshrl.u32 %v4814, 7
    %v4816 = vsub.s32 0, %v4815
    %v4817 = vrot.slane %v4809, %v4816
    %v4820 = vadd.f32 %v2207, %v4813
    %v4821 = vadd.f32 %v2208, %v4817
    %v4822 = vtanh.pop %v4820
    %v4823 = vtanh.pop %v4821
    %v4824 = vmul.f32 %v4822, %v2507
    %v4825 = vmul.f32 %v4823, %v2507
    %v4826 = vsel %vm240, %v4824, 0.0
    %4827 = vadd.xlane.f32.xlu0 %v4826
    %v4828 = vpop.xlane.xlu0 %4827
    %v4829 = vsel %vm240, %v4825, 0.0
    %4830 = vadd.xlane.f32.xlu0 %v4829
    %v4831 = vpop.xlane.xlu0 %4830
    %v4833 = vlaneseq
    %v4834 = vshrl.u32 %v4833, 7
    %v4835 = vsub.s32 0, %v4834
    %v4836 = vrot.slane %v4554, %v4835
    %4838 = vbcast.lane.b32.xlu0 %v4836, 256
    %v4839 = vpop.permute.xlu0 %4838
    %v4840 = vlaneseq
    %v4841 = vshrl.u32 %v4840, 7
    %v4842 = vsub.s32 1, %v4841
    %v4843 = vrot.slane %v4554, %v4842
    %4845 = vbcast.lane.b32.xlu0 %v4843, 256
    %v4846 = vpop.permute.xlu0 %4845
    %v4849 = vadd.f32 %v4828, %v4839
    %v4850 = vadd.f32 %v4831, %v4846
    %4853 = vset.pattern.permute.xlu0 0
    %4854 = vperm.xlu0 %4853, %v4849
    %v4855 = vpop.permute.xlu0 %4854
    %4856 = vset.pattern.permute.xlu0 0
    %4857 = vperm.xlu0 %4856, %v4850
    %v4858 = vpop.permute.xlu0 %4857
    %v4859 = vlaneseq
    %v4860 = vshrl.u32 %v4859, 7
    %v4861 = vsub.s32 %v2210, %v4860
    %v4862 = vrot.slane %v4855, %v4861
    %v4863 = vlaneseq
    %v4864 = vshrl.u32 %v4863, 7
    %v4865 = vsub.s32 %v2210, %v4864
    %v4866 = vrot.slane %v4858, %v4865
    %v4867 = vsel %vm377, %v4866, %v4862
    %v4869 = vsel %vm2531, %v4867, -inf
    %4870 = vmax.xlane.f32.xlu0 %v4869
    %v4871 = vpop.xlane.xlu0 %4870
    %v4873 = vlaneseq
    %v4874 = vshrl.u32 %v4873, 7
    %v4875 = vsub.s32 0, %v4874
    %v4876 = vrot.slane %v4871, %v4875
    %v4877 = vlaneseq
    %v4878 = vshrl.u32 %v4877, 7
    %v4879 = vsub.s32 1, %v4878
    %v4880 = vrot.slane %v4871, %v4879
    %vm4883 = vcmp.eq.f32.partialorder %v4849, %v4876
    %vm4884 = vcmp.eq.f32.partialorder %v4850, %v4880
    %v4885 = vsel %vm4883, %v2551, 8.0
    %v4886 = vsel %vm4884, %v2551, 8.0
    %4889 = vset.pattern.permute.xlu0 0
    %4890 = vperm.xlu0 %4889, %v4885
    %v4891 = vpop.permute.xlu0 %4890
    %4892 = vset.pattern.permute.xlu0 0
    %4893 = vperm.xlu0 %4892, %v4886
    %v4894 = vpop.permute.xlu0 %4893
    %v4895 = vlaneseq
    %v4896 = vshrl.u32 %v4895, 7
    %v4897 = vsub.s32 %v2210, %v4896
    %v4898 = vrot.slane %v4891, %v4897
    %v4899 = vlaneseq
    %v4900 = vshrl.u32 %v4899, 7
    %v4901 = vsub.s32 %v2210, %v4900
    %v4902 = vrot.slane %v4894, %v4901
    %v4903 = vsel %vm377, %v4902, %v4898
    %v4905 = vsel %vm2531, %v4903, inf
    %4906 = vmin.xlane.f32.xlu0 %v4905
    %v4907 = vpop.xlane.xlu0 %4906
    %v4908 = vcvt.f32.s32.to.zero.pseudo %v4907
    %v4909 = vsub.f32 %v4849, %v4876
    %v4910 = vsub.f32 %v4850, %v4880
    %v4911 = vmul.f32 %v4909, 1.442695
    %v4912 = vpow.pop %v4911
    %v4913 = vmul.f32 %v4910, 1.442695
    %v4914 = vpow.pop %v4913
    %4917 = vset.pattern.permute.xlu0 0
    %4918 = vperm.xlu0 %4917, %v4912
    %v4919 = vpop.permute.xlu0 %4918
    %4920 = vset.pattern.permute.xlu0 0
    %4921 = vperm.xlu0 %4920, %v4914
    %v4922 = vpop.permute.xlu0 %4921
    %v4923 = vlaneseq
    %v4924 = vshrl.u32 %v4923, 7
    %v4925 = vsub.s32 %v2210, %v4924
    %v4926 = vrot.slane %v4919, %v4925
    %v4927 = vlaneseq
    %v4928 = vshrl.u32 %v4927, 7
    %v4929 = vsub.s32 %v2210, %v4928
    %v4930 = vrot.slane %v4922, %v4929
    %v4931 = vsel %vm377, %v4930, %v4926
    %v4933 = vsel %vm2531, %v4931, 0.0
    %4934 = vadd.xlane.f32.xlu0 %v4933
    %v4935 = vpop.xlane.xlu0 %4934
    %v4936 = vlog2.pop %v4935
    %v4937 = vmul.f32 %v4936, 0.6931472
    %v4938 = vsub.f32 %v4550, %v4937
    %vm4939 = vcmp.eq.s32.totalorder %v2210, 6
    %v4940 = vsel %vm4939, %v4908, %v4552
    %vm4941 = vcmp.eq.s32.totalorder %v2210, %v4908
    %v4942 = vsel %vm4941, -1e+30, %v4554
    %v4943 = vsel %vm4941, 1, 0
    %v4944 = vcvt.s32.f32 %v4943
    %v4945 = vlaneseq
    %v4946 = vshrl.u32 %v4945, 7
    %v4947 = vsub.s32 0, %v4946
    %v4948 = vrot.slane %v4944, %v4947
    %4950 = vbcast.lane.b32.xlu0 %v4948, 256
    %v4951 = vpop.permute.xlu0 %4950
    %v4952 = vlaneseq
    %v4953 = vshrl.u32 %v4952, 7
    %v4954 = vsub.s32 1, %v4953
    %v4955 = vrot.slane %v4944, %v4954
    %4957 = vbcast.lane.b32.xlu0 %v4955, 256
    %v4958 = vpop.permute.xlu0 %4957
    %v4959 = vmul.f32 %v4951, %v230
    %v4960 = vmul.f32 %v4958, %v236
    %v4961 = vrot.slane %v4959, 4
    %v4962 = vadd.f32 %v4959, %v4961
    %v4963 = vrot.slane %v4962, 2
    %v4964 = vadd.f32 %v4962, %v4963
    %v4965 = vrot.slane %v4964, 1
    %v4966 = vadd.f32 %v4964, %v4965
    %v4967 = vrot.slane %v4960, 4
    %v4968 = vadd.f32 %v4960, %v4967
    %v4969 = vrot.slane %v4968, 2
    %v4970 = vadd.f32 %v4968, %v4969
    %v4971 = vrot.slane %v4970, 1
    %v4972 = vadd.f32 %v4970, %v4971
    %4973 = vmatprep.subr.mxu0 0.0
    %4974 = vmatpush1.msra.mxu0 %v122
    %4975 = vmatprep.subr.mxu0 0.0
    %4976 = vmatpush1.msra.mxu0 %v123
    %4977 = vmatprep.subr.mxu0 0.0
    %4978 = vmatpush1.msra.mxu0 %v124
    %4979 = vmatprep.subr.mxu0 0.0
    %4980 = vmatpush1.msra.mxu0 %v125
    %4981 = vmatprep.subr.mxu0 0.0
    %4982 = vmatpush1.msra.mxu0 0.0
    %4983 = vmatprep.subr.mxu0 0.0
    %4984 = vmatpush1.msra.mxu0 0.0
    %4985 = vmatprep.subr.mxu0 0.0
    %4986 = vmatpush1.msra.mxu0 0.0
    %4987 = vmatprep.subr.mxu0 0.0
    %4988 = vmatpush1.msra.mxu0 0.0
    %4989 = vmatprep.subr.mxu0 0.0
    %4990 = vmatpush1.msra.mxu0 0.0
    %4991 = vmatprep.subr.mxu0 0.0
    %4992 = vmatpush1.msra.mxu0 0.0
    %4993 = vmatprep.subr.mxu0 0.0
    %4994 = vmatpush1.msra.mxu0 0.0
    %4995 = vmatprep.subr.mxu0 0.0
    %4996 = vmatpush1.msra.mxu0 0.0
    %4997 = vmatprep.subr.mxu0 0.0
    %4998 = vmatpush1.msra.mxu0 0.0
    %4999 = vmatprep.subr.mxu0 0.0
    %5000 = vmatpush1.msra.mxu0 0.0
    %5001 = vmatprep.subr.mxu0 0.0
    %5002 = vmatpush1.msra.mxu0 0.0
    %5003 = vmatprep.subr.mxu0 0.0
    %5004 = vmatpush1.msra.mxu0 0.0
    %5005 = vmatprep.subr.mxu0 0.0
    %5006 = vmatpush1.msra.mxu0 0.0
    %5007 = vmatprep.subr.mxu0 0.0
    %5008 = vmatpush1.msra.mxu0 0.0
    %5009 = vmatprep.subr.mxu0 0.0
    %5010 = vmatpush1.msra.mxu0 0.0
    %5011 = vmatprep.subr.mxu0 0.0
    %5012 = vmatpush1.msra.mxu0 0.0
    %5013 = vmatprep.subr.mxu0 0.0
    %5014 = vmatpush1.msra.mxu0 0.0
    %5015 = vmatprep.subr.mxu0 0.0
    %5016 = vmatpush1.msra.mxu0 0.0
    %5017 = vmatprep.subr.mxu0 0.0
    %5018 = vmatpush1.msra.mxu0 0.0
    %5019 = vmatprep.subr.mxu0 0.0
    %5020 = vmatpush1.msra.mxu0 0.0
    %5021 = vmatprep.subr.mxu0 0.0
    %5022 = vmatpush1.msra.mxu0 0.0
    %5023 = vmatprep.subr.mxu0 0.0
    %5024 = vmatpush1.msra.mxu0 0.0
    %5025 = vmatprep.subr.mxu0 0.0
    %5026 = vmatpush1.msra.mxu0 0.0
    %5027 = vmatprep.subr.mxu0 0.0
    %5028 = vmatpush1.msra.mxu0 0.0
    %5029 = vmatprep.subr.mxu0 0.0
    %5030 = vmatpush1.msra.mxu0 0.0
    %5031 = vmatprep.subr.mxu0 0.0
    %5032 = vmatpush1.msra.mxu0 0.0
    %5033 = vmatprep.subr.mxu0 0.0
    %5034 = vmatpush1.msra.mxu0 0.0
    %5035 = vmatprep.subr.mxu0 0.0
    %5036 = vmatpush1.msra.mxu0 0.0
    %5037 = vmatprep.mubr.f32.mxu0 0.0
    %5038 = vmatmul.mubr.f32.gmra.mrb[0].mxu0 %v4715
    %v5039 = vpop.f32.mrb[0].mxu0
    %v5040 = vadd.f32 0.0, %v5039
    %v5041 = vpop.f32.mrb[0].mxu0
    %5042 = vdwg.mxu0
    %v5044 = vrot.slane %v5040, 1
    %v5047 = vadd.f32 %v4966, %v5040
    %v5048 = vadd.f32 %v4972, %v5044
    %v5049 = vxor.u32 %v5047, 2147483648
    %v5050 = vxor.u32 %v5048, 2147483648
    %v5051 = vmul.f32 %v5049, 1.442695
    %v5052 = vpow.pop %v5051
    %v5053 = vmul.f32 %v5050, 1.442695
    %v5054 = vpow.pop %v5053
    %v5055 = vadd.f32 %v5052, 1.0
    %v5056 = vadd.f32 %v5054, 1.0
    %v5057 = vrcp.pop %v5055
    %v5058 = vmul.f32 1.0, %v5057
    %v5059 = vrcp.pop %v5056
    %v5060 = vmul.f32 1.0, %v5059
    %v5061 = vtanh.pop %v5047
    %v5062 = vtanh.pop %v5048
    %v5063 = vmul.f32 %v5058, %v4695
    %v5064 = vmul.f32 %v5060, %v4696
    %5067 = vrot.lane.b32.xlu0 %v5061, 64
    %v5068 = vpop.permute.xlu0 %5067
    %5069 = vrot.lane.b32.xlu0 %v5062, 64
    %v5070 = vpop.permute.xlu0 %5069
    %v5073 = vmul.f32 %v5058, %v5068
    %v5074 = vmul.f32 %v5060, %v5070
    %5077 = vrot.lane.b32.xlu0 %v5073, 32
    %v5078 = vpop.permute.xlu0 %5077
    %5079 = vrot.lane.b32.xlu0 %v5074, 32
    %v5080 = vpop.permute.xlu0 %5079
    %v5083 = vadd.f32 %v5063, %v5078
    %v5084 = vadd.f32 %v5064, %v5080
    %v5085 = vtanh.pop %v5083
    %v5086 = vtanh.pop %v5084
    %5089 = vrot.lane.b32.xlu0 %v5085, 64
    %v5090 = vpop.permute.xlu0 %5089
    %5091 = vrot.lane.b32.xlu0 %v5086, 64
    %v5092 = vpop.permute.xlu0 %5091
    %v5095 = vmul.f32 %v5058, %v5090
    %v5096 = vmul.f32 %v5060, %v5092
    %v5099 = vrot.slane %v5096, 7
    %v5100 = vsel %vm377, %v5099, %v5095
    %5101 = vrot.lane.b32.xlu0 %v5100, 32
    %v5102 = vpop.permute.xlu0 %5101
    %v5103 = vsel %vm240, %v5102, 0
    %5105 = vmatprep.subr.mxu0 0.0
    %5106 = vmatpush1.msra.mxu0 %v131
    %5107 = vmatprep.subr.mxu0 0.0
    %5108 = vmatpush1.msra.mxu0 %v132
    %5109 = vmatprep.subr.mxu0 0.0
    %5110 = vmatpush1.msra.mxu0 %v133
    %5111 = vmatprep.subr.mxu0 0.0
    %5112 = vmatpush1.msra.mxu0 %v134
    %5113 = vmatprep.subr.mxu0 0.0
    %5114 = vmatpush1.msra.mxu0 0.0
    %5115 = vmatprep.subr.mxu0 0.0
    %5116 = vmatpush1.msra.mxu0 0.0
    %5117 = vmatprep.subr.mxu0 0.0
    %5118 = vmatpush1.msra.mxu0 0.0
    %5119 = vmatprep.subr.mxu0 0.0
    %5120 = vmatpush1.msra.mxu0 0.0
    %5121 = vmatprep.subr.mxu0 0.0
    %5122 = vmatpush1.msra.mxu0 0.0
    %5123 = vmatprep.subr.mxu0 0.0
    %5124 = vmatpush1.msra.mxu0 0.0
    %5125 = vmatprep.subr.mxu0 0.0
    %5126 = vmatpush1.msra.mxu0 0.0
    %5127 = vmatprep.subr.mxu0 0.0
    %5128 = vmatpush1.msra.mxu0 0.0
    %5129 = vmatprep.subr.mxu0 0.0
    %5130 = vmatpush1.msra.mxu0 0.0
    %5131 = vmatprep.subr.mxu0 0.0
    %5132 = vmatpush1.msra.mxu0 0.0
    %5133 = vmatprep.subr.mxu0 0.0
    %5134 = vmatpush1.msra.mxu0 0.0
    %5135 = vmatprep.subr.mxu0 0.0
    %5136 = vmatpush1.msra.mxu0 0.0
    %5137 = vmatprep.subr.mxu0 0.0
    %5138 = vmatpush1.msra.mxu0 0.0
    %5139 = vmatprep.subr.mxu0 0.0
    %5140 = vmatpush1.msra.mxu0 0.0
    %5141 = vmatprep.subr.mxu0 0.0
    %5142 = vmatpush1.msra.mxu0 0.0
    %5143 = vmatprep.subr.mxu0 0.0
    %5144 = vmatpush1.msra.mxu0 0.0
    %5145 = vmatprep.subr.mxu0 0.0
    %5146 = vmatpush1.msra.mxu0 0.0
    %5147 = vmatprep.subr.mxu0 0.0
    %5148 = vmatpush1.msra.mxu0 0.0
    %5149 = vmatprep.subr.mxu0 0.0
    %5150 = vmatpush1.msra.mxu0 0.0
    %5151 = vmatprep.subr.mxu0 0.0
    %5152 = vmatpush1.msra.mxu0 0.0
    %5153 = vmatprep.subr.mxu0 0.0
    %5154 = vmatpush1.msra.mxu0 0.0
    %5155 = vmatprep.subr.mxu0 0.0
    %5156 = vmatpush1.msra.mxu0 0.0
    %5157 = vmatprep.subr.mxu0 0.0
    %5158 = vmatpush1.msra.mxu0 0.0
    %5159 = vmatprep.subr.mxu0 0.0
    %5160 = vmatpush1.msra.mxu0 0.0
    %5161 = vmatprep.subr.mxu0 0.0
    %5162 = vmatpush1.msra.mxu0 0.0
    %5163 = vmatprep.subr.mxu0 0.0
    %5164 = vmatpush1.msra.mxu0 0.0
    %5165 = vmatprep.subr.mxu0 0.0
    %5166 = vmatpush1.msra.mxu0 0.0
    %5167 = vmatprep.subr.mxu0 0.0
    %5168 = vmatpush1.msra.mxu0 0.0
    %5169 = vmatprep.mubr.f32.mxu0 0.0
    %5170 = vmatmul.mubr.f32.gmra.mrb[0].mxu0 %v5103
    %v5171 = vpop.f32.mrb[0].mxu0
    %v5172 = vadd.f32 0.0, %v5171
    %v5173 = vpop.f32.mrb[0].mxu0
    %5174 = vdwg.mxu0
    %v5177 = vunpack.c.l.s4 1966171168
    %v5178 = vunpack.c.0.s8 %v5177
    %v5179 = vlaneseq
    %v5180 = vshrl.u32 %v5179, 7
    %v5181 = vsub.s32 %v5178, %v5180
    %v5182 = vrot.slane %v5172, %v5181
    %v5183 = vcombine.high %v5182, %v5182
    %v5185 = vunpack.c.l.s4 1966171168
    %v5186 = vunpack.c.0.s8 %v5185
    %v5187 = vlaneseq
    %v5188 = vshrl.u32 %v5187, 7
    %v5189 = vsub.s32 %v5186, %v5188
    %v5190 = vrot.slane %v5182, %v5189
    %v5192 = vunpack.c.l.s4 1966171168
    %v5193 = vunpack.c.0.s8 %v5192
    %v5194 = vlaneseq
    %v5195 = vshrl.u32 %v5194, 7
    %v5196 = vsub.s32 %v5193, %v5195
    %v5197 = vrot.slane %v5183, %v5196
    %v5198 = vlaneseq
    %v5199 = vshrl.u32 %v5198, 7
    %v5200 = vsub.s32 0, %v5199
    %v5201 = vrot.slane %v5190, %v5200
    %v5202 = vlaneseq
    %v5203 = vshrl.u32 %v5202, 7
    %v5204 = vsub.s32 0, %v5203
    %v5205 = vrot.slane %v5197, %v5204
    %v5208 = vadd.f32 %v2207, %v5201
    %v5209 = vadd.f32 %v2208, %v5205
    %v5210 = vtanh.pop %v5208
    %v5211 = vtanh.pop %v5209
    %v5212 = vmul.f32 %v5210, %v2507
    %v5213 = vmul.f32 %v5211, %v2507
    %v5214 = vsel %vm240, %v5212, 0.0
    %5215 = vadd.xlane.f32.xlu0 %v5214
    %v5216 = vpop.xlane.xlu0 %5215
    %v5217 = vsel %vm240, %v5213, 0.0
    %5218 = vadd.xlane.f32.xlu0 %v5217
    %v5219 = vpop.xlane.xlu0 %5218
    %v5221 = vlaneseq
    %v5222 = vshrl.u32 %v5221, 7
    %v5223 = vsub.s32 0, %v5222
    %v5224 = vrot.slane %v4942, %v5223
    %5226 = vbcast.lane.b32.xlu0 %v5224, 256
    %v5227 = vpop.permute.xlu0 %5226
    %v5228 = vlaneseq
    %v5229 = vshrl.u32 %v5228, 7
    %v5230 = vsub.s32 1, %v5229
    %v5231 = vrot.slane %v4942, %v5230
    %5233 = vbcast.lane.b32.xlu0 %v5231, 256
    %v5234 = vpop.permute.xlu0 %5233
    %v5237 = vadd.f32 %v5216, %v5227
    %v5238 = vadd.f32 %v5219, %v5234
    %5241 = vset.pattern.permute.xlu0 0
    %5242 = vperm.xlu0 %5241, %v5237
    %v5243 = vpop.permute.xlu0 %5242
    %5244 = vset.pattern.permute.xlu0 0
    %5245 = vperm.xlu0 %5244, %v5238
    %v5246 = vpop.permute.xlu0 %5245
    %v5247 = vlaneseq
    %v5248 = vshrl.u32 %v5247, 7
    %v5249 = vsub.s32 %v2210, %v5248
    %v5250 = vrot.slane %v5243, %v5249
    %v5251 = vlaneseq
    %v5252 = vshrl.u32 %v5251, 7
    %v5253 = vsub.s32 %v2210, %v5252
    %v5254 = vrot.slane %v5246, %v5253
    %v5255 = vsel %vm377, %v5254, %v5250
    %v5257 = vsel %vm2531, %v5255, -inf
    %5258 = vmax.xlane.f32.xlu0 %v5257
    %v5259 = vpop.xlane.xlu0 %5258
    %v5261 = vlaneseq
    %v5262 = vshrl.u32 %v5261, 7
    %v5263 = vsub.s32 0, %v5262
    %v5264 = vrot.slane %v5259, %v5263
    %v5265 = vlaneseq
    %v5266 = vshrl.u32 %v5265, 7
    %v5267 = vsub.s32 1, %v5266
    %v5268 = vrot.slane %v5259, %v5267
    %vm5271 = vcmp.eq.f32.partialorder %v5237, %v5264
    %vm5272 = vcmp.eq.f32.partialorder %v5238, %v5268
    %v5273 = vsel %vm5271, %v2551, 8.0
    %v5274 = vsel %vm5272, %v2551, 8.0
    %5277 = vset.pattern.permute.xlu0 0
    %5278 = vperm.xlu0 %5277, %v5273
    %v5279 = vpop.permute.xlu0 %5278
    %5280 = vset.pattern.permute.xlu0 0
    %5281 = vperm.xlu0 %5280, %v5274
    %v5282 = vpop.permute.xlu0 %5281
    %v5283 = vlaneseq
    %v5284 = vshrl.u32 %v5283, 7
    %v5285 = vsub.s32 %v2210, %v5284
    %v5286 = vrot.slane %v5279, %v5285
    %v5287 = vlaneseq
    %v5288 = vshrl.u32 %v5287, 7
    %v5289 = vsub.s32 %v2210, %v5288
    %v5290 = vrot.slane %v5282, %v5289
    %v5291 = vsel %vm377, %v5290, %v5286
    %v5293 = vsel %vm2531, %v5291, inf
    %5294 = vmin.xlane.f32.xlu0 %v5293
    %v5295 = vpop.xlane.xlu0 %5294
    %v5296 = vcvt.f32.s32.to.zero.pseudo %v5295
    %v5297 = vsub.f32 %v5237, %v5264
    %v5298 = vsub.f32 %v5238, %v5268
    %v5299 = vmul.f32 %v5297, 1.442695
    %v5300 = vpow.pop %v5299
    %v5301 = vmul.f32 %v5298, 1.442695
    %v5302 = vpow.pop %v5301
    %5305 = vset.pattern.permute.xlu0 0
    %5306 = vperm.xlu0 %5305, %v5300
    %v5307 = vpop.permute.xlu0 %5306
    %5308 = vset.pattern.permute.xlu0 0
    %5309 = vperm.xlu0 %5308, %v5302
    %v5310 = vpop.permute.xlu0 %5309
    %v5311 = vlaneseq
    %v5312 = vshrl.u32 %v5311, 7
    %v5313 = vsub.s32 %v2210, %v5312
    %v5314 = vrot.slane %v5307, %v5313
    %v5315 = vlaneseq
    %v5316 = vshrl.u32 %v5315, 7
    %v5317 = vsub.s32 %v2210, %v5316
    %v5318 = vrot.slane %v5310, %v5317
    %v5319 = vsel %vm377, %v5318, %v5314
    %v5321 = vsel %vm2531, %v5319, 0.0
    %5322 = vadd.xlane.f32.xlu0 %v5321
    %v5323 = vpop.xlane.xlu0 %5322
    %v5324 = vlog2.pop %v5323
    %v5325 = vmul.f32 %v5324, 0.6931472
    %v5326 = vsub.f32 %v4938, %v5325
    %vm5327 = vcmp.eq.s32.totalorder %v2210, 7
    %v5328 = vsel %vm5327, %v5296, %v4940
    %5329 = vst.msk [vmem:[#allocation13] sm:$0x3] %vm2531, %v5328
    %vm5330 = vcmask 1024
    %5331 = vst.msk [vmem:[%s11] sm:$0x3] %vm5330, %v5326
    // Predicated region
    $region66: #{pointer_network_forward.1} parent=1 // pred_check
      _
    $region67: #{pointer_network_forward.1} parent=1 // pred_check_branch
      %5333 = sbr.rel (0) target = $region69
    $region68: #{pointer_network_forward.1} parent=1 // pred_region
      %s5335 = ssub.s32 32, 32
      %5336 = vsyncadd [#allocation4], %s5335
      %s5338 = sshll.u32 [#allocation13], 4
      %s5339 = int_to_ptr.vmem [resolvable:$true] %s5338
      %5341 = dma.vmem_to_hbm [thread:$0]  %s5339, 32, %s10, [#allocation4]
    $region69: #{pointer_network_forward.1} parent=1 // pred_fallthru
      _
    // Predicated region
    $region70: #{pointer_network_forward.1} parent=1 // pred_check
      _
    $region71: #{pointer_network_forward.1} parent=1 // pred_check_branch
      %5343 = sbr.rel (0) target = $region73
    $region72: #{pointer_network_forward.1} parent=1 // pred_region
      _
    $region73: #{pointer_network_forward.1} parent=1 // pred_fallthru
      _
    // Predicated region
    $region74: #{pointer_network_forward.1} parent=1 // pred_check
      _
    $region75: #{pointer_network_forward.1} parent=1 // pred_check_branch
      %5345 = sbr.rel (0) target = $region77
    $region76: #{pointer_network_forward.1} parent=1 // pred_region
      %5346 = dma.done [#allocation4], 32
    $region77: #{pointer_network_forward.1} parent=1 // pred_fallthru
      _
    // Predicated region
    $region78: #{pointer_network_forward.1} parent=1 // pred_check
      _
    $region79: #{pointer_network_forward.1} parent=1 // pred_check_branch
      %5348 = sbr.rel (0) target = $region81
    $region80: #{pointer_network_forward.1} parent=1 // pred_region
      _
    $region81: #{pointer_network_forward.1} parent=1 // pred_fallthru
      _
    %5349 = vsyncpa [#allocation3], 1
    %5350 = vsyncpa [#allocation6], 1
    %5351 = vsyncpa [#allocation9], 1
    %5352 = vsyncpa [#allocation12], 1
    %5353 = vsyncpa [#allocation4], 1

</llo_original>
